<compile_context>
chip_gen: v5e
topology: v5e:2x2
jax: 0.10.0
libtpu: 0.0.40
codegen_flags: <defaults>
</compile_context>

<pallas_src>
import math
import functools

import jax
import jax.numpy as jnp
from jax.experimental import pallas as pl
from jax.experimental.pallas import tpu as pltpu

# TODO(synk): NULLVAL is a module-level global in the original script (not shown in the
# snippet); it is fixed deterministically here.
NULLVAL = -1.0


# ----------------------------------------------------------------------------
# Helpers
# ----------------------------------------------------------------------------
def _layer_norm(x, gamma, beta, eps=1e-5):
    mu = jnp.mean(x, axis=-1, keepdims=True)
    var = jnp.mean((x - mu) ** 2, axis=-1, keepdims=True)
    return (x - mu) * jax.lax.rsqrt(var + eps) * gamma + beta


# ----------------------------------------------------------------------------
# Fused Pallas kernel: PE add + nlayers x TransformerEncoderLayer (post-norm,
# ReLU FFN) + decoder Linear(D->1) + null masking + ixnos offset add.
# Activations live in VMEM / vregs for the whole forward.
# ----------------------------------------------------------------------------
def fused_forward_kernel(x_ref, pe_ref, nullix_ref,
                         w_attn_ref,   # (nl, nhead, 4, D, hd): Wq*s, Wk, Wv, Wo_h^T
                         b_attn_ref,   # (nl, 3, nhead, 1, hd): bq*s, bk, bv
                         w_ffn_ref,    # (nl, 2, H, D): W1 (x@W1^T), W2^T (h1@W2^T)
                         vecs_ref,     # (nl, 7, H): b1 | bo | b2 | g1 | be1 | g2 | be2
                         dec_ref,      # (2, D): dec_w | dec_b (broadcast)
                         o_ref,        # (N, 1)
                         *, nhead, nlayers, B, L, D):
    N = B * L
    hd = D // nhead

    x = x_ref[...].astype(jnp.float32)                       # (N, D), rows b-major

    # ---- positional encoding: free leading-dim reshape + broadcast add ----
    x = (x.reshape(B, L, D) + pe_ref[...][None]).reshape(N, D)

    # Static unroll over layers/heads: fine at nlayers=2, nhead=4 (switch to
    # lax.fori_loop / a grid axis over layers if these ever grow large).
    for l in range(nlayers):
        v_l = vecs_ref[l]                                     # (7, H), tiny
        b1  = v_l[0:1, :]                                     # (1, H)
        bo  = v_l[1:2, :D]                                    # (1, D)
        b2  = v_l[2:3, :D]
        g1  = v_l[3:4, :D]
        be1 = v_l[4:5, :D]
        g2  = v_l[5:6, :D]
        be2 = v_l[6:7, :D]

        # ---- multi-head self-attention (weights pre-split per head at pack time:
        #      zero in-kernel lane slicing / stacking / concatenation) ----
        attn = None
        for h in range(nhead):
            # per-head projections; 1/sqrt(hd) already folded into Wq / bq
            q = jnp.dot(x, w_attn_ref[l, h, 0],
                        preferred_element_type=jnp.float32) + b_attn_ref[l, 0, h]
            k = jnp.dot(x, w_attn_ref[l, h, 1],
                        preferred_element_type=jnp.float32) + b_attn_ref[l, 1, h]
            v = jnp.dot(x, w_attn_ref[l, h, 2],
                        preferred_element_type=jnp.float32) + b_attn_ref[l, 2, h]

            # (N, hd) -> (B, L, hd): leading-dim regroup only (lane dim untouched)
            q3 = q.reshape(B, L, hd)
            k3 = k.reshape(B, L, hd)
            v3 = v.reshape(B, L, hd)

            s = jnp.einsum('bqd,bkd->bqk', q3, k3,
                           preferred_element_type=jnp.float32)        # (B, L, L)
            s = s - jnp.max(s, axis=-1, keepdims=True)
            p = jnp.exp(s)
            p = p * pl.reciprocal(jnp.sum(p, axis=-1, keepdims=True), approx=True)
            o3 = jnp.einsum('bqk,bkd->bqd', p, v3,
                            preferred_element_type=jnp.float32)       # (B, L, hd)

            # per-head out-projection block, stored transposed as (D, hd):
            # contrib = o_h @ Wo_block_h  (sum over heads == concat @ Wo)
            contrib = jax.lax.dot_general(
                o3.reshape(N, hd), w_attn_ref[l, h, 3],
                (((1,), (1,)), ((), ())), preferred_element_type=jnp.float32)
            attn = contrib if attn is None else attn + contrib
        attn = attn + bo

        # ---- residual + LayerNorm1 (post-norm) ----
        x = _layer_norm(x + attn, g1, be1)

        # ---- feed-forward (ReLU) + residual + LayerNorm2 ----
        h1 = jax.lax.dot_general(x, w_ffn_ref[l, 0], (((1,), (1,)), ((), ())),
                                 preferred_element_type=jnp.float32) + b1
        h1 = jnp.maximum(h1, 0.0)
        ffn = jnp.dot(h1, w_ffn_ref[l, 1],
                      preferred_element_type=jnp.float32) + b2
        x = _layer_norm(x + ffn, g2, be2)

    # ---- decoder Linear(D->1) on the VPU: mul + one lane reduce, output (N, 1) ----
    dec_pack = dec_ref[...]                                   # (2, D)
    dec = jnp.sum(x * dec_pack[0:1, :], axis=-1, keepdims=True) + dec_pack[1:2, 0:1]

    # output[isnull] = NULLVAL; output = output + ixnos   (same ordering as PyTorch)
    nx = nullix_ref[...]                                      # (N, 2): isnull | ixnos
    out = jnp.where(nx[:, 0:1] != 0.0, NULLVAL, dec) + nx[:, 1:2]
    o_ref[...] = out.astype(o_ref.dtype)


def fused_forward(x, pe, nullix, packed, *, nhead, B, L):
    N, D = x.shape
    nlayers = packed["w_attn"].shape[0]
    vmem = pl.BlockSpec(memory_space=pltpu.MemorySpace.VMEM)
    args = (x, pe, nullix,
            packed["w_attn"], packed["b_attn"], packed["w_ffn"],
            packed["vecs"], packed["dec"])
    kernel = functools.partial(fused_forward_kernel,
                               nhead=nhead, nlayers=nlayers, B=B, L=L, D=D)
    return pl.pallas_call(
        kernel,
        out_shape=jax.ShapeDtypeStruct((N, 1), jnp.float32),
        in_specs=[vmem] * len(args),
        out_specs=vmem,
    )(*args)


# ----------------------------------------------------------------------------
# Positional encoding buffer (matches PositionalEncoding.__init__).
# ----------------------------------------------------------------------------
def make_positional_encoding(d_model_orig, max_len=5000):
    d_model = 2 * (d_model_orig // 2)
    position = jnp.arange(max_len, dtype=jnp.float32)[:, None]
    div_term = jnp.exp(jnp.arange(0, d_model, 2, dtype=jnp.float32)
                       * (-math.log(10000.0) / d_model))
    pe = jnp.zeros((max_len, d_model), jnp.float32)
    pe = pe.at[:, 0::2].set(jnp.sin(position * div_term))
    pe = pe.at[:, 1::2].set(jnp.cos(position * div_term))
    if d_model != d_model_orig:
        pe = jnp.concatenate([pe, jnp.zeros((max_len, 1), jnp.float32)], axis=1)
    return pe  # (max_len, d_model_orig)


# ----------------------------------------------------------------------------
# Deterministic synthetic parameters in "natural" (x @ W^T) orientation.
# ----------------------------------------------------------------------------
def init_params(key, ninp, nhead, nhid, nlayers, max_len=5000):
    def uni(k, shape):
        return jax.random.uniform(k, shape, jnp.float32, -0.1, 0.1)

    wqkv, wo, w1, w2 = [], [], [], []
    for i in range(nlayers):
        ks = jax.random.split(jax.random.fold_in(key, i), 4)
        wqkv.append(uni(ks[0], (ninp, 3 * ninp)))   # q = x @ wqkv[:, :D], etc.
        wo.append(uni(ks[1], (ninp, ninp)))         # attn = concat_heads @ wo
        w1.append(uni(ks[2], (ninp, nhid)))         # h1 = x @ w1
        w2.append(uni(ks[3], (nhid, ninp)))         # ffn = h1 @ w2

    zeros = lambda d: jnp.zeros((nlayers, 1, d), jnp.float32)
    ones = lambda d: jnp.ones((nlayers, 1, d), jnp.float32)
    kd = jax.random.fold_in(key, 10_000)
    return dict(
        pe=make_positional_encoding(ninp, max_len),
        wqkv_t=jnp.stack(wqkv), bqkv=zeros(3 * ninp),
        wo_t=jnp.stack(wo), bo=zeros(ninp),
        w1_t=jnp.stack(w1), b1=zeros(nhid),
        w2_t=jnp.stack(w2), b2=zeros(ninp),
        g1=ones(ninp), be1=zeros(ninp),
        g2=ones(ninp), be2=zeros(ninp),
        dec_w=uni(kd, (1, ninp)),                 # decoder.weight.uniform_(-0.1, 0.1)
        dec_b=jnp.zeros((1, 1), jnp.float32),     # decoder.bias.zero_()
    )


# ----------------------------------------------------------------------------
# Host-side packing for the kernel:
#  * per-head Q/K/V/out-proj weight blocks (no in-kernel lane slicing),
#  * 1/sqrt(hd) folded into Wq / bq,
#  * all small per-layer vectors packed into two arrays,
#  * decoder weight+bias packed into one array.
# ----------------------------------------------------------------------------
def pack_params(params, *, nhead):
    wqkv = params["wqkv_t"]                               # (nl, D, 3D)
    nl, D, _ = wqkv.shape
    hd = D // nhead
    H = params["w1_t"].shape[2]
    scale = 1.0 / math.sqrt(hd)

    q_t = wqkv[:, :, 0:D] * scale                         # fold score scale into Wq
    k_t = wqkv[:, :, D:2 * D]
    v_t = wqkv[:, :, 2 * D:3 * D]

    def split_cols(w):                                    # (nl, D, D) -> (nl, nh, D, hd)
        return w.reshape(nl, D, nhead, hd).transpose(0, 2, 1, 3)

    # out-projection per-head row block, stored transposed as (D, hd)
    wo_blocks_t = params["wo_t"].reshape(nl, nhead, hd, D).transpose(0, 1, 3, 2)

    w_attn = jnp.stack([split_cols(q_t), split_cols(k_t), split_cols(v_t),
                        wo_blocks_t], axis=2)             # (nl, nhead, 4, D, hd)

    b = params["bqkv"][:, 0, :]                           # (nl, 3D)
    bq = b[:, 0:D] * scale                                # fold score scale into bq
    bk = b[:, D:2 * D]
    bv = b[:, 2 * D:3 * D]
    b_attn = jnp.stack([bq, bk, bv], axis=1).reshape(nl, 3, nhead, 1, hd)

    # FFN: slot0 = W1 (H, D) used as x @ W1^T (transposed-rhs dot_general),
    #      slot1 = W2^T (H, D) used as plain h1 @ W2^T.
    w_ffn = jnp.stack([params["w1_t"].transpose(0, 2, 1), params["w2_t"]], axis=1)

    pad = lambda v: jnp.pad(v[:, 0, :], ((0, 0), (0, H - D)))   # (nl,1,D) -> (nl,H)
    vecs = jnp.stack([params["b1"][:, 0, :],
                      pad(params["bo"]), pad(params["b2"]),
                      pad(params["g1"]), pad(params["be1"]),
                      pad(params["g2"]), pad(params["be2"])], axis=1)   # (nl, 7, H)

    dec = jnp.concatenate([params["dec_w"],
                           jnp.full((1, D), params["dec_b"][0, 0], jnp.float32)],
                          axis=0)                         # (2, D)

    return dict(pe=params["pe"], w_attn=w_attn, b_attn=b_attn,
                w_ffn=w_ffn, vecs=vecs, dec=dec)


# ----------------------------------------------------------------------------
# Full forward pass (mirrors TransformerModel.forward).
# Only trivial slicing / layout is left to XLA; all math runs inside the single
# fused Pallas kernel.
# ----------------------------------------------------------------------------
def transformer_model_forward(src, offset, packed, *, nhead):
    del offset                                    # unused in the PyTorch forward
    B, C, L = src.shape
    D = C - 1
    N = B * L
    ixnos = src[:, D, :].reshape(N, 1).astype(jnp.float32)
    isnull = (src[:, 0, :] == 1.0).astype(jnp.float32).reshape(N, 1)
    nullix = jnp.concatenate([isnull, ixnos], axis=1)                   # (N, 2)
    # permute([2,0,1]) -> (L, B, D); kernel uses batch-folded rows (B*L, D), which is
    # mathematically identical since attention mixes only over L within each batch.
    x = jnp.transpose(src[:, :D, :], (0, 2, 1)).reshape(N, D).astype(jnp.float32)
    pe = packed["pe"][:L, :D]
    out = fused_forward(x, pe, nullix, packed, nhead=nhead, B=B, L=L)   # (N, 1)
    return out.reshape(B, L)


# ----------------------------------------------------------------------------
# Pure-JAX reference (for correctness check only) — uses the natural params.
# ----------------------------------------------------------------------------
def reference_forward(src, params, *, nhead):
    B, C, L = src.shape
    D = C - 1
    ixnos = src[:, D, :]
    isnull = src[:, 0, :] == 1.0
    x = jnp.transpose(src[:, :D, :], (0, 2, 1)).astype(jnp.float32)      # (B, L, D)
    x = x + params["pe"][:L, :D][None]
    hd = D // nhead
    nlayers = params["wqkv_t"].shape[0]
    for l in range(nlayers):
        qkv = x @ params["wqkv_t"][l] + params["bqkv"][l]
        q, k, v = qkv[..., :D], qkv[..., D:2 * D], qkv[..., 2 * D:]
        split = lambda t: t.reshape(B, L, nhead, hd).transpose(0, 2, 1, 3)
        qh, kh, vh = split(q), split(k), split(v)
        s = jnp.einsum('bhqd,bhkd->bhqk', qh, kh) / math.sqrt(hd)
        p = jax.nn.softmax(s, axis=-1)
        o = jnp.einsum('bhqk,bhkd->bhqd', p, vh)
        attn = o.transpose(0, 2, 1, 3).reshape(B, L, D) @ params["wo_t"][l] + params["bo"][l]
        x = _layer_norm(x + attn, params["g1"][l], params["be1"][l])
        h1 = jnp.maximum(x @ params["w1_t"][l] + params["b1"][l], 0.0)
        ff = h1 @ params["w2_t"][l] + params["b2"][l]
        x = _layer_norm(x + ff, params["g2"][l], params["be2"][l])
    dec = (x @ params["dec_w"].T)[..., 0] + params["dec_b"][0, 0]        # (B, L)
    return jnp.where(isnull, NULLVAL, dec) + ixnos


if __name__ == "__main__":
    ninp, nhead, nhid, nlayers = 32, 4, 64, 2
    B, L = 2, 8

    key = jax.random.PRNGKey(0)
    kp, kx = jax.random.split(key)
    params = init_params(kp, ninp, nhead, nhid, nlayers)
    packed = pack_params(params, nhead=nhead)

    # src: (batch, ninp+1, seq); last channel is ixnos offset, channel 0 == 1 marks null
    src = jax.random.normal(kx, (B, ninp + 1, L), jnp.float32)
    src = src.at[:, 0, 0:2].set(1.0)              # make a few positions "null"
    offset = jnp.zeros((B,), jnp.float32)         # unused by forward

    fwd = jax.jit(functools.partial(transformer_model_forward, nhead=nhead))
    out = jax.block_until_ready(fwd(src, offset, packed))

    assert out.shape == (B, L) and out.dtype == jnp.float32
    assert bool(jnp.all(jnp.isfinite(out)))

    ref = reference_forward(src, params, nhead=nhead)
    max_diff = float(jnp.max(jnp.abs(out - ref)))
    # generous tolerance: approx reciprocal in the kernel softmax introduces ~1e-3 rel. error
    assert max_diff < 5e-2, f"mismatch vs reference: {max_diff}"

    print("KERNEL_OK")
</pallas_src>

<mosaic_0001>
module attributes {stable_mosaic.version = 11 : i64} {
  func.func @fused_forward_kernel(%arg0: memref<16x32xf32, #tpu.memory_space<vmem>>, %arg1: memref<8x32xf32, #tpu.memory_space<vmem>>, %arg2: memref<16x2xf32, #tpu.memory_space<vmem>>, %arg3: memref<2x4x4x32x8xf32, #tpu.memory_space<vmem>>, %arg4: memref<2x3x4x1x8xf32, #tpu.memory_space<vmem>>, %arg5: memref<2x2x64x32xf32, #tpu.memory_space<vmem>>, %arg6: memref<2x7x64xf32, #tpu.memory_space<vmem>>, %arg7: memref<2x32xf32, #tpu.memory_space<vmem>>, %arg8: memref<16x1xf32, #tpu.memory_space<vmem>>) attributes {dimension_semantics = [], scalar_prefetch = 0 : i64, scratch_operands = 0 : i64, tpu.core_type = #tpu.core_type<tc>} {
    %c0 = arith.constant 0 : index
    %c0_0 = arith.constant 0 : index
    %0 = vector.load %arg0[%c0, %c0_0] : memref<16x32xf32, #tpu.memory_space<vmem>>, vector<16x32xf32>
    %1 = vector.shape_cast %0 : vector<16x32xf32> to vector<2x8x32xf32>
    %c0_1 = arith.constant 0 : index
    %c0_2 = arith.constant 0 : index
    %2 = vector.load %arg1[%c0_1, %c0_2] : memref<8x32xf32, #tpu.memory_space<vmem>>, vector<8x32xf32>
    %3 = vector.shape_cast %2 : vector<8x32xf32> to vector<1x8x32xf32>
    %4 = vector.broadcast %3 : vector<1x8x32xf32> to vector<2x8x32xf32>
    %5 = arith.addf %1, %4 : vector<2x8x32xf32>
    %6 = vector.shape_cast %5 : vector<2x8x32xf32> to vector<16x32xf32>
    %c0_3 = arith.constant 0 : index
    %c0_4 = arith.constant 0 : index
    %c0_5 = arith.constant 0 : index
    %7 = vector.load %arg6[%c0_3, %c0_4, %c0_5] : memref<2x7x64xf32, #tpu.memory_space<vmem>>, vector<1x7x64xf32>
    %8 = vector.shape_cast %7 : vector<1x7x64xf32> to vector<7x64xf32>
    %9 = vector.extract_strided_slice %8 {offsets = [0, 0], sizes = [1, 64], strides = [1, 1]} : vector<7x64xf32> to vector<1x64xf32>
    %10 = vector.extract_strided_slice %8 {offsets = [1, 0], sizes = [1, 32], strides = [1, 1]} : vector<7x64xf32> to vector<1x32xf32>
    %11 = vector.extract_strided_slice %8 {offsets = [2, 0], sizes = [1, 32], strides = [1, 1]} : vector<7x64xf32> to vector<1x32xf32>
    %12 = vector.extract_strided_slice %8 {offsets = [3, 0], sizes = [1, 32], strides = [1, 1]} : vector<7x64xf32> to vector<1x32xf32>
    %13 = vector.extract_strided_slice %8 {offsets = [4, 0], sizes = [1, 32], strides = [1, 1]} : vector<7x64xf32> to vector<1x32xf32>
    %14 = vector.extract_strided_slice %8 {offsets = [5, 0], sizes = [1, 32], strides = [1, 1]} : vector<7x64xf32> to vector<1x32xf32>
    %15 = vector.extract_strided_slice %8 {offsets = [6, 0], sizes = [1, 32], strides = [1, 1]} : vector<7x64xf32> to vector<1x32xf32>
    %c0_6 = arith.constant 0 : index
    %c0_7 = arith.constant 0 : index
    %c0_8 = arith.constant 0 : index
    %c0_9 = arith.constant 0 : index
    %c0_10 = arith.constant 0 : index
    %16 = vector.load %arg3[%c0_6, %c0_7, %c0_8, %c0_9, %c0_10] : memref<2x4x4x32x8xf32, #tpu.memory_space<vmem>>, vector<1x1x1x32x8xf32>
    %17 = vector.shape_cast %16 : vector<1x1x1x32x8xf32> to vector<32x8xf32>
    %cst = arith.constant dense<0.000000e+00> : vector<16x8xf32>
    %18 = tpu.matmul %6, %17, %cst {dimension_numbers = #tpu.dot_dimension_numbers<[1], [0], [0], [1], [0, 0, 1, 1], [], []>} : vector<16x32xf32>, vector<32x8xf32>, vector<16x8xf32> -> vector<16x8xf32>
    %c0_11 = arith.constant 0 : index
    %c0_12 = arith.constant 0 : index
    %c0_13 = arith.constant 0 : index
    %c0_14 = arith.constant 0 : index
    %c0_15 = arith.constant 0 : index
    %19 = vector.load %arg4[%c0_11, %c0_12, %c0_13, %c0_14, %c0_15] : memref<2x3x4x1x8xf32, #tpu.memory_space<vmem>>, vector<1x1x1x1x8xf32>
    %20 = vector.shape_cast %19 : vector<1x1x1x1x8xf32> to vector<1x8xf32>
    %21 = vector.broadcast %20 : vector<1x8xf32> to vector<16x8xf32>
    %22 = arith.addf %18, %21 : vector<16x8xf32>
    %c0_16 = arith.constant 0 : index
    %c0_17 = arith.constant 0 : index
    %c1 = arith.constant 1 : index
    %c0_18 = arith.constant 0 : index
    %c0_19 = arith.constant 0 : index
    %23 = vector.load %arg3[%c0_16, %c0_17, %c1, %c0_18, %c0_19] : memref<2x4x4x32x8xf32, #tpu.memory_space<vmem>>, vector<1x1x1x32x8xf32>
    %24 = vector.shape_cast %23 : vector<1x1x1x32x8xf32> to vector<32x8xf32>
    %cst_20 = arith.constant dense<0.000000e+00> : vector<16x8xf32>
    %25 = tpu.matmul %6, %24, %cst_20 {dimension_numbers = #tpu.dot_dimension_numbers<[1], [0], [0], [1], [0, 0, 1, 1], [], []>} : vector<16x32xf32>, vector<32x8xf32>, vector<16x8xf32> -> vector<16x8xf32>
    %c0_21 = arith.constant 0 : index
    %c1_22 = arith.constant 1 : index
    %c0_23 = arith.constant 0 : index
    %c0_24 = arith.constant 0 : index
    %c0_25 = arith.constant 0 : index
    %26 = vector.load %arg4[%c0_21, %c1_22, %c0_23, %c0_24, %c0_25] : memref<2x3x4x1x8xf32, #tpu.memory_space<vmem>>, vector<1x1x1x1x8xf32>
    %27 = vector.shape_cast %26 : vector<1x1x1x1x8xf32> to vector<1x8xf32>
    %28 = vector.broadcast %27 : vector<1x8xf32> to vector<16x8xf32>
    %29 = arith.addf %25, %28 : vector<16x8xf32>
    %c0_26 = arith.constant 0 : index
    %c0_27 = arith.constant 0 : index
    %c2 = arith.constant 2 : index
    %c0_28 = arith.constant 0 : index
    %c0_29 = arith.constant 0 : index
    %30 = vector.load %arg3[%c0_26, %c0_27, %c2, %c0_28, %c0_29] : memref<2x4x4x32x8xf32, #tpu.memory_space<vmem>>, vector<1x1x1x32x8xf32>
    %31 = vector.shape_cast %30 : vector<1x1x1x32x8xf32> to vector<32x8xf32>
    %cst_30 = arith.constant dense<0.000000e+00> : vector<16x8xf32>
    %32 = tpu.matmul %6, %31, %cst_30 {dimension_numbers = #tpu.dot_dimension_numbers<[1], [0], [0], [1], [0, 0, 1, 1], [], []>} : vector<16x32xf32>, vector<32x8xf32>, vector<16x8xf32> -> vector<16x8xf32>
    %c0_31 = arith.constant 0 : index
    %c2_32 = arith.constant 2 : index
    %c0_33 = arith.constant 0 : index
    %c0_34 = arith.constant 0 : index
    %c0_35 = arith.constant 0 : index
    %33 = vector.load %arg4[%c0_31, %c2_32, %c0_33, %c0_34, %c0_35] : memref<2x3x4x1x8xf32, #tpu.memory_space<vmem>>, vector<1x1x1x1x8xf32>
    %34 = vector.shape_cast %33 : vector<1x1x1x1x8xf32> to vector<1x8xf32>
    %35 = vector.broadcast %34 : vector<1x8xf32> to vector<16x8xf32>
    %36 = arith.addf %32, %35 : vector<16x8xf32>
    %37 = vector.shape_cast %22 : vector<16x8xf32> to vector<2x8x8xf32>
    %38 = vector.shape_cast %29 : vector<16x8xf32> to vector<2x8x8xf32>
    %39 = vector.shape_cast %36 : vector<16x8xf32> to vector<2x8x8xf32>
    "tpu.trace_start"() <{level = 10 : i32, message = "bqd,bkd->bqk"}> : () -> ()
    %cst_36 = arith.constant dense<0.000000e+00> : vector<2x8x8xf32>
    %40 = tpu.matmul %37, %38, %cst_36 {dimension_numbers = #tpu.dot_dimension_numbers<[2], [2], [1], [1], [0, 0, 0, 1, 1, 1], [0], [0]>} : vector<2x8x8xf32>, vector<2x8x8xf32>, vector<2x8x8xf32> -> vector<2x8x8xf32>
    "tpu.trace_stop"() : () -> ()
    %cst_37 = arith.constant dense<0xFF800000> : vector<2x8xf32>
    %41 = vector.multi_reduction <maximumf>, %40, %cst_37 [2] : vector<2x8x8xf32> to vector<2x8xf32>
    %42 = vector.shape_cast %41 : vector<2x8xf32> to vector<2x8x1xf32>
    %43 = vector.broadcast %42 : vector<2x8x1xf32> to vector<2x8x8xf32>
    %44 = arith.subf %40, %43 : vector<2x8x8xf32>
    %45 = math.exp %44 : vector<2x8x8xf32>
    %cst_38 = arith.constant dense<0.000000e+00> : vector<2x8xf32>
    %46 = vector.multi_reduction <add>, %45, %cst_38 [2] : vector<2x8x8xf32> to vector<2x8xf32>
    %47 = vector.shape_cast %46 : vector<2x8xf32> to vector<2x8x1xf32>
    %48 = tpu.reciprocal %47 {approx = true} : vector<2x8x1xf32> -> vector<2x8x1xf32>
    %49 = vector.broadcast %48 : vector<2x8x1xf32> to vector<2x8x8xf32>
    %50 = arith.mulf %45, %49 : vector<2x8x8xf32>
    "tpu.trace_start"() <{level = 10 : i32, message = "bqk,bkd->bqd"}> : () -> ()
    %cst_39 = arith.constant dense<0.000000e+00> : vector<2x8x8xf32>
    %51 = tpu.matmul %50, %39, %cst_39 {dimension_numbers = #tpu.dot_dimension_numbers<[2], [1], [1], [2], [0, 0, 0, 1, 1, 2], [0], [0]>} : vector<2x8x8xf32>, vector<2x8x8xf32>, vector<2x8x8xf32> -> vector<2x8x8xf32>
    "tpu.trace_stop"() : () -> ()
    %52 = vector.shape_cast %51 : vector<2x8x8xf32> to vector<16x8xf32>
    %c0_40 = arith.constant 0 : index
    %c0_41 = arith.constant 0 : index
    %c3 = arith.constant 3 : index
    %c0_42 = arith.constant 0 : index
    %c0_43 = arith.constant 0 : index
    %53 = vector.load %arg3[%c0_40, %c0_41, %c3, %c0_42, %c0_43] : memref<2x4x4x32x8xf32, #tpu.memory_space<vmem>>, vector<1x1x1x32x8xf32>
    %54 = vector.shape_cast %53 : vector<1x1x1x32x8xf32> to vector<32x8xf32>
    %cst_44 = arith.constant dense<0.000000e+00> : vector<16x32xf32>
    %55 = tpu.matmul %52, %54, %cst_44 {dimension_numbers = #tpu.dot_dimension_numbers<[1], [1], [0], [0], [0, 0, 1, 0], [], []>} : vector<16x8xf32>, vector<32x8xf32>, vector<16x32xf32> -> vector<16x32xf32>
    %c0_45 = arith.constant 0 : index
    %c1_46 = arith.constant 1 : index
    %c0_47 = arith.constant 0 : index
    %c0_48 = arith.constant 0 : index
    %c0_49 = arith.constant 0 : index
    %56 = vector.load %arg3[%c0_45, %c1_46, %c0_47, %c0_48, %c0_49] : memref<2x4x4x32x8xf32, #tpu.memory_space<vmem>>, vector<1x1x1x32x8xf32>
    %57 = vector.shape_cast %56 : vector<1x1x1x32x8xf32> to vector<32x8xf32>
    %cst_50 = arith.constant dense<0.000000e+00> : vector<16x8xf32>
    %58 = tpu.matmul %6, %57, %cst_50 {dimension_numbers = #tpu.dot_dimension_numbers<[1], [0], [0], [1], [0, 0, 1, 1], [], []>} : vector<16x32xf32>, vector<32x8xf32>, vector<16x8xf32> -> vector<16x8xf32>
    %c0_51 = arith.constant 0 : index
    %c0_52 = arith.constant 0 : index
    %c1_53 = arith.constant 1 : index
    %c0_54 = arith.constant 0 : index
    %c0_55 = arith.constant 0 : index
    %59 = vector.load %arg4[%c0_51, %c0_52, %c1_53, %c0_54, %c0_55] : memref<2x3x4x1x8xf32, #tpu.memory_space<vmem>>, vector<1x1x1x1x8xf32>
    %60 = vector.shape_cast %59 : vector<1x1x1x1x8xf32> to vector<1x8xf32>
    %61 = vector.broadcast %60 : vector<1x8xf32> to vector<16x8xf32>
    %62 = arith.addf %58, %61 : vector<16x8xf32>
    %c0_56 = arith.constant 0 : index
    %c1_57 = arith.constant 1 : index
    %c1_58 = arith.constant 1 : index
    %c0_59 = arith.constant 0 : index
    %c0_60 = arith.constant 0 : index
    %63 = vector.load %arg3[%c0_56, %c1_57, %c1_58, %c0_59, %c0_60] : memref<2x4x4x32x8xf32, #tpu.memory_space<vmem>>, vector<1x1x1x32x8xf32>
    %64 = vector.shape_cast %63 : vector<1x1x1x32x8xf32> to vector<32x8xf32>
    %cst_61 = arith.constant dense<0.000000e+00> : vector<16x8xf32>
    %65 = tpu.matmul %6, %64, %cst_61 {dimension_numbers = #tpu.dot_dimension_numbers<[1], [0], [0], [1], [0, 0, 1, 1], [], []>} : vector<16x32xf32>, vector<32x8xf32>, vector<16x8xf32> -> vector<16x8xf32>
    %c0_62 = arith.constant 0 : index
    %c1_63 = arith.constant 1 : index
    %c1_64 = arith.constant 1 : index
    %c0_65 = arith.constant 0 : index
    %c0_66 = arith.constant 0 : index
    %66 = vector.load %arg4[%c0_62, %c1_63, %c1_64, %c0_65, %c0_66] : memref<2x3x4x1x8xf32, #tpu.memory_space<vmem>>, vector<1x1x1x1x8xf32>
    %67 = vector.shape_cast %66 : vector<1x1x1x1x8xf32> to vector<1x8xf32>
    %68 = vector.broadcast %67 : vector<1x8xf32> to vector<16x8xf32>
    %69 = arith.addf %65, %68 : vector<16x8xf32>
    %c0_67 = arith.constant 0 : index
    %c1_68 = arith.constant 1 : index
    %c2_69 = arith.constant 2 : index
    %c0_70 = arith.constant 0 : index
    %c0_71 = arith.constant 0 : index
    %70 = vector.load %arg3[%c0_67, %c1_68, %c2_69, %c0_70, %c0_71] : memref<2x4x4x32x8xf32, #tpu.memory_space<vmem>>, vector<1x1x1x32x8xf32>
    %71 = vector.shape_cast %70 : vector<1x1x1x32x8xf32> to vector<32x8xf32>
    %cst_72 = arith.constant dense<0.000000e+00> : vector<16x8xf32>
    %72 = tpu.matmul %6, %71, %cst_72 {dimension_numbers = #tpu.dot_dimension_numbers<[1], [0], [0], [1], [0, 0, 1, 1], [], []>} : vector<16x32xf32>, vector<32x8xf32>, vector<16x8xf32> -> vector<16x8xf32>
    %c0_73 = arith.constant 0 : index
    %c2_74 = arith.constant 2 : index
    %c1_75 = arith.constant 1 : index
    %c0_76 = arith.constant 0 : index
    %c0_77 = arith.constant 0 : index
    %73 = vector.load %arg4[%c0_73, %c2_74, %c1_75, %c0_76, %c0_77] : memref<2x3x4x1x8xf32, #tpu.memory_space<vmem>>, vector<1x1x1x1x8xf32>
    %74 = vector.shape_cast %73 : vector<1x1x1x1x8xf32> to vector<1x8xf32>
    %75 = vector.broadcast %74 : vector<1x8xf32> to vector<16x8xf32>
    %76 = arith.addf %72, %75 : vector<16x8xf32>
    %77 = vector.shape_cast %62 : vector<16x8xf32> to vector<2x8x8xf32>
    %78 = vector.shape_cast %69 : vector<16x8xf32> to vector<2x8x8xf32>
    %79 = vector.shape_cast %76 : vector<16x8xf32> to vector<2x8x8xf32>
    "tpu.trace_start"() <{level = 10 : i32, message = "bqd,bkd->bqk"}> : () -> ()
    %cst_78 = arith.constant dense<0.000000e+00> : vector<2x8x8xf32>
    %80 = tpu.matmul %77, %78, %cst_78 {dimension_numbers = #tpu.dot_dimension_numbers<[2], [2], [1], [1], [0, 0, 0, 1, 1, 1], [0], [0]>} : vector<2x8x8xf32>, vector<2x8x8xf32>, vector<2x8x8xf32> -> vector<2x8x8xf32>
    "tpu.trace_stop"() : () -> ()
    %cst_79 = arith.constant dense<0xFF800000> : vector<2x8xf32>
    %81 = vector.multi_reduction <maximumf>, %80, %cst_79 [2] : vector<2x8x8xf32> to vector<2x8xf32>
    %82 = vector.shape_cast %81 : vector<2x8xf32> to vector<2x8x1xf32>
    %83 = vector.broadcast %82 : vector<2x8x1xf32> to vector<2x8x8xf32>
    %84 = arith.subf %80, %83 : vector<2x8x8xf32>
    %85 = math.exp %84 : vector<2x8x8xf32>
    %cst_80 = arith.constant dense<0.000000e+00> : vector<2x8xf32>
    %86 = vector.multi_reduction <add>, %85, %cst_80 [2] : vector<2x8x8xf32> to vector<2x8xf32>
    %87 = vector.shape_cast %86 : vector<2x8xf32> to vector<2x8x1xf32>
    %88 = tpu.reciprocal %87 {approx = true} : vector<2x8x1xf32> -> vector<2x8x1xf32>
    %89 = vector.broadcast %88 : vector<2x8x1xf32> to vector<2x8x8xf32>
    %90 = arith.mulf %85, %89 : vector<2x8x8xf32>
    "tpu.trace_start"() <{level = 10 : i32, message = "bqk,bkd->bqd"}> : () -> ()
    %cst_81 = arith.constant dense<0.000000e+00> : vector<2x8x8xf32>
    %91 = tpu.matmul %90, %79, %cst_81 {dimension_numbers = #tpu.dot_dimension_numbers<[2], [1], [1], [2], [0, 0, 0, 1, 1, 2], [0], [0]>} : vector<2x8x8xf32>, vector<2x8x8xf32>, vector<2x8x8xf32> -> vector<2x8x8xf32>
    "tpu.trace_stop"() : () -> ()
    %92 = vector.shape_cast %91 : vector<2x8x8xf32> to vector<16x8xf32>
    %c0_82 = arith.constant 0 : index
    %c1_83 = arith.constant 1 : index
    %c3_84 = arith.constant 3 : index
    %c0_85 = arith.constant 0 : index
    %c0_86 = arith.constant 0 : index
    %93 = vector.load %arg3[%c0_82, %c1_83, %c3_84, %c0_85, %c0_86] : memref<2x4x4x32x8xf32, #tpu.memory_space<vmem>>, vector<1x1x1x32x8xf32>
    %94 = vector.shape_cast %93 : vector<1x1x1x32x8xf32> to vector<32x8xf32>
    %cst_87 = arith.constant dense<0.000000e+00> : vector<16x32xf32>
    %95 = tpu.matmul %92, %94, %cst_87 {dimension_numbers = #tpu.dot_dimension_numbers<[1], [1], [0], [0], [0, 0, 1, 0], [], []>} : vector<16x8xf32>, vector<32x8xf32>, vector<16x32xf32> -> vector<16x32xf32>
    %96 = arith.addf %55, %95 : vector<16x32xf32>
    %c0_88 = arith.constant 0 : index
    %c2_89 = arith.constant 2 : index
    %c0_90 = arith.constant 0 : index
    %c0_91 = arith.constant 0 : index
    %c0_92 = arith.constant 0 : index
    %97 = vector.load %arg3[%c0_88, %c2_89, %c0_90, %c0_91, %c0_92] : memref<2x4x4x32x8xf32, #tpu.memory_space<vmem>>, vector<1x1x1x32x8xf32>
    %98 = vector.shape_cast %97 : vector<1x1x1x32x8xf32> to vector<32x8xf32>
    %cst_93 = arith.constant dense<0.000000e+00> : vector<16x8xf32>
    %99 = tpu.matmul %6, %98, %cst_93 {dimension_numbers = #tpu.dot_dimension_numbers<[1], [0], [0], [1], [0, 0, 1, 1], [], []>} : vector<16x32xf32>, vector<32x8xf32>, vector<16x8xf32> -> vector<16x8xf32>
    %c0_94 = arith.constant 0 : index
    %c0_95 = arith.constant 0 : index
    %c2_96 = arith.constant 2 : index
    %c0_97 = arith.constant 0 : index
    %c0_98 = arith.constant 0 : index
    %100 = vector.load %arg4[%c0_94, %c0_95, %c2_96, %c0_97, %c0_98] : memref<2x3x4x1x8xf32, #tpu.memory_space<vmem>>, vector<1x1x1x1x8xf32>
    %101 = vector.shape_cast %100 : vector<1x1x1x1x8xf32> to vector<1x8xf32>
    %102 = vector.broadcast %101 : vector<1x8xf32> to vector<16x8xf32>
    %103 = arith.addf %99, %102 : vector<16x8xf32>
    %c0_99 = arith.constant 0 : index
    %c2_100 = arith.constant 2 : index
    %c1_101 = arith.constant 1 : index
    %c0_102 = arith.constant 0 : index
    %c0_103 = arith.constant 0 : index
    %104 = vector.load %arg3[%c0_99, %c2_100, %c1_101, %c0_102, %c0_103] : memref<2x4x4x32x8xf32, #tpu.memory_space<vmem>>, vector<1x1x1x32x8xf32>
    %105 = vector.shape_cast %104 : vector<1x1x1x32x8xf32> to vector<32x8xf32>
    %cst_104 = arith.constant dense<0.000000e+00> : vector<16x8xf32>
    %106 = tpu.matmul %6, %105, %cst_104 {dimension_numbers = #tpu.dot_dimension_numbers<[1], [0], [0], [1], [0, 0, 1, 1], [], []>} : vector<16x32xf32>, vector<32x8xf32>, vector<16x8xf32> -> vector<16x8xf32>
    %c0_105 = arith.constant 0 : index
    %c1_106 = arith.constant 1 : index
    %c2_107 = arith.constant 2 : index
    %c0_108 = arith.constant 0 : index
    %c0_109 = arith.constant 0 : index
    %107 = vector.load %arg4[%c0_105, %c1_106, %c2_107, %c0_108, %c0_109] : memref<2x3x4x1x8xf32, #tpu.memory_space<vmem>>, vector<1x1x1x1x8xf32>
    %108 = vector.shape_cast %107 : vector<1x1x1x1x8xf32> to vector<1x8xf32>
    %109 = vector.broadcast %108 : vector<1x8xf32> to vector<16x8xf32>
    %110 = arith.addf %106, %109 : vector<16x8xf32>
    %c0_110 = arith.constant 0 : index
    %c2_111 = arith.constant 2 : index
    %c2_112 = arith.constant 2 : index
    %c0_113 = arith.constant 0 : index
    %c0_114 = arith.constant 0 : index
    %111 = vector.load %arg3[%c0_110, %c2_111, %c2_112, %c0_113, %c0_114] : memref<2x4x4x32x8xf32, #tpu.memory_space<vmem>>, vector<1x1x1x32x8xf32>
    %112 = vector.shape_cast %111 : vector<1x1x1x32x8xf32> to vector<32x8xf32>
    %cst_115 = arith.constant dense<0.000000e+00> : vector<16x8xf32>
    %113 = tpu.matmul %6, %112, %cst_115 {dimension_numbers = #tpu.dot_dimension_numbers<[1], [0], [0], [1], [0, 0, 1, 1], [], []>} : vector<16x32xf32>, vector<32x8xf32>, vector<16x8xf32> -> vector<16x8xf32>
    %c0_116 = arith.constant 0 : index
    %c2_117 = arith.constant 2 : index
    %c2_118 = arith.constant 2 : index
    %c0_119 = arith.constant 0 : index
    %c0_120 = arith.constant 0 : index
    %114 = vector.load %arg4[%c0_116, %c2_117, %c2_118, %c0_119, %c0_120] : memref<2x3x4x1x8xf32, #tpu.memory_space<vmem>>, vector<1x1x1x1x8xf32>
    %115 = vector.shape_cast %114 : vector<1x1x1x1x8xf32> to vector<1x8xf32>
    %116 = vector.broadcast %115 : vector<1x8xf32> to vector<16x8xf32>
    %117 = arith.addf %113, %116 : vector<16x8xf32>
    %118 = vector.shape_cast %103 : vector<16x8xf32> to vector<2x8x8xf32>
    %119 = vector.shape_cast %110 : vector<16x8xf32> to vector<2x8x8xf32>
    %120 = vector.shape_cast %117 : vector<16x8xf32> to vector<2x8x8xf32>
    "tpu.trace_start"() <{level = 10 : i32, message = "bqd,bkd->bqk"}> : () -> ()
    %cst_121 = arith.constant dense<0.000000e+00> : vector<2x8x8xf32>
    %121 = tpu.matmul %118, %119, %cst_121 {dimension_numbers = #tpu.dot_dimension_numbers<[2], [2], [1], [1], [0, 0, 0, 1, 1, 1], [0], [0]>} : vector<2x8x8xf32>, vector<2x8x8xf32>, vector<2x8x8xf32> -> vector<2x8x8xf32>
    "tpu.trace_stop"() : () -> ()
    %cst_122 = arith.constant dense<0xFF800000> : vector<2x8xf32>
    %122 = vector.multi_reduction <maximumf>, %121, %cst_122 [2] : vector<2x8x8xf32> to vector<2x8xf32>
    %123 = vector.shape_cast %122 : vector<2x8xf32> to vector<2x8x1xf32>
    %124 = vector.broadcast %123 : vector<2x8x1xf32> to vector<2x8x8xf32>
    %125 = arith.subf %121, %124 : vector<2x8x8xf32>
    %126 = math.exp %125 : vector<2x8x8xf32>
    %cst_123 = arith.constant dense<0.000000e+00> : vector<2x8xf32>
    %127 = vector.multi_reduction <add>, %126, %cst_123 [2] : vector<2x8x8xf32> to vector<2x8xf32>
    %128 = vector.shape_cast %127 : vector<2x8xf32> to vector<2x8x1xf32>
    %129 = tpu.reciprocal %128 {approx = true} : vector<2x8x1xf32> -> vector<2x8x1xf32>
    %130 = vector.broadcast %129 : vector<2x8x1xf32> to vector<2x8x8xf32>
    %131 = arith.mulf %126, %130 : vector<2x8x8xf32>
    "tpu.trace_start"() <{level = 10 : i32, message = "bqk,bkd->bqd"}> : () -> ()
    %cst_124 = arith.constant dense<0.000000e+00> : vector<2x8x8xf32>
    %132 = tpu.matmul %131, %120, %cst_124 {dimension_numbers = #tpu.dot_dimension_numbers<[2], [1], [1], [2], [0, 0, 0, 1, 1, 2], [0], [0]>} : vector<2x8x8xf32>, vector<2x8x8xf32>, vector<2x8x8xf32> -> vector<2x8x8xf32>
    "tpu.trace_stop"() : () -> ()
    %133 = vector.shape_cast %132 : vector<2x8x8xf32> to vector<16x8xf32>
    %c0_125 = arith.constant 0 : index
    %c2_126 = arith.constant 2 : index
    %c3_127 = arith.constant 3 : index
    %c0_128 = arith.constant 0 : index
    %c0_129 = arith.constant 0 : index
    %134 = vector.load %arg3[%c0_125, %c2_126, %c3_127, %c0_128, %c0_129] : memref<2x4x4x32x8xf32, #tpu.memory_space<vmem>>, vector<1x1x1x32x8xf32>
    %135 = vector.shape_cast %134 : vector<1x1x1x32x8xf32> to vector<32x8xf32>
    %cst_130 = arith.constant dense<0.000000e+00> : vector<16x32xf32>
    %136 = tpu.matmul %133, %135, %cst_130 {dimension_numbers = #tpu.dot_dimension_numbers<[1], [1], [0], [0], [0, 0, 1, 0], [], []>} : vector<16x8xf32>, vector<32x8xf32>, vector<16x32xf32> -> vector<16x32xf32>
    %137 = arith.addf %96, %136 : vector<16x32xf32>
    %c0_131 = arith.constant 0 : index
    %c3_132 = arith.constant 3 : index
    %c0_133 = arith.constant 0 : index
    %c0_134 = arith.constant 0 : index
    %c0_135 = arith.constant 0 : index
    %138 = vector.load %arg3[%c0_131, %c3_132, %c0_133, %c0_134, %c0_135] : memref<2x4x4x32x8xf32, #tpu.memory_space<vmem>>, vector<1x1x1x32x8xf32>
    %139 = vector.shape_cast %138 : vector<1x1x1x32x8xf32> to vector<32x8xf32>
    %cst_136 = arith.constant dense<0.000000e+00> : vector<16x8xf32>
    %140 = tpu.matmul %6, %139, %cst_136 {dimension_numbers = #tpu.dot_dimension_numbers<[1], [0], [0], [1], [0, 0, 1, 1], [], []>} : vector<16x32xf32>, vector<32x8xf32>, vector<16x8xf32> -> vector<16x8xf32>
    %c0_137 = arith.constant 0 : index
    %c0_138 = arith.constant 0 : index
    %c3_139 = arith.constant 3 : index
    %c0_140 = arith.constant 0 : index
    %c0_141 = arith.constant 0 : index
    %141 = vector.load %arg4[%c0_137, %c0_138, %c3_139, %c0_140, %c0_141] : memref<2x3x4x1x8xf32, #tpu.memory_space<vmem>>, vector<1x1x1x1x8xf32>
    %142 = vector.shape_cast %141 : vector<1x1x1x1x8xf32> to vector<1x8xf32>
    %143 = vector.broadcast %142 : vector<1x8xf32> to vector<16x8xf32>
    %144 = arith.addf %140, %143 : vector<16x8xf32>
    %c0_142 = arith.constant 0 : index
    %c3_143 = arith.constant 3 : index
    %c1_144 = arith.constant 1 : index
    %c0_145 = arith.constant 0 : index
    %c0_146 = arith.constant 0 : index
    %145 = vector.load %arg3[%c0_142, %c3_143, %c1_144, %c0_145, %c0_146] : memref<2x4x4x32x8xf32, #tpu.memory_space<vmem>>, vector<1x1x1x32x8xf32>
    %146 = vector.shape_cast %145 : vector<1x1x1x32x8xf32> to vector<32x8xf32>
    %cst_147 = arith.constant dense<0.000000e+00> : vector<16x8xf32>
    %147 = tpu.matmul %6, %146, %cst_147 {dimension_numbers = #tpu.dot_dimension_numbers<[1], [0], [0], [1], [0, 0, 1, 1], [], []>} : vector<16x32xf32>, vector<32x8xf32>, vector<16x8xf32> -> vector<16x8xf32>
    %c0_148 = arith.constant 0 : index
    %c1_149 = arith.constant 1 : index
    %c3_150 = arith.constant 3 : index
    %c0_151 = arith.constant 0 : index
    %c0_152 = arith.constant 0 : index
    %148 = vector.load %arg4[%c0_148, %c1_149, %c3_150, %c0_151, %c0_152] : memref<2x3x4x1x8xf32, #tpu.memory_space<vmem>>, vector<1x1x1x1x8xf32>
    %149 = vector.shape_cast %148 : vector<1x1x1x1x8xf32> to vector<1x8xf32>
    %150 = vector.broadcast %149 : vector<1x8xf32> to vector<16x8xf32>
    %151 = arith.addf %147, %150 : vector<16x8xf32>
    %c0_153 = arith.constant 0 : index
    %c3_154 = arith.constant 3 : index
    %c2_155 = arith.constant 2 : index
    %c0_156 = arith.constant 0 : index
    %c0_157 = arith.constant 0 : index
    %152 = vector.load %arg3[%c0_153, %c3_154, %c2_155, %c0_156, %c0_157] : memref<2x4x4x32x8xf32, #tpu.memory_space<vmem>>, vector<1x1x1x32x8xf32>
    %153 = vector.shape_cast %152 : vector<1x1x1x32x8xf32> to vector<32x8xf32>
    %cst_158 = arith.constant dense<0.000000e+00> : vector<16x8xf32>
    %154 = tpu.matmul %6, %153, %cst_158 {dimension_numbers = #tpu.dot_dimension_numbers<[1], [0], [0], [1], [0, 0, 1, 1], [], []>} : vector<16x32xf32>, vector<32x8xf32>, vector<16x8xf32> -> vector<16x8xf32>
    %c0_159 = arith.constant 0 : index
    %c2_160 = arith.constant 2 : index
    %c3_161 = arith.constant 3 : index
    %c0_162 = arith.constant 0 : index
    %c0_163 = arith.constant 0 : index
    %155 = vector.load %arg4[%c0_159, %c2_160, %c3_161, %c0_162, %c0_163] : memref<2x3x4x1x8xf32, #tpu.memory_space<vmem>>, vector<1x1x1x1x8xf32>
    %156 = vector.shape_cast %155 : vector<1x1x1x1x8xf32> to vector<1x8xf32>
    %157 = vector.broadcast %156 : vector<1x8xf32> to vector<16x8xf32>
    %158 = arith.addf %154, %157 : vector<16x8xf32>
    %159 = vector.shape_cast %144 : vector<16x8xf32> to vector<2x8x8xf32>
    %160 = vector.shape_cast %151 : vector<16x8xf32> to vector<2x8x8xf32>
    %161 = vector.shape_cast %158 : vector<16x8xf32> to vector<2x8x8xf32>
    "tpu.trace_start"() <{level = 10 : i32, message = "bqd,bkd->bqk"}> : () -> ()
    %cst_164 = arith.constant dense<0.000000e+00> : vector<2x8x8xf32>
    %162 = tpu.matmul %159, %160, %cst_164 {dimension_numbers = #tpu.dot_dimension_numbers<[2], [2], [1], [1], [0, 0, 0, 1, 1, 1], [0], [0]>} : vector<2x8x8xf32>, vector<2x8x8xf32>, vector<2x8x8xf32> -> vector<2x8x8xf32>
    "tpu.trace_stop"() : () -> ()
    %cst_165 = arith.constant dense<0xFF800000> : vector<2x8xf32>
    %163 = vector.multi_reduction <maximumf>, %162, %cst_165 [2] : vector<2x8x8xf32> to vector<2x8xf32>
    %164 = vector.shape_cast %163 : vector<2x8xf32> to vector<2x8x1xf32>
    %165 = vector.broadcast %164 : vector<2x8x1xf32> to vector<2x8x8xf32>
    %166 = arith.subf %162, %165 : vector<2x8x8xf32>
    %167 = math.exp %166 : vector<2x8x8xf32>
    %cst_166 = arith.constant dense<0.000000e+00> : vector<2x8xf32>
    %168 = vector.multi_reduction <add>, %167, %cst_166 [2] : vector<2x8x8xf32> to vector<2x8xf32>
    %169 = vector.shape_cast %168 : vector<2x8xf32> to vector<2x8x1xf32>
    %170 = tpu.reciprocal %169 {approx = true} : vector<2x8x1xf32> -> vector<2x8x1xf32>
    %171 = vector.broadcast %170 : vector<2x8x1xf32> to vector<2x8x8xf32>
    %172 = arith.mulf %167, %171 : vector<2x8x8xf32>
    "tpu.trace_start"() <{level = 10 : i32, message = "bqk,bkd->bqd"}> : () -> ()
    %cst_167 = arith.constant dense<0.000000e+00> : vector<2x8x8xf32>
    %173 = tpu.matmul %172, %161, %cst_167 {dimension_numbers = #tpu.dot_dimension_numbers<[2], [1], [1], [2], [0, 0, 0, 1, 1, 2], [0], [0]>} : vector<2x8x8xf32>, vector<2x8x8xf32>, vector<2x8x8xf32> -> vector<2x8x8xf32>
    "tpu.trace_stop"() : () -> ()
    %174 = vector.shape_cast %173 : vector<2x8x8xf32> to vector<16x8xf32>
    %c0_168 = arith.constant 0 : index
    %c3_169 = arith.constant 3 : index
    %c3_170 = arith.constant 3 : index
    %c0_171 = arith.constant 0 : index
    %c0_172 = arith.constant 0 : index
    %175 = vector.load %arg3[%c0_168, %c3_169, %c3_170, %c0_171, %c0_172] : memref<2x4x4x32x8xf32, #tpu.memory_space<vmem>>, vector<1x1x1x32x8xf32>
    %176 = vector.shape_cast %175 : vector<1x1x1x32x8xf32> to vector<32x8xf32>
    %cst_173 = arith.constant dense<0.000000e+00> : vector<16x32xf32>
    %177 = tpu.matmul %174, %176, %cst_173 {dimension_numbers = #tpu.dot_dimension_numbers<[1], [1], [0], [0], [0, 0, 1, 0], [], []>} : vector<16x8xf32>, vector<32x8xf32>, vector<16x32xf32> -> vector<16x32xf32>
    %178 = arith.addf %137, %177 : vector<16x32xf32>
    %179 = vector.broadcast %10 : vector<1x32xf32> to vector<16x32xf32>
    %180 = arith.addf %178, %179 : vector<16x32xf32>
    %181 = arith.addf %6, %180 : vector<16x32xf32>
    %cst_174 = arith.constant dense<0.000000e+00> : vector<16xf32>
    %182 = vector.multi_reduction <add>, %181, %cst_174 [1] : vector<16x32xf32> to vector<16xf32>
    %183 = vector.shape_cast %182 : vector<16xf32> to vector<16x1xf32>
    %cst_175 = arith.constant 3.200000e+01 : f32
    %184 = vector.broadcast %cst_175 : f32 to vector<16x1xf32>
    %185 = arith.divf %183, %184 : vector<16x1xf32>
    %186 = vector.broadcast %185 : vector<16x1xf32> to vector<16x32xf32>
    %187 = arith.subf %181, %186 : vector<16x32xf32>
    %188 = arith.mulf %187, %187 : vector<16x32xf32>
    %cst_176 = arith.constant dense<0.000000e+00> : vector<16xf32>
    %189 = vector.multi_reduction <add>, %188, %cst_176 [1] : vector<16x32xf32> to vector<16xf32>
    %190 = vector.shape_cast %189 : vector<16xf32> to vector<16x1xf32>
    %cst_177 = arith.constant 3.200000e+01 : f32
    %191 = vector.broadcast %cst_177 : f32 to vector<16x1xf32>
    %192 = arith.divf %190, %191 : vector<16x1xf32>
    %193 = vector.broadcast %185 : vector<16x1xf32> to vector<16x32xf32>
    %194 = arith.subf %181, %193 : vector<16x32xf32>
    %cst_178 = arith.constant 9.99999974E-6 : f32
    %195 = vector.broadcast %cst_178 : f32 to vector<16x1xf32>
    %196 = arith.addf %192, %195 : vector<16x1xf32>
    %197 = math.rsqrt %196 : vector<16x1xf32>
    %198 = vector.broadcast %197 : vector<16x1xf32> to vector<16x32xf32>
    %199 = arith.mulf %194, %198 : vector<16x32xf32>
    %200 = vector.broadcast %12 : vector<1x32xf32> to vector<16x32xf32>
    %201 = arith.mulf %199, %200 : vector<16x32xf32>
    %202 = vector.broadcast %13 : vector<1x32xf32> to vector<16x32xf32>
    %203 = arith.addf %201, %202 : vector<16x32xf32>
    %c0_179 = arith.constant 0 : index
    %c0_180 = arith.constant 0 : index
    %c0_181 = arith.constant 0 : index
    %c0_182 = arith.constant 0 : index
    %204 = vector.load %arg5[%c0_179, %c0_180, %c0_181, %c0_182] : memref<2x2x64x32xf32, #tpu.memory_space<vmem>>, vector<1x1x64x32xf32>
    %205 = vector.shape_cast %204 : vector<1x1x64x32xf32> to vector<64x32xf32>
    %cst_183 = arith.constant dense<0.000000e+00> : vector<16x64xf32>
    %206 = tpu.matmul %203, %205, %cst_183 {dimension_numbers = #tpu.dot_dimension_numbers<[1], [1], [0], [0], [0, 0, 1, 0], [], []>} : vector<16x32xf32>, vector<64x32xf32>, vector<16x64xf32> -> vector<16x64xf32>
    %207 = vector.broadcast %9 : vector<1x64xf32> to vector<16x64xf32>
    %208 = arith.addf %206, %207 : vector<16x64xf32>
    %cst_184 = arith.constant 0.000000e+00 : f32
    %209 = vector.broadcast %cst_184 : f32 to vector<16x64xf32>
    %210 = arith.maximumf %208, %209 : vector<16x64xf32>
    %c0_185 = arith.constant 0 : index
    %c1_186 = arith.constant 1 : index
    %c0_187 = arith.constant 0 : index
    %c0_188 = arith.constant 0 : index
    %211 = vector.load %arg5[%c0_185, %c1_186, %c0_187, %c0_188] : memref<2x2x64x32xf32, #tpu.memory_space<vmem>>, vector<1x1x64x32xf32>
    %212 = vector.shape_cast %211 : vector<1x1x64x32xf32> to vector<64x32xf32>
    %cst_189 = arith.constant dense<0.000000e+00> : vector<16x32xf32>
    %213 = tpu.matmul %210, %212, %cst_189 {dimension_numbers = #tpu.dot_dimension_numbers<[1], [0], [0], [1], [0, 0, 1, 1], [], []>} : vector<16x64xf32>, vector<64x32xf32>, vector<16x32xf32> -> vector<16x32xf32>
    %214 = vector.broadcast %11 : vector<1x32xf32> to vector<16x32xf32>
    %215 = arith.addf %213, %214 : vector<16x32xf32>
    %216 = arith.addf %203, %215 : vector<16x32xf32>
    %cst_190 = arith.constant dense<0.000000e+00> : vector<16xf32>
    %217 = vector.multi_reduction <add>, %216, %cst_190 [1] : vector<16x32xf32> to vector<16xf32>
    %218 = vector.shape_cast %217 : vector<16xf32> to vector<16x1xf32>
    %cst_191 = arith.constant 3.200000e+01 : f32
    %219 = vector.broadcast %cst_191 : f32 to vector<16x1xf32>
    %220 = arith.divf %218, %219 : vector<16x1xf32>
    %221 = vector.broadcast %220 : vector<16x1xf32> to vector<16x32xf32>
    %222 = arith.subf %216, %221 : vector<16x32xf32>
    %223 = arith.mulf %222, %222 : vector<16x32xf32>
    %cst_192 = arith.constant dense<0.000000e+00> : vector<16xf32>
    %224 = vector.multi_reduction <add>, %223, %cst_192 [1] : vector<16x32xf32> to vector<16xf32>
    %225 = vector.shape_cast %224 : vector<16xf32> to vector<16x1xf32>
    %cst_193 = arith.constant 3.200000e+01 : f32
    %226 = vector.broadcast %cst_193 : f32 to vector<16x1xf32>
    %227 = arith.divf %225, %226 : vector<16x1xf32>
    %228 = vector.broadcast %220 : vector<16x1xf32> to vector<16x32xf32>
    %229 = arith.subf %216, %228 : vector<16x32xf32>
    %cst_194 = arith.constant 9.99999974E-6 : f32
    %230 = vector.broadcast %cst_194 : f32 to vector<16x1xf32>
    %231 = arith.addf %227, %230 : vector<16x1xf32>
    %232 = math.rsqrt %231 : vector<16x1xf32>
    %233 = vector.broadcast %232 : vector<16x1xf32> to vector<16x32xf32>
    %234 = arith.mulf %229, %233 : vector<16x32xf32>
    %235 = vector.broadcast %14 : vector<1x32xf32> to vector<16x32xf32>
    %236 = arith.mulf %234, %235 : vector<16x32xf32>
    %237 = vector.broadcast %15 : vector<1x32xf32> to vector<16x32xf32>
    %238 = arith.addf %236, %237 : vector<16x32xf32>
    %c1_195 = arith.constant 1 : index
    %c0_196 = arith.constant 0 : index
    %c0_197 = arith.constant 0 : index
    %239 = vector.load %arg6[%c1_195, %c0_196, %c0_197] : memref<2x7x64xf32, #tpu.memory_space<vmem>>, vector<1x7x64xf32>
    %240 = vector.shape_cast %239 : vector<1x7x64xf32> to vector<7x64xf32>
    %241 = vector.extract_strided_slice %240 {offsets = [0, 0], sizes = [1, 64], strides = [1, 1]} : vector<7x64xf32> to vector<1x64xf32>
    %242 = vector.extract_strided_slice %240 {offsets = [1, 0], sizes = [1, 32], strides = [1, 1]} : vector<7x64xf32> to vector<1x32xf32>
    %243 = vector.extract_strided_slice %240 {offsets = [2, 0], sizes = [1, 32], strides = [1, 1]} : vector<7x64xf32> to vector<1x32xf32>
    %244 = vector.extract_strided_slice %240 {offsets = [3, 0], sizes = [1, 32], strides = [1, 1]} : vector<7x64xf32> to vector<1x32xf32>
    %245 = vector.extract_strided_slice %240 {offsets = [4, 0], sizes = [1, 32], strides = [1, 1]} : vector<7x64xf32> to vector<1x32xf32>
    %246 = vector.extract_strided_slice %240 {offsets = [5, 0], sizes = [1, 32], strides = [1, 1]} : vector<7x64xf32> to vector<1x32xf32>
    %247 = vector.extract_strided_slice %240 {offsets = [6, 0], sizes = [1, 32], strides = [1, 1]} : vector<7x64xf32> to vector<1x32xf32>
    %c1_198 = arith.constant 1 : index
    %c0_199 = arith.constant 0 : index
    %c0_200 = arith.constant 0 : index
    %c0_201 = arith.constant 0 : index
    %c0_202 = arith.constant 0 : index
    %248 = vector.load %arg3[%c1_198, %c0_199, %c0_200, %c0_201, %c0_202] : memref<2x4x4x32x8xf32, #tpu.memory_space<vmem>>, vector<1x1x1x32x8xf32>
    %249 = vector.shape_cast %248 : vector<1x1x1x32x8xf32> to vector<32x8xf32>
    %cst_203 = arith.constant dense<0.000000e+00> : vector<16x8xf32>
    %250 = tpu.matmul %238, %249, %cst_203 {dimension_numbers = #tpu.dot_dimension_numbers<[1], [0], [0], [1], [0, 0, 1, 1], [], []>} : vector<16x32xf32>, vector<32x8xf32>, vector<16x8xf32> -> vector<16x8xf32>
    %c1_204 = arith.constant 1 : index
    %c0_205 = arith.constant 0 : index
    %c0_206 = arith.constant 0 : index
    %c0_207 = arith.constant 0 : index
    %c0_208 = arith.constant 0 : index
    %251 = vector.load %arg4[%c1_204, %c0_205, %c0_206, %c0_207, %c0_208] : memref<2x3x4x1x8xf32, #tpu.memory_space<vmem>>, vector<1x1x1x1x8xf32>
    %252 = vector.shape_cast %251 : vector<1x1x1x1x8xf32> to vector<1x8xf32>
    %253 = vector.broadcast %252 : vector<1x8xf32> to vector<16x8xf32>
    %254 = arith.addf %250, %253 : vector<16x8xf32>
    %c1_209 = arith.constant 1 : index
    %c0_210 = arith.constant 0 : index
    %c1_211 = arith.constant 1 : index
    %c0_212 = arith.constant 0 : index
    %c0_213 = arith.constant 0 : index
    %255 = vector.load %arg3[%c1_209, %c0_210, %c1_211, %c0_212, %c0_213] : memref<2x4x4x32x8xf32, #tpu.memory_space<vmem>>, vector<1x1x1x32x8xf32>
    %256 = vector.shape_cast %255 : vector<1x1x1x32x8xf32> to vector<32x8xf32>
    %cst_214 = arith.constant dense<0.000000e+00> : vector<16x8xf32>
    %257 = tpu.matmul %238, %256, %cst_214 {dimension_numbers = #tpu.dot_dimension_numbers<[1], [0], [0], [1], [0, 0, 1, 1], [], []>} : vector<16x32xf32>, vector<32x8xf32>, vector<16x8xf32> -> vector<16x8xf32>
    %c1_215 = arith.constant 1 : index
    %c1_216 = arith.constant 1 : index
    %c0_217 = arith.constant 0 : index
    %c0_218 = arith.constant 0 : index
    %c0_219 = arith.constant 0 : index
    %258 = vector.load %arg4[%c1_215, %c1_216, %c0_217, %c0_218, %c0_219] : memref<2x3x4x1x8xf32, #tpu.memory_space<vmem>>, vector<1x1x1x1x8xf32>
    %259 = vector.shape_cast %258 : vector<1x1x1x1x8xf32> to vector<1x8xf32>
    %260 = vector.broadcast %259 : vector<1x8xf32> to vector<16x8xf32>
    %261 = arith.addf %257, %260 : vector<16x8xf32>
    %c1_220 = arith.constant 1 : index
    %c0_221 = arith.constant 0 : index
    %c2_222 = arith.constant 2 : index
    %c0_223 = arith.constant 0 : index
    %c0_224 = arith.constant 0 : index
    %262 = vector.load %arg3[%c1_220, %c0_221, %c2_222, %c0_223, %c0_224] : memref<2x4x4x32x8xf32, #tpu.memory_space<vmem>>, vector<1x1x1x32x8xf32>
    %263 = vector.shape_cast %262 : vector<1x1x1x32x8xf32> to vector<32x8xf32>
    %cst_225 = arith.constant dense<0.000000e+00> : vector<16x8xf32>
    %264 = tpu.matmul %238, %263, %cst_225 {dimension_numbers = #tpu.dot_dimension_numbers<[1], [0], [0], [1], [0, 0, 1, 1], [], []>} : vector<16x32xf32>, vector<32x8xf32>, vector<16x8xf32> -> vector<16x8xf32>
    %c1_226 = arith.constant 1 : index
    %c2_227 = arith.constant 2 : index
    %c0_228 = arith.constant 0 : index
    %c0_229 = arith.constant 0 : index
    %c0_230 = arith.constant 0 : index
    %265 = vector.load %arg4[%c1_226, %c2_227, %c0_228, %c0_229, %c0_230] : memref<2x3x4x1x8xf32, #tpu.memory_space<vmem>>, vector<1x1x1x1x8xf32>
    %266 = vector.shape_cast %265 : vector<1x1x1x1x8xf32> to vector<1x8xf32>
    %267 = vector.broadcast %266 : vector<1x8xf32> to vector<16x8xf32>
    %268 = arith.addf %264, %267 : vector<16x8xf32>
    %269 = vector.shape_cast %254 : vector<16x8xf32> to vector<2x8x8xf32>
    %270 = vector.shape_cast %261 : vector<16x8xf32> to vector<2x8x8xf32>
    %271 = vector.shape_cast %268 : vector<16x8xf32> to vector<2x8x8xf32>
    "tpu.trace_start"() <{level = 10 : i32, message = "bqd,bkd->bqk"}> : () -> ()
    %cst_231 = arith.constant dense<0.000000e+00> : vector<2x8x8xf32>
    %272 = tpu.matmul %269, %270, %cst_231 {dimension_numbers = #tpu.dot_dimension_numbers<[2], [2], [1], [1], [0, 0, 0, 1, 1, 1], [0], [0]>} : vector<2x8x8xf32>, vector<2x8x8xf32>, vector<2x8x8xf32> -> vector<2x8x8xf32>
    "tpu.trace_stop"() : () -> ()
    %cst_232 = arith.constant dense<0xFF800000> : vector<2x8xf32>
    %273 = vector.multi_reduction <maximumf>, %272, %cst_232 [2] : vector<2x8x8xf32> to vector<2x8xf32>
    %274 = vector.shape_cast %273 : vector<2x8xf32> to vector<2x8x1xf32>
    %275 = vector.broadcast %274 : vector<2x8x1xf32> to vector<2x8x8xf32>
    %276 = arith.subf %272, %275 : vector<2x8x8xf32>
    %277 = math.exp %276 : vector<2x8x8xf32>
    %cst_233 = arith.constant dense<0.000000e+00> : vector<2x8xf32>
    %278 = vector.multi_reduction <add>, %277, %cst_233 [2] : vector<2x8x8xf32> to vector<2x8xf32>
    %279 = vector.shape_cast %278 : vector<2x8xf32> to vector<2x8x1xf32>
    %280 = tpu.reciprocal %279 {approx = true} : vector<2x8x1xf32> -> vector<2x8x1xf32>
    %281 = vector.broadcast %280 : vector<2x8x1xf32> to vector<2x8x8xf32>
    %282 = arith.mulf %277, %281 : vector<2x8x8xf32>
    "tpu.trace_start"() <{level = 10 : i32, message = "bqk,bkd->bqd"}> : () -> ()
    %cst_234 = arith.constant dense<0.000000e+00> : vector<2x8x8xf32>
    %283 = tpu.matmul %282, %271, %cst_234 {dimension_numbers = #tpu.dot_dimension_numbers<[2], [1], [1], [2], [0, 0, 0, 1, 1, 2], [0], [0]>} : vector<2x8x8xf32>, vector<2x8x8xf32>, vector<2x8x8xf32> -> vector<2x8x8xf32>
    "tpu.trace_stop"() : () -> ()
    %284 = vector.shape_cast %283 : vector<2x8x8xf32> to vector<16x8xf32>
    %c1_235 = arith.constant 1 : index
    %c0_236 = arith.constant 0 : index
    %c3_237 = arith.constant 3 : index
    %c0_238 = arith.constant 0 : index
    %c0_239 = arith.constant 0 : index
    %285 = vector.load %arg3[%c1_235, %c0_236, %c3_237, %c0_238, %c0_239] : memref<2x4x4x32x8xf32, #tpu.memory_space<vmem>>, vector<1x1x1x32x8xf32>
    %286 = vector.shape_cast %285 : vector<1x1x1x32x8xf32> to vector<32x8xf32>
    %cst_240 = arith.constant dense<0.000000e+00> : vector<16x32xf32>
    %287 = tpu.matmul %284, %286, %cst_240 {dimension_numbers = #tpu.dot_dimension_numbers<[1], [1], [0], [0], [0, 0, 1, 0], [], []>} : vector<16x8xf32>, vector<32x8xf32>, vector<16x32xf32> -> vector<16x32xf32>
    %c1_241 = arith.constant 1 : index
    %c1_242 = arith.constant 1 : index
    %c0_243 = arith.constant 0 : index
    %c0_244 = arith.constant 0 : index
    %c0_245 = arith.constant 0 : index
    %288 = vector.load %arg3[%c1_241, %c1_242, %c0_243, %c0_244, %c0_245] : memref<2x4x4x32x8xf32, #tpu.memory_space<vmem>>, vector<1x1x1x32x8xf32>
    %289 = vector.shape_cast %288 : vector<1x1x1x32x8xf32> to vector<32x8xf32>
    %cst_246 = arith.constant dense<0.000000e+00> : vector<16x8xf32>
    %290 = tpu.matmul %238, %289, %cst_246 {dimension_numbers = #tpu.dot_dimension_numbers<[1], [0], [0], [1], [0, 0, 1, 1], [], []>} : vector<16x32xf32>, vector<32x8xf32>, vector<16x8xf32> -> vector<16x8xf32>
    %c1_247 = arith.constant 1 : index
    %c0_248 = arith.constant 0 : index
    %c1_249 = arith.constant 1 : index
    %c0_250 = arith.constant 0 : index
    %c0_251 = arith.constant 0 : index
    %291 = vector.load %arg4[%c1_247, %c0_248, %c1_249, %c0_250, %c0_251] : memref<2x3x4x1x8xf32, #tpu.memory_space<vmem>>, vector<1x1x1x1x8xf32>
    %292 = vector.shape_cast %291 : vector<1x1x1x1x8xf32> to vector<1x8xf32>
    %293 = vector.broadcast %292 : vector<1x8xf32> to vector<16x8xf32>
    %294 = arith.addf %290, %293 : vector<16x8xf32>
    %c1_252 = arith.constant 1 : index
    %c1_253 = arith.constant 1 : index
    %c1_254 = arith.constant 1 : index
    %c0_255 = arith.constant 0 : index
    %c0_256 = arith.constant 0 : index
    %295 = vector.load %arg3[%c1_252, %c1_253, %c1_254, %c0_255, %c0_256] : memref<2x4x4x32x8xf32, #tpu.memory_space<vmem>>, vector<1x1x1x32x8xf32>
    %296 = vector.shape_cast %295 : vector<1x1x1x32x8xf32> to vector<32x8xf32>
    %cst_257 = arith.constant dense<0.000000e+00> : vector<16x8xf32>
    %297 = tpu.matmul %238, %296, %cst_257 {dimension_numbers = #tpu.dot_dimension_numbers<[1], [0], [0], [1], [0, 0, 1, 1], [], []>} : vector<16x32xf32>, vector<32x8xf32>, vector<16x8xf32> -> vector<16x8xf32>
    %c1_258 = arith.constant 1 : index
    %c1_259 = arith.constant 1 : index
    %c1_260 = arith.constant 1 : index
    %c0_261 = arith.constant 0 : index
    %c0_262 = arith.constant 0 : index
    %298 = vector.load %arg4[%c1_258, %c1_259, %c1_260, %c0_261, %c0_262] : memref<2x3x4x1x8xf32, #tpu.memory_space<vmem>>, vector<1x1x1x1x8xf32>
    %299 = vector.shape_cast %298 : vector<1x1x1x1x8xf32> to vector<1x8xf32>
    %300 = vector.broadcast %299 : vector<1x8xf32> to vector<16x8xf32>
    %301 = arith.addf %297, %300 : vector<16x8xf32>
    %c1_263 = arith.constant 1 : index
    %c1_264 = arith.constant 1 : index
    %c2_265 = arith.constant 2 : index
    %c0_266 = arith.constant 0 : index
    %c0_267 = arith.constant 0 : index
    %302 = vector.load %arg3[%c1_263, %c1_264, %c2_265, %c0_266, %c0_267] : memref<2x4x4x32x8xf32, #tpu.memory_space<vmem>>, vector<1x1x1x32x8xf32>
    %303 = vector.shape_cast %302 : vector<1x1x1x32x8xf32> to vector<32x8xf32>
    %cst_268 = arith.constant dense<0.000000e+00> : vector<16x8xf32>
    %304 = tpu.matmul %238, %303, %cst_268 {dimension_numbers = #tpu.dot_dimension_numbers<[1], [0], [0], [1], [0, 0, 1, 1], [], []>} : vector<16x32xf32>, vector<32x8xf32>, vector<16x8xf32> -> vector<16x8xf32>
    %c1_269 = arith.constant 1 : index
    %c2_270 = arith.constant 2 : index
    %c1_271 = arith.constant 1 : index
    %c0_272 = arith.constant 0 : index
    %c0_273 = arith.constant 0 : index
    %305 = vector.load %arg4[%c1_269, %c2_270, %c1_271, %c0_272, %c0_273] : memref<2x3x4x1x8xf32, #tpu.memory_space<vmem>>, vector<1x1x1x1x8xf32>
    %306 = vector.shape_cast %305 : vector<1x1x1x1x8xf32> to vector<1x8xf32>
    %307 = vector.broadcast %306 : vector<1x8xf32> to vector<16x8xf32>
    %308 = arith.addf %304, %307 : vector<16x8xf32>
    %309 = vector.shape_cast %294 : vector<16x8xf32> to vector<2x8x8xf32>
    %310 = vector.shape_cast %301 : vector<16x8xf32> to vector<2x8x8xf32>
    %311 = vector.shape_cast %308 : vector<16x8xf32> to vector<2x8x8xf32>
    "tpu.trace_start"() <{level = 10 : i32, message = "bqd,bkd->bqk"}> : () -> ()
    %cst_274 = arith.constant dense<0.000000e+00> : vector<2x8x8xf32>
    %312 = tpu.matmul %309, %310, %cst_274 {dimension_numbers = #tpu.dot_dimension_numbers<[2], [2], [1], [1], [0, 0, 0, 1, 1, 1], [0], [0]>} : vector<2x8x8xf32>, vector<2x8x8xf32>, vector<2x8x8xf32> -> vector<2x8x8xf32>
    "tpu.trace_stop"() : () -> ()
    %cst_275 = arith.constant dense<0xFF800000> : vector<2x8xf32>
    %313 = vector.multi_reduction <maximumf>, %312, %cst_275 [2] : vector<2x8x8xf32> to vector<2x8xf32>
    %314 = vector.shape_cast %313 : vector<2x8xf32> to vector<2x8x1xf32>
    %315 = vector.broadcast %314 : vector<2x8x1xf32> to vector<2x8x8xf32>
    %316 = arith.subf %312, %315 : vector<2x8x8xf32>
    %317 = math.exp %316 : vector<2x8x8xf32>
    %cst_276 = arith.constant dense<0.000000e+00> : vector<2x8xf32>
    %318 = vector.multi_reduction <add>, %317, %cst_276 [2] : vector<2x8x8xf32> to vector<2x8xf32>
    %319 = vector.shape_cast %318 : vector<2x8xf32> to vector<2x8x1xf32>
    %320 = tpu.reciprocal %319 {approx = true} : vector<2x8x1xf32> -> vector<2x8x1xf32>
    %321 = vector.broadcast %320 : vector<2x8x1xf32> to vector<2x8x8xf32>
    %322 = arith.mulf %317, %321 : vector<2x8x8xf32>
    "tpu.trace_start"() <{level = 10 : i32, message = "bqk,bkd->bqd"}> : () -> ()
    %cst_277 = arith.constant dense<0.000000e+00> : vector<2x8x8xf32>
    %323 = tpu.matmul %322, %311, %cst_277 {dimension_numbers = #tpu.dot_dimension_numbers<[2], [1], [1], [2], [0, 0, 0, 1, 1, 2], [0], [0]>} : vector<2x8x8xf32>, vector<2x8x8xf32>, vector<2x8x8xf32> -> vector<2x8x8xf32>
    "tpu.trace_stop"() : () -> ()
    %324 = vector.shape_cast %323 : vector<2x8x8xf32> to vector<16x8xf32>
    %c1_278 = arith.constant 1 : index
    %c1_279 = arith.constant 1 : index
    %c3_280 = arith.constant 3 : index
    %c0_281 = arith.constant 0 : index
    %c0_282 = arith.constant 0 : index
    %325 = vector.load %arg3[%c1_278, %c1_279, %c3_280, %c0_281, %c0_282] : memref<2x4x4x32x8xf32, #tpu.memory_space<vmem>>, vector<1x1x1x32x8xf32>
    %326 = vector.shape_cast %325 : vector<1x1x1x32x8xf32> to vector<32x8xf32>
    %cst_283 = arith.constant dense<0.000000e+00> : vector<16x32xf32>
    %327 = tpu.matmul %324, %326, %cst_283 {dimension_numbers = #tpu.dot_dimension_numbers<[1], [1], [0], [0], [0, 0, 1, 0], [], []>} : vector<16x8xf32>, vector<32x8xf32>, vector<16x32xf32> -> vector<16x32xf32>
    %328 = arith.addf %287, %327 : vector<16x32xf32>
    %c1_284 = arith.constant 1 : index
    %c2_285 = arith.constant 2 : index
    %c0_286 = arith.constant 0 : index
    %c0_287 = arith.constant 0 : index
    %c0_288 = arith.constant 0 : index
    %329 = vector.load %arg3[%c1_284, %c2_285, %c0_286, %c0_287, %c0_288] : memref<2x4x4x32x8xf32, #tpu.memory_space<vmem>>, vector<1x1x1x32x8xf32>
    %330 = vector.shape_cast %329 : vector<1x1x1x32x8xf32> to vector<32x8xf32>
    %cst_289 = arith.constant dense<0.000000e+00> : vector<16x8xf32>
    %331 = tpu.matmul %238, %330, %cst_289 {dimension_numbers = #tpu.dot_dimension_numbers<[1], [0], [0], [1], [0, 0, 1, 1], [], []>} : vector<16x32xf32>, vector<32x8xf32>, vector<16x8xf32> -> vector<16x8xf32>
    %c1_290 = arith.constant 1 : index
    %c0_291 = arith.constant 0 : index
    %c2_292 = arith.constant 2 : index
    %c0_293 = arith.constant 0 : index
    %c0_294 = arith.constant 0 : index
    %332 = vector.load %arg4[%c1_290, %c0_291, %c2_292, %c0_293, %c0_294] : memref<2x3x4x1x8xf32, #tpu.memory_space<vmem>>, vector<1x1x1x1x8xf32>
    %333 = vector.shape_cast %332 : vector<1x1x1x1x8xf32> to vector<1x8xf32>
    %334 = vector.broadcast %333 : vector<1x8xf32> to vector<16x8xf32>
    %335 = arith.addf %331, %334 : vector<16x8xf32>
    %c1_295 = arith.constant 1 : index
    %c2_296 = arith.constant 2 : index
    %c1_297 = arith.constant 1 : index
    %c0_298 = arith.constant 0 : index
    %c0_299 = arith.constant 0 : index
    %336 = vector.load %arg3[%c1_295, %c2_296, %c1_297, %c0_298, %c0_299] : memref<2x4x4x32x8xf32, #tpu.memory_space<vmem>>, vector<1x1x1x32x8xf32>
    %337 = vector.shape_cast %336 : vector<1x1x1x32x8xf32> to vector<32x8xf32>
    %cst_300 = arith.constant dense<0.000000e+00> : vector<16x8xf32>
    %338 = tpu.matmul %238, %337, %cst_300 {dimension_numbers = #tpu.dot_dimension_numbers<[1], [0], [0], [1], [0, 0, 1, 1], [], []>} : vector<16x32xf32>, vector<32x8xf32>, vector<16x8xf32> -> vector<16x8xf32>
    %c1_301 = arith.constant 1 : index
    %c1_302 = arith.constant 1 : index
    %c2_303 = arith.constant 2 : index
    %c0_304 = arith.constant 0 : index
    %c0_305 = arith.constant 0 : index
    %339 = vector.load %arg4[%c1_301, %c1_302, %c2_303, %c0_304, %c0_305] : memref<2x3x4x1x8xf32, #tpu.memory_space<vmem>>, vector<1x1x1x1x8xf32>
    %340 = vector.shape_cast %339 : vector<1x1x1x1x8xf32> to vector<1x8xf32>
    %341 = vector.broadcast %340 : vector<1x8xf32> to vector<16x8xf32>
    %342 = arith.addf %338, %341 : vector<16x8xf32>
    %c1_306 = arith.constant 1 : index
    %c2_307 = arith.constant 2 : index
    %c2_308 = arith.constant 2 : index
    %c0_309 = arith.constant 0 : index
    %c0_310 = arith.constant 0 : index
    %343 = vector.load %arg3[%c1_306, %c2_307, %c2_308, %c0_309, %c0_310] : memref<2x4x4x32x8xf32, #tpu.memory_space<vmem>>, vector<1x1x1x32x8xf32>
    %344 = vector.shape_cast %343 : vector<1x1x1x32x8xf32> to vector<32x8xf32>
    %cst_311 = arith.constant dense<0.000000e+00> : vector<16x8xf32>
    %345 = tpu.matmul %238, %344, %cst_311 {dimension_numbers = #tpu.dot_dimension_numbers<[1], [0], [0], [1], [0, 0, 1, 1], [], []>} : vector<16x32xf32>, vector<32x8xf32>, vector<16x8xf32> -> vector<16x8xf32>
    %c1_312 = arith.constant 1 : index
    %c2_313 = arith.constant 2 : index
    %c2_314 = arith.constant 2 : index
    %c0_315 = arith.constant 0 : index
    %c0_316 = arith.constant 0 : index
    %346 = vector.load %arg4[%c1_312, %c2_313, %c2_314, %c0_315, %c0_316] : memref<2x3x4x1x8xf32, #tpu.memory_space<vmem>>, vector<1x1x1x1x8xf32>
    %347 = vector.shape_cast %346 : vector<1x1x1x1x8xf32> to vector<1x8xf32>
    %348 = vector.broadcast %347 : vector<1x8xf32> to vector<16x8xf32>
    %349 = arith.addf %345, %348 : vector<16x8xf32>
    %350 = vector.shape_cast %335 : vector<16x8xf32> to vector<2x8x8xf32>
    %351 = vector.shape_cast %342 : vector<16x8xf32> to vector<2x8x8xf32>
    %352 = vector.shape_cast %349 : vector<16x8xf32> to vector<2x8x8xf32>
    "tpu.trace_start"() <{level = 10 : i32, message = "bqd,bkd->bqk"}> : () -> ()
    %cst_317 = arith.constant dense<0.000000e+00> : vector<2x8x8xf32>
    %353 = tpu.matmul %350, %351, %cst_317 {dimension_numbers = #tpu.dot_dimension_numbers<[2], [2], [1], [1], [0, 0, 0, 1, 1, 1], [0], [0]>} : vector<2x8x8xf32>, vector<2x8x8xf32>, vector<2x8x8xf32> -> vector<2x8x8xf32>
    "tpu.trace_stop"() : () -> ()
    %cst_318 = arith.constant dense<0xFF800000> : vector<2x8xf32>
    %354 = vector.multi_reduction <maximumf>, %353, %cst_318 [2] : vector<2x8x8xf32> to vector<2x8xf32>
    %355 = vector.shape_cast %354 : vector<2x8xf32> to vector<2x8x1xf32>
    %356 = vector.broadcast %355 : vector<2x8x1xf32> to vector<2x8x8xf32>
    %357 = arith.subf %353, %356 : vector<2x8x8xf32>
    %358 = math.exp %357 : vector<2x8x8xf32>
    %cst_319 = arith.constant dense<0.000000e+00> : vector<2x8xf32>
    %359 = vector.multi_reduction <add>, %358, %cst_319 [2] : vector<2x8x8xf32> to vector<2x8xf32>
    %360 = vector.shape_cast %359 : vector<2x8xf32> to vector<2x8x1xf32>
    %361 = tpu.reciprocal %360 {approx = true} : vector<2x8x1xf32> -> vector<2x8x1xf32>
    %362 = vector.broadcast %361 : vector<2x8x1xf32> to vector<2x8x8xf32>
    %363 = arith.mulf %358, %362 : vector<2x8x8xf32>
    "tpu.trace_start"() <{level = 10 : i32, message = "bqk,bkd->bqd"}> : () -> ()
    %cst_320 = arith.constant dense<0.000000e+00> : vector<2x8x8xf32>
    %364 = tpu.matmul %363, %352, %cst_320 {dimension_numbers = #tpu.dot_dimension_numbers<[2], [1], [1], [2], [0, 0, 0, 1, 1, 2], [0], [0]>} : vector<2x8x8xf32>, vector<2x8x8xf32>, vector<2x8x8xf32> -> vector<2x8x8xf32>
    "tpu.trace_stop"() : () -> ()
    %365 = vector.shape_cast %364 : vector<2x8x8xf32> to vector<16x8xf32>
    %c1_321 = arith.constant 1 : index
    %c2_322 = arith.constant 2 : index
    %c3_323 = arith.constant 3 : index
    %c0_324 = arith.constant 0 : index
    %c0_325 = arith.constant 0 : index
    %366 = vector.load %arg3[%c1_321, %c2_322, %c3_323, %c0_324, %c0_325] : memref<2x4x4x32x8xf32, #tpu.memory_space<vmem>>, vector<1x1x1x32x8xf32>
    %367 = vector.shape_cast %366 : vector<1x1x1x32x8xf32> to vector<32x8xf32>
    %cst_326 = arith.constant dense<0.000000e+00> : vector<16x32xf32>
    %368 = tpu.matmul %365, %367, %cst_326 {dimension_numbers = #tpu.dot_dimension_numbers<[1], [1], [0], [0], [0, 0, 1, 0], [], []>} : vector<16x8xf32>, vector<32x8xf32>, vector<16x32xf32> -> vector<16x32xf32>
    %369 = arith.addf %328, %368 : vector<16x32xf32>
    %c1_327 = arith.constant 1 : index
    %c3_328 = arith.constant 3 : index
    %c0_329 = arith.constant 0 : index
    %c0_330 = arith.constant 0 : index
    %c0_331 = arith.constant 0 : index
    %370 = vector.load %arg3[%c1_327, %c3_328, %c0_329, %c0_330, %c0_331] : memref<2x4x4x32x8xf32, #tpu.memory_space<vmem>>, vector<1x1x1x32x8xf32>
    %371 = vector.shape_cast %370 : vector<1x1x1x32x8xf32> to vector<32x8xf32>
    %cst_332 = arith.constant dense<0.000000e+00> : vector<16x8xf32>
    %372 = tpu.matmul %238, %371, %cst_332 {dimension_numbers = #tpu.dot_dimension_numbers<[1], [0], [0], [1], [0, 0, 1, 1], [], []>} : vector<16x32xf32>, vector<32x8xf32>, vector<16x8xf32> -> vector<16x8xf32>
    %c1_333 = arith.constant 1 : index
    %c0_334 = arith.constant 0 : index
    %c3_335 = arith.constant 3 : index
    %c0_336 = arith.constant 0 : index
    %c0_337 = arith.constant 0 : index
    %373 = vector.load %arg4[%c1_333, %c0_334, %c3_335, %c0_336, %c0_337] : memref<2x3x4x1x8xf32, #tpu.memory_space<vmem>>, vector<1x1x1x1x8xf32>
    %374 = vector.shape_cast %373 : vector<1x1x1x1x8xf32> to vector<1x8xf32>
    %375 = vector.broadcast %374 : vector<1x8xf32> to vector<16x8xf32>
    %376 = arith.addf %372, %375 : vector<16x8xf32>
    %c1_338 = arith.constant 1 : index
    %c3_339 = arith.constant 3 : index
    %c1_340 = arith.constant 1 : index
    %c0_341 = arith.constant 0 : index
    %c0_342 = arith.constant 0 : index
    %377 = vector.load %arg3[%c1_338, %c3_339, %c1_340, %c0_341, %c0_342] : memref<2x4x4x32x8xf32, #tpu.memory_space<vmem>>, vector<1x1x1x32x8xf32>
    %378 = vector.shape_cast %377 : vector<1x1x1x32x8xf32> to vector<32x8xf32>
    %cst_343 = arith.constant dense<0.000000e+00> : vector<16x8xf32>
    %379 = tpu.matmul %238, %378, %cst_343 {dimension_numbers = #tpu.dot_dimension_numbers<[1], [0], [0], [1], [0, 0, 1, 1], [], []>} : vector<16x32xf32>, vector<32x8xf32>, vector<16x8xf32> -> vector<16x8xf32>
    %c1_344 = arith.constant 1 : index
    %c1_345 = arith.constant 1 : index
    %c3_346 = arith.constant 3 : index
    %c0_347 = arith.constant 0 : index
    %c0_348 = arith.constant 0 : index
    %380 = vector.load %arg4[%c1_344, %c1_345, %c3_346, %c0_347, %c0_348] : memref<2x3x4x1x8xf32, #tpu.memory_space<vmem>>, vector<1x1x1x1x8xf32>
    %381 = vector.shape_cast %380 : vector<1x1x1x1x8xf32> to vector<1x8xf32>
    %382 = vector.broadcast %381 : vector<1x8xf32> to vector<16x8xf32>
    %383 = arith.addf %379, %382 : vector<16x8xf32>
    %c1_349 = arith.constant 1 : index
    %c3_350 = arith.constant 3 : index
    %c2_351 = arith.constant 2 : index
    %c0_352 = arith.constant 0 : index
    %c0_353 = arith.constant 0 : index
    %384 = vector.load %arg3[%c1_349, %c3_350, %c2_351, %c0_352, %c0_353] : memref<2x4x4x32x8xf32, #tpu.memory_space<vmem>>, vector<1x1x1x32x8xf32>
    %385 = vector.shape_cast %384 : vector<1x1x1x32x8xf32> to vector<32x8xf32>
    %cst_354 = arith.constant dense<0.000000e+00> : vector<16x8xf32>
    %386 = tpu.matmul %238, %385, %cst_354 {dimension_numbers = #tpu.dot_dimension_numbers<[1], [0], [0], [1], [0, 0, 1, 1], [], []>} : vector<16x32xf32>, vector<32x8xf32>, vector<16x8xf32> -> vector<16x8xf32>
    %c1_355 = arith.constant 1 : index
    %c2_356 = arith.constant 2 : index
    %c3_357 = arith.constant 3 : index
    %c0_358 = arith.constant 0 : index
    %c0_359 = arith.constant 0 : index
    %387 = vector.load %arg4[%c1_355, %c2_356, %c3_357, %c0_358, %c0_359] : memref<2x3x4x1x8xf32, #tpu.memory_space<vmem>>, vector<1x1x1x1x8xf32>
    %388 = vector.shape_cast %387 : vector<1x1x1x1x8xf32> to vector<1x8xf32>
    %389 = vector.broadcast %388 : vector<1x8xf32> to vector<16x8xf32>
    %390 = arith.addf %386, %389 : vector<16x8xf32>
    %391 = vector.shape_cast %376 : vector<16x8xf32> to vector<2x8x8xf32>
    %392 = vector.shape_cast %383 : vector<16x8xf32> to vector<2x8x8xf32>
    %393 = vector.shape_cast %390 : vector<16x8xf32> to vector<2x8x8xf32>
    "tpu.trace_start"() <{level = 10 : i32, message = "bqd,bkd->bqk"}> : () -> ()
    %cst_360 = arith.constant dense<0.000000e+00> : vector<2x8x8xf32>
    %394 = tpu.matmul %391, %392, %cst_360 {dimension_numbers = #tpu.dot_dimension_numbers<[2], [2], [1], [1], [0, 0, 0, 1, 1, 1], [0], [0]>} : vector<2x8x8xf32>, vector<2x8x8xf32>, vector<2x8x8xf32> -> vector<2x8x8xf32>
    "tpu.trace_stop"() : () -> ()
    %cst_361 = arith.constant dense<0xFF800000> : vector<2x8xf32>
    %395 = vector.multi_reduction <maximumf>, %394, %cst_361 [2] : vector<2x8x8xf32> to vector<2x8xf32>
    %396 = vector.shape_cast %395 : vector<2x8xf32> to vector<2x8x1xf32>
    %397 = vector.broadcast %396 : vector<2x8x1xf32> to vector<2x8x8xf32>
    %398 = arith.subf %394, %397 : vector<2x8x8xf32>
    %399 = math.exp %398 : vector<2x8x8xf32>
    %cst_362 = arith.constant dense<0.000000e+00> : vector<2x8xf32>
    %400 = vector.multi_reduction <add>, %399, %cst_362 [2] : vector<2x8x8xf32> to vector<2x8xf32>
    %401 = vector.shape_cast %400 : vector<2x8xf32> to vector<2x8x1xf32>
    %402 = tpu.reciprocal %401 {approx = true} : vector<2x8x1xf32> -> vector<2x8x1xf32>
    %403 = vector.broadcast %402 : vector<2x8x1xf32> to vector<2x8x8xf32>
    %404 = arith.mulf %399, %403 : vector<2x8x8xf32>
    "tpu.trace_start"() <{level = 10 : i32, message = "bqk,bkd->bqd"}> : () -> ()
    %cst_363 = arith.constant dense<0.000000e+00> : vector<2x8x8xf32>
    %405 = tpu.matmul %404, %393, %cst_363 {dimension_numbers = #tpu.dot_dimension_numbers<[2], [1], [1], [2], [0, 0, 0, 1, 1, 2], [0], [0]>} : vector<2x8x8xf32>, vector<2x8x8xf32>, vector<2x8x8xf32> -> vector<2x8x8xf32>
    "tpu.trace_stop"() : () -> ()
    %406 = vector.shape_cast %405 : vector<2x8x8xf32> to vector<16x8xf32>
    %c1_364 = arith.constant 1 : index
    %c3_365 = arith.constant 3 : index
    %c3_366 = arith.constant 3 : index
    %c0_367 = arith.constant 0 : index
    %c0_368 = arith.constant 0 : index
    %407 = vector.load %arg3[%c1_364, %c3_365, %c3_366, %c0_367, %c0_368] : memref<2x4x4x32x8xf32, #tpu.memory_space<vmem>>, vector<1x1x1x32x8xf32>
    %408 = vector.shape_cast %407 : vector<1x1x1x32x8xf32> to vector<32x8xf32>
    %cst_369 = arith.constant dense<0.000000e+00> : vector<16x32xf32>
    %409 = tpu.matmul %406, %408, %cst_369 {dimension_numbers = #tpu.dot_dimension_numbers<[1], [1], [0], [0], [0, 0, 1, 0], [], []>} : vector<16x8xf32>, vector<32x8xf32>, vector<16x32xf32> -> vector<16x32xf32>
    %410 = arith.addf %369, %409 : vector<16x32xf32>
    %411 = vector.broadcast %242 : vector<1x32xf32> to vector<16x32xf32>
    %412 = arith.addf %410, %411 : vector<16x32xf32>
    %413 = arith.addf %238, %412 : vector<16x32xf32>
    %cst_370 = arith.constant dense<0.000000e+00> : vector<16xf32>
    %414 = vector.multi_reduction <add>, %413, %cst_370 [1] : vector<16x32xf32> to vector<16xf32>
    %415 = vector.shape_cast %414 : vector<16xf32> to vector<16x1xf32>
    %cst_371 = arith.constant 3.200000e+01 : f32
    %416 = vector.broadcast %cst_371 : f32 to vector<16x1xf32>
    %417 = arith.divf %415, %416 : vector<16x1xf32>
    %418 = vector.broadcast %417 : vector<16x1xf32> to vector<16x32xf32>
    %419 = arith.subf %413, %418 : vector<16x32xf32>
    %420 = arith.mulf %419, %419 : vector<16x32xf32>
    %cst_372 = arith.constant dense<0.000000e+00> : vector<16xf32>
    %421 = vector.multi_reduction <add>, %420, %cst_372 [1] : vector<16x32xf32> to vector<16xf32>
    %422 = vector.shape_cast %421 : vector<16xf32> to vector<16x1xf32>
    %cst_373 = arith.constant 3.200000e+01 : f32
    %423 = vector.broadcast %cst_373 : f32 to vector<16x1xf32>
    %424 = arith.divf %422, %423 : vector<16x1xf32>
    %425 = vector.broadcast %417 : vector<16x1xf32> to vector<16x32xf32>
    %426 = arith.subf %413, %425 : vector<16x32xf32>
    %cst_374 = arith.constant 9.99999974E-6 : f32
    %427 = vector.broadcast %cst_374 : f32 to vector<16x1xf32>
    %428 = arith.addf %424, %427 : vector<16x1xf32>
    %429 = math.rsqrt %428 : vector<16x1xf32>
    %430 = vector.broadcast %429 : vector<16x1xf32> to vector<16x32xf32>
    %431 = arith.mulf %426, %430 : vector<16x32xf32>
    %432 = vector.broadcast %244 : vector<1x32xf32> to vector<16x32xf32>
    %433 = arith.mulf %431, %432 : vector<16x32xf32>
    %434 = vector.broadcast %245 : vector<1x32xf32> to vector<16x32xf32>
    %435 = arith.addf %433, %434 : vector<16x32xf32>
    %c1_375 = arith.constant 1 : index
    %c0_376 = arith.constant 0 : index
    %c0_377 = arith.constant 0 : index
    %c0_378 = arith.constant 0 : index
    %436 = vector.load %arg5[%c1_375, %c0_376, %c0_377, %c0_378] : memref<2x2x64x32xf32, #tpu.memory_space<vmem>>, vector<1x1x64x32xf32>
    %437 = vector.shape_cast %436 : vector<1x1x64x32xf32> to vector<64x32xf32>
    %cst_379 = arith.constant dense<0.000000e+00> : vector<16x64xf32>
    %438 = tpu.matmul %435, %437, %cst_379 {dimension_numbers = #tpu.dot_dimension_numbers<[1], [1], [0], [0], [0, 0, 1, 0], [], []>} : vector<16x32xf32>, vector<64x32xf32>, vector<16x64xf32> -> vector<16x64xf32>
    %439 = vector.broadcast %241 : vector<1x64xf32> to vector<16x64xf32>
    %440 = arith.addf %438, %439 : vector<16x64xf32>
    %cst_380 = arith.constant 0.000000e+00 : f32
    %441 = vector.broadcast %cst_380 : f32 to vector<16x64xf32>
    %442 = arith.maximumf %440, %441 : vector<16x64xf32>
    %c1_381 = arith.constant 1 : index
    %c1_382 = arith.constant 1 : index
    %c0_383 = arith.constant 0 : index
    %c0_384 = arith.constant 0 : index
    %443 = vector.load %arg5[%c1_381, %c1_382, %c0_383, %c0_384] : memref<2x2x64x32xf32, #tpu.memory_space<vmem>>, vector<1x1x64x32xf32>
    %444 = vector.shape_cast %443 : vector<1x1x64x32xf32> to vector<64x32xf32>
    %cst_385 = arith.constant dense<0.000000e+00> : vector<16x32xf32>
    %445 = tpu.matmul %442, %444, %cst_385 {dimension_numbers = #tpu.dot_dimension_numbers<[1], [0], [0], [1], [0, 0, 1, 1], [], []>} : vector<16x64xf32>, vector<64x32xf32>, vector<16x32xf32> -> vector<16x32xf32>
    %446 = vector.broadcast %243 : vector<1x32xf32> to vector<16x32xf32>
    %447 = arith.addf %445, %446 : vector<16x32xf32>
    %448 = arith.addf %435, %447 : vector<16x32xf32>
    %cst_386 = arith.constant dense<0.000000e+00> : vector<16xf32>
    %449 = vector.multi_reduction <add>, %448, %cst_386 [1] : vector<16x32xf32> to vector<16xf32>
    %450 = vector.shape_cast %449 : vector<16xf32> to vector<16x1xf32>
    %cst_387 = arith.constant 3.200000e+01 : f32
    %451 = vector.broadcast %cst_387 : f32 to vector<16x1xf32>
    %452 = arith.divf %450, %451 : vector<16x1xf32>
    %453 = vector.broadcast %452 : vector<16x1xf32> to vector<16x32xf32>
    %454 = arith.subf %448, %453 : vector<16x32xf32>
    %455 = arith.mulf %454, %454 : vector<16x32xf32>
    %cst_388 = arith.constant dense<0.000000e+00> : vector<16xf32>
    %456 = vector.multi_reduction <add>, %455, %cst_388 [1] : vector<16x32xf32> to vector<16xf32>
    %457 = vector.shape_cast %456 : vector<16xf32> to vector<16x1xf32>
    %cst_389 = arith.constant 3.200000e+01 : f32
    %458 = vector.broadcast %cst_389 : f32 to vector<16x1xf32>
    %459 = arith.divf %457, %458 : vector<16x1xf32>
    %460 = vector.broadcast %452 : vector<16x1xf32> to vector<16x32xf32>
    %461 = arith.subf %448, %460 : vector<16x32xf32>
    %cst_390 = arith.constant 9.99999974E-6 : f32
    %462 = vector.broadcast %cst_390 : f32 to vector<16x1xf32>
    %463 = arith.addf %459, %462 : vector<16x1xf32>
    %464 = math.rsqrt %463 : vector<16x1xf32>
    %465 = vector.broadcast %464 : vector<16x1xf32> to vector<16x32xf32>
    %466 = arith.mulf %461, %465 : vector<16x32xf32>
    %467 = vector.broadcast %246 : vector<1x32xf32> to vector<16x32xf32>
    %468 = arith.mulf %466, %467 : vector<16x32xf32>
    %469 = vector.broadcast %247 : vector<1x32xf32> to vector<16x32xf32>
    %470 = arith.addf %468, %469 : vector<16x32xf32>
    %c0_391 = arith.constant 0 : index
    %c0_392 = arith.constant 0 : index
    %471 = vector.load %arg7[%c0_391, %c0_392] : memref<2x32xf32, #tpu.memory_space<vmem>>, vector<2x32xf32>
    %472 = vector.extract_strided_slice %471 {offsets = [0, 0], sizes = [1, 32], strides = [1, 1]} : vector<2x32xf32> to vector<1x32xf32>
    %473 = vector.broadcast %472 : vector<1x32xf32> to vector<16x32xf32>
    %474 = arith.mulf %470, %473 : vector<16x32xf32>
    %cst_393 = arith.constant dense<0.000000e+00> : vector<16xf32>
    %475 = vector.multi_reduction <add>, %474, %cst_393 [1] : vector<16x32xf32> to vector<16xf32>
    %476 = vector.shape_cast %475 : vector<16xf32> to vector<16x1xf32>
    %477 = vector.extract_strided_slice %471 {offsets = [1, 0], sizes = [1, 1], strides = [1, 1]} : vector<2x32xf32> to vector<1x1xf32>
    %478 = vector.broadcast %477 : vector<1x1xf32> to vector<16x1xf32>
    %479 = arith.addf %476, %478 : vector<16x1xf32>
    %c0_394 = arith.constant 0 : index
    %c0_395 = arith.constant 0 : index
    %480 = vector.load %arg2[%c0_394, %c0_395] : memref<16x2xf32, #tpu.memory_space<vmem>>, vector<16x2xf32>
    %481 = vector.extract_strided_slice %480 {offsets = [0, 0], sizes = [16, 1], strides = [1, 1]} : vector<16x2xf32> to vector<16x1xf32>
    %cst_396 = arith.constant 0.000000e+00 : f32
    %482 = vector.broadcast %cst_396 : f32 to vector<16x1xf32>
    %483 = arith.cmpf one, %481, %482 : vector<16x1xf32>
    %cst_397 = arith.constant -1.000000e+00 : f32
    %484 = vector.broadcast %cst_397 : f32 to vector<16x1xf32>
    %485 = arith.select %483, %484, %479 : vector<16x1xi1>, vector<16x1xf32>
    %486 = vector.extract_strided_slice %480 {offsets = [0, 1], sizes = [16, 1], strides = [1, 1]} : vector<16x2xf32> to vector<16x1xf32>
    %487 = arith.addf %485, %486 : vector<16x1xf32>
    %c0_398 = arith.constant 0 : index
    %c0_399 = arith.constant 0 : index
    %488 = vector.load %arg8[%c0_398, %c0_399] : memref<16x1xf32, #tpu.memory_space<vmem>>, vector<16x1xf32>
    tpu.vector_store %arg8[%c0_398, %c0_399], %487 {strides = array<i32>} : memref<16x1xf32, #tpu.memory_space<vmem>>, vector<16x1xf32>,
    return
  }
}

</mosaic_0001>

<llo_original>
// kernel: transformer_model_forward.1
$region0: #{transformer_model_forward.1}
  #allocation0 [shape = 'u32[]', space=smem, size = 0x4, offset = 0x4, fixed_abs, tag = 'smem constant byte address 0x4 - core index']
  #allocation1 [shape = 'u32[72,128]{1,0:T(1,128)}', space=vmem, size = 0x9000, scoped, tag = 'internal scratch']
  %s0 = inlined_call_operand.vmem [shape: f32[16,32], index: 0, kind: input, shape index: {}]
  %s1 = inlined_call_operand.vmem [shape: f32[8,32], index: 1, kind: input, shape index: {}]
  %s2 = inlined_call_operand.vmem [shape: f32[16,2], index: 2, kind: input, shape index: {}]
  %s3 = inlined_call_operand.vmem [shape: f32[2,4,4,32,8], index: 3, kind: input, shape index: {}]
  %s4 = inlined_call_operand.vmem [shape: f32[2,3,4,1,8], index: 4, kind: input, shape index: {}]
  %s5 = inlined_call_operand.vmem [shape: f32[2,2,64,32], index: 5, kind: input, shape index: {}]
  %s6 = inlined_call_operand.vmem [shape: f32[2,7,64], index: 6, kind: input, shape index: {}]
  %s7 = inlined_call_operand.vmem [shape: f32[2,32], index: 7, kind: input, shape index: {}]
  %s8 = inlined_call_operand.vmem [shape: f32[16,1], index: 8, kind: output, shape index: {}]
  %s9 = sld [smem:[#allocation0]]
  $region42: #{transformer_model_forward.1} parent=0
    _
  %s11 = ssub.s32 1, %s9
  %s12 = scalar_select 0, %s11, %s9
  // Predicated region
  $region2: #{transformer_model_forward.1} parent=0 // pred_check
    _
  $region3: #{transformer_model_forward.1} parent=0 // pred_check_branch
    %14 = sbr.rel (0) target = $region5
  $region4: #{transformer_model_forward.1} parent=0 // pred_region
    _
  $region5: #{transformer_model_forward.1} parent=0 // pred_fallthru
    _
  // Predicated region
  $region6: #{transformer_model_forward.1} parent=0 // pred_check
    _
  $region7: #{transformer_model_forward.1} parent=0 // pred_check_branch
    %16 = sbr.rel (0) target = $region9
  $region8: #{transformer_model_forward.1} parent=0 // pred_region
    _
  $region9: #{transformer_model_forward.1} parent=0 // pred_fallthru
    _
  // Predicated region
  $region10: #{transformer_model_forward.1} parent=0 // pred_check
    _
  $region11: #{transformer_model_forward.1} parent=0 // pred_check_branch
    %18 = sbr.rel (0) target = $region13
  $region12: #{transformer_model_forward.1} parent=0 // pred_region
    _
  $region13: #{transformer_model_forward.1} parent=0 // pred_fallthru
    _
  // Predicated region
  $region14: #{transformer_model_forward.1} parent=0 // pred_check
    _
  $region15: #{transformer_model_forward.1} parent=0 // pred_check_branch
    %20 = sbr.rel (0) target = $region17
  $region16: #{transformer_model_forward.1} parent=0 // pred_region
    _
  $region17: #{transformer_model_forward.1} parent=0 // pred_fallthru
    _
  // Predicated region
  $region18: #{transformer_model_forward.1} parent=0 // pred_check
    _
  $region19: #{transformer_model_forward.1} parent=0 // pred_check_branch
    %22 = sbr.rel (0) target = $region21
  $region20: #{transformer_model_forward.1} parent=0 // pred_region
    _
  $region21: #{transformer_model_forward.1} parent=0 // pred_fallthru
    _
  // Predicated region
  $region22: #{transformer_model_forward.1} parent=0 // pred_check
    _
  $region23: #{transformer_model_forward.1} parent=0 // pred_check_branch
    %24 = sbr.rel (0) target = $region25
  $region24: #{transformer_model_forward.1} parent=0 // pred_region
    _
  $region25: #{transformer_model_forward.1} parent=0 // pred_fallthru
    _
  // Predicated region
  $region26: #{transformer_model_forward.1} parent=0 // pred_check
    _
  $region27: #{transformer_model_forward.1} parent=0 // pred_check_branch
    %26 = sbr.rel (0) target = $region29
  $region28: #{transformer_model_forward.1} parent=0 // pred_region
    _
  $region29: #{transformer_model_forward.1} parent=0 // pred_fallthru
    _
  // Predicated region
  $region30: #{transformer_model_forward.1} parent=0 // pred_check
    _
  $region31: #{transformer_model_forward.1} parent=0 // pred_check_branch
    %28 = sbr.rel (0) target = $region33
  $region32: #{transformer_model_forward.1} parent=0 // pred_region
    _
  $region33: #{transformer_model_forward.1} parent=0 // pred_fallthru
    _
  %v29 = vld [vmem:[%s0] sm:$0xff]
  %v30 = vld [vmem:[%s0 + $0x8] sm:$0xff]
  %v31 = vld [vmem:[%s1] sm:$0xff]
  %v32 = vadd.f32 %v29, %v31
  %v33 = vadd.f32 %v30, %v31
  %v34 = vld [vmem:[%s6] sm:$0x7f]
  %v35 = vld [vmem:[%s3] sm:$0xff]
  %v36 = vld [vmem:[%s3 + $0x8] sm:$0xff]
  %v37 = vld [vmem:[%s3 + $0x10] sm:$0xff]
  %v38 = vld [vmem:[%s3 + $0x18] sm:$0xff]
  %v39 = vld [vmem:[%s4] sm:$0x1]
  %v41 = vperm.slane %v39, 0
  %vm43 = vcmask 261120
  %v45 = vsel %vm43, %v32, 0
  %v48 = vsel %vm43, %v33, 0
  %50 = vmatpush.msra.mxu0 0.0
  %51 = vmatpush.msra.mxu0 0.0
  %52 = vmatpush.msra.mxu0 0.0
  %53 = vmatpush.msra.mxu0 0.0
  %54 = vmatpush.msra.mxu0 0.0
  %55 = vmatpush.msra.mxu0 0.0
  %56 = vmatpush.msra.mxu0 0.0
  %57 = vmatpush.msra.mxu0 0.0
  %58 = vmatpush.msra.mxu0 0.0
  %59 = vmatpush.msra.mxu0 0.0
  %60 = vmatpush.msra.mxu0 0.0
  %61 = vmatpush.msra.mxu0 0.0
  %62 = vmatpush.msra.mxu0 %v38
  %63 = vmatpush.msra.mxu0 %v37
  %64 = vmatpush.msra.mxu0 %v36
  %65 = vmatpush.msra.mxu0 %v35
  %66 = vmatmul.f32.gmra.mxu0 %v45
  %v67 = vpop.f32.mrf.mxu0
  %v68 = vadd.f32 %v41, %v67
  %69 = vmatmul.f32.gmra.mxu0 %v48
  %v70 = vpop.f32.mrf.mxu0
  %v71 = vadd.f32 %v41, %v70
  %72 = vdwg.mxu0
  %s73 = scalar_lea.vmem %s3, 32
  %v74 = vld [vmem:[%s73] sm:$0xff]
  %v75 = vld [vmem:[%s73 + $0x8] sm:$0xff]
  %v76 = vld [vmem:[%s73 + $0x10] sm:$0xff]
  %v77 = vld [vmem:[%s73 + $0x18] sm:$0xff]
  %s78 = scalar_lea.vmem %s4, 4
  %v79 = vld [vmem:[%s78] sm:$0x1]
  %v81 = vperm.slane %v79, 0
  %83 = vmatpush.msra.mxu0 0.0
  %84 = vmatpush.msra.mxu0 0.0
  %85 = vmatpush.msra.mxu0 0.0
  %86 = vmatpush.msra.mxu0 0.0
  %87 = vmatpush.msra.mxu0 0.0
  %88 = vmatpush.msra.mxu0 0.0
  %89 = vmatpush.msra.mxu0 0.0
  %90 = vmatpush.msra.mxu0 0.0
  %91 = vmatpush.msra.mxu0 0.0
  %92 = vmatpush.msra.mxu0 0.0
  %93 = vmatpush.msra.mxu0 0.0
  %94 = vmatpush.msra.mxu0 0.0
  %95 = vmatpush.msra.mxu0 %v77
  %96 = vmatpush.msra.mxu0 %v76
  %97 = vmatpush.msra.mxu0 %v75
  %98 = vmatpush.msra.mxu0 %v74
  %99 = vmatmul.f32.gmra.mxu0 %v45
  %v100 = vpop.f32.mrf.mxu0
  %v101 = vadd.f32 %v81, %v100
  %102 = vmatmul.f32.gmra.mxu0 %v48
  %v103 = vpop.f32.mrf.mxu0
  %v104 = vadd.f32 %v81, %v103
  %105 = vdwg.mxu0
  %s106 = scalar_lea.vmem %s3, 64
  %v107 = vld [vmem:[%s106] sm:$0xff]
  %v108 = vld [vmem:[%s106 + $0x8] sm:$0xff]
  %v109 = vld [vmem:[%s106 + $0x10] sm:$0xff]
  %v110 = vld [vmem:[%s106 + $0x18] sm:$0xff]
  %s111 = scalar_lea.vmem %s4, 8
  %v112 = vld [vmem:[%s111] sm:$0x1]
  %v114 = vperm.slane %v112, 0
  %116 = vmatpush.msra.mxu0 0.0
  %117 = vmatpush.msra.mxu0 0.0
  %118 = vmatpush.msra.mxu0 0.0
  %119 = vmatpush.msra.mxu0 0.0
  %120 = vmatpush.msra.mxu0 0.0
  %121 = vmatpush.msra.mxu0 0.0
  %122 = vmatpush.msra.mxu0 0.0
  %123 = vmatpush.msra.mxu0 0.0
  %124 = vmatpush.msra.mxu0 0.0
  %125 = vmatpush.msra.mxu0 0.0
  %126 = vmatpush.msra.mxu0 0.0
  %127 = vmatpush.msra.mxu0 0.0
  %128 = vmatpush.msra.mxu0 %v110
  %129 = vmatpush.msra.mxu0 %v109
  %130 = vmatpush.msra.mxu0 %v108
  %131 = vmatpush.msra.mxu0 %v107
  %132 = vmatmul.f32.gmra.mxu0 %v45
  %v133 = vpop.f32.mrf.mxu0
  %v134 = vadd.f32 %v114, %v133
  %135 = vmatmul.f32.gmra.mxu0 %v48
  %v136 = vpop.f32.mrf.mxu0
  %v137 = vadd.f32 %v114, %v136
  %138 = vdwg.mxu0
  %vm139 = vcmask 64512
  %v141 = vsel %vm139, %v68, 0
  %v144 = vsel %vm139, %v101, 0
  %146 = vmatpush.xpose.msra.mxu0 0.0
  %147 = vmatpush.xpose.msra.mxu0 0.0
  %148 = vmatpush.xpose.msra.mxu0 0.0
  %149 = vmatpush.xpose.msra.mxu0 0.0
  %150 = vmatpush.xpose.msra.mxu0 0.0
  %151 = vmatpush.xpose.msra.mxu0 0.0
  %152 = vmatpush.xpose.msra.mxu0 0.0
  %153 = vmatpush.xpose.msra.mxu0 0.0
  %154 = vmatpush.xpose.msra.mxu0 0.0
  %155 = vmatpush.xpose.msra.mxu0 0.0
  %156 = vmatpush.xpose.msra.mxu0 0.0
  %157 = vmatpush.xpose.msra.mxu0 0.0
  %158 = vmatpush.xpose.msra.mxu0 0.0
  %159 = vmatpush.xpose.msra.mxu0 0.0
  %160 = vmatpush.xpose.msra.mxu0 0.0
  %161 = vmatpush.xpose.msra.mxu0 %v144
  %162 = vmatmul.f32.gmra.mxu0 %v141
  %v163 = vpop.f32.mrf.mxu0
  %v164 = vadd.f32 0.0, %v163
  %165 = vdwg.mxu0
  %v167 = vsel %vm139, %v71, 0
  %v170 = vsel %vm139, %v104, 0
  %172 = vmatpush.xpose.msra.mxu0 0.0
  %173 = vmatpush.xpose.msra.mxu0 0.0
  %174 = vmatpush.xpose.msra.mxu0 0.0
  %175 = vmatpush.xpose.msra.mxu0 0.0
  %176 = vmatpush.xpose.msra.mxu0 0.0
  %177 = vmatpush.xpose.msra.mxu0 0.0
  %178 = vmatpush.xpose.msra.mxu0 0.0
  %179 = vmatpush.xpose.msra.mxu0 0.0
  %180 = vmatpush.xpose.msra.mxu0 0.0
  %181 = vmatpush.xpose.msra.mxu0 0.0
  %182 = vmatpush.xpose.msra.mxu0 0.0
  %183 = vmatpush.xpose.msra.mxu0 0.0
  %184 = vmatpush.xpose.msra.mxu0 0.0
  %185 = vmatpush.xpose.msra.mxu0 0.0
  %186 = vmatpush.xpose.msra.mxu0 0.0
  %187 = vmatpush.xpose.msra.mxu0 %v170
  %188 = vmatmul.f32.gmra.mxu0 %v167
  %v189 = vpop.f32.mrf.mxu0
  %v190 = vadd.f32 0.0, %v189
  %191 = vdwg.mxu0
  %v192 = vsel %vm139, %v164, -inf
  %193 = vmax.xlane.f32.xlu0 %v192
  %v194 = vpop.xlane.xlu0 %193
  %v195 = vsel %vm139, %v190, -inf
  %196 = vmax.xlane.f32.xlu0 %v195
  %v197 = vpop.xlane.xlu0 %196
  %v198 = vsub.f32 %v164, %v194
  %v199 = vsub.f32 %v190, %v197
  %v200 = vmul.f32 %v198, 1.442695
  %v201 = vpow.pop %v200
  %v202 = vmul.f32 %v199, 1.442695
  %v203 = vpow.pop %v202
  %v204 = vsel %vm139, %v201, 0.0
  %205 = vadd.xlane.f32.xlu0 %v204
  %v206 = vpop.xlane.xlu0 %205
  %v207 = vsel %vm139, %v203, 0.0
  %208 = vadd.xlane.f32.xlu0 %v207
  %v209 = vpop.xlane.xlu0 %208
  %v210 = vrcp.pop %v206
  %v211 = vrcp.pop %v209
  %v212 = vmul.f32 %v201, %v210
  %v213 = vmul.f32 %v203, %v211
  %v215 = vsel %vm139, %v212, 0
  %217 = vmatpush.msra.mxu0 0.0
  %218 = vmatpush.msra.mxu0 0.0
  %219 = vmatpush.msra.mxu0 0.0
  %220 = vmatpush.msra.mxu0 0.0
  %221 = vmatpush.msra.mxu0 0.0
  %222 = vmatpush.msra.mxu0 0.0
  %223 = vmatpush.msra.mxu0 0.0
  %224 = vmatpush.msra.mxu0 0.0
  %225 = vmatpush.msra.mxu0 0.0
  %226 = vmatpush.msra.mxu0 0.0
  %227 = vmatpush.msra.mxu0 0.0
  %228 = vmatpush.msra.mxu0 0.0
  %229 = vmatpush.msra.mxu0 0.0
  %230 = vmatpush.msra.mxu0 0.0
  %231 = vmatpush.msra.mxu0 0.0
  %232 = vmatpush.msra.mxu0 %v134
  %233 = vmatmul.f32.gmra.mxu0 %v215
  %v234 = vpop.f32.mrf.mxu0
  %v235 = vadd.f32 0.0, %v234
  %236 = vdwg.mxu0
  %v238 = vsel %vm139, %v213, 0
  %240 = vmatpush.msra.mxu0 0.0
  %241 = vmatpush.msra.mxu0 0.0
  %242 = vmatpush.msra.mxu0 0.0
  %243 = vmatpush.msra.mxu0 0.0
  %244 = vmatpush.msra.mxu0 0.0
  %245 = vmatpush.msra.mxu0 0.0
  %246 = vmatpush.msra.mxu0 0.0
  %247 = vmatpush.msra.mxu0 0.0
  %248 = vmatpush.msra.mxu0 0.0
  %249 = vmatpush.msra.mxu0 0.0
  %250 = vmatpush.msra.mxu0 0.0
  %251 = vmatpush.msra.mxu0 0.0
  %252 = vmatpush.msra.mxu0 0.0
  %253 = vmatpush.msra.mxu0 0.0
  %254 = vmatpush.msra.mxu0 0.0
  %255 = vmatpush.msra.mxu0 %v137
  %256 = vmatmul.f32.gmra.mxu0 %v238
  %v257 = vpop.f32.mrf.mxu0
  %v258 = vadd.f32 0.0, %v257
  %259 = vdwg.mxu0
  %s260 = scalar_lea.vmem %s3, 96
  %v261 = vld [vmem:[%s260] sm:$0xff]
  %v262 = vld [vmem:[%s260 + $0x8] sm:$0xff]
  %v263 = vld [vmem:[%s260 + $0x10] sm:$0xff]
  %v264 = vld [vmem:[%s260 + $0x18] sm:$0xff]
  %s265 = scalar_lea.vmem %s3, 128
  %v266 = vld [vmem:[%s265] sm:$0xff]
  %v267 = vld [vmem:[%s265 + $0x8] sm:$0xff]
  %v268 = vld [vmem:[%s265 + $0x10] sm:$0xff]
  %v269 = vld [vmem:[%s265 + $0x18] sm:$0xff]
  %s270 = scalar_lea.vmem %s4, 1
  %v271 = vld [vmem:[%s270] sm:$0x1]
  %v273 = vperm.slane %v271, 0
  %275 = vmatpush.msra.mxu0 0.0
  %276 = vmatpush.msra.mxu0 0.0
  %277 = vmatpush.msra.mxu0 0.0
  %278 = vmatpush.msra.mxu0 0.0
  %279 = vmatpush.msra.mxu0 0.0
  %280 = vmatpush.msra.mxu0 0.0
  %281 = vmatpush.msra.mxu0 0.0
  %282 = vmatpush.msra.mxu0 0.0
  %283 = vmatpush.msra.mxu0 0.0
  %284 = vmatpush.msra.mxu0 0.0
  %285 = vmatpush.msra.mxu0 0.0
  %286 = vmatpush.msra.mxu0 0.0
  %287 = vmatpush.msra.mxu0 %v269
  %288 = vmatpush.msra.mxu0 %v268
  %289 = vmatpush.msra.mxu0 %v267
  %290 = vmatpush.msra.mxu0 %v266
  %291 = vmatmul.f32.gmra.mxu0 %v45
  %v292 = vpop.f32.mrf.mxu0
  %v293 = vadd.f32 %v273, %v292
  %294 = vmatmul.f32.gmra.mxu0 %v48
  %v295 = vpop.f32.mrf.mxu0
  %v296 = vadd.f32 %v273, %v295
  %297 = vdwg.mxu0
  %s298 = scalar_lea.vmem %s3, 160
  %v299 = vld [vmem:[%s298] sm:$0xff]
  %v300 = vld [vmem:[%s298 + $0x8] sm:$0xff]
  %v301 = vld [vmem:[%s298 + $0x10] sm:$0xff]
  %v302 = vld [vmem:[%s298 + $0x18] sm:$0xff]
  %s303 = scalar_lea.vmem %s4, 5
  %v304 = vld [vmem:[%s303] sm:$0x1]
  %v306 = vperm.slane %v304, 0
  %308 = vmatpush.msra.mxu0 0.0
  %309 = vmatpush.msra.mxu0 0.0
  %310 = vmatpush.msra.mxu0 0.0
  %311 = vmatpush.msra.mxu0 0.0
  %312 = vmatpush.msra.mxu0 0.0
  %313 = vmatpush.msra.mxu0 0.0
  %314 = vmatpush.msra.mxu0 0.0
  %315 = vmatpush.msra.mxu0 0.0
  %316 = vmatpush.msra.mxu0 0.0
  %317 = vmatpush.msra.mxu0 0.0
  %318 = vmatpush.msra.mxu0 0.0
  %319 = vmatpush.msra.mxu0 0.0
  %320 = vmatpush.msra.mxu0 %v302
  %321 = vmatpush.msra.mxu0 %v301
  %322 = vmatpush.msra.mxu0 %v300
  %323 = vmatpush.msra.mxu0 %v299
  %324 = vmatmul.f32.gmra.mxu0 %v45
  %v325 = vpop.f32.mrf.mxu0
  %v326 = vadd.f32 %v306, %v325
  %327 = vmatmul.f32.gmra.mxu0 %v48
  %v328 = vpop.f32.mrf.mxu0
  %v329 = vadd.f32 %v306, %v328
  %330 = vdwg.mxu0
  %s331 = scalar_lea.vmem %s3, 192
  %v332 = vld [vmem:[%s331] sm:$0xff]
  %v333 = vld [vmem:[%s331 + $0x8] sm:$0xff]
  %v334 = vld [vmem:[%s331 + $0x10] sm:$0xff]
  %v335 = vld [vmem:[%s331 + $0x18] sm:$0xff]
  %s336 = scalar_lea.vmem %s4, 9
  %v337 = vld [vmem:[%s336] sm:$0x1]
  %v339 = vperm.slane %v337, 0
  %341 = vmatpush.msra.mxu0 0.0
  %342 = vmatpush.msra.mxu0 0.0
  %343 = vmatpush.msra.mxu0 0.0
  %344 = vmatpush.msra.mxu0 0.0
  %345 = vmatpush.msra.mxu0 0.0
  %346 = vmatpush.msra.mxu0 0.0
  %347 = vmatpush.msra.mxu0 0.0
  %348 = vmatpush.msra.mxu0 0.0
  %349 = vmatpush.msra.mxu0 0.0
  %350 = vmatpush.msra.mxu0 0.0
  %351 = vmatpush.msra.mxu0 0.0
  %352 = vmatpush.msra.mxu0 0.0
  %353 = vmatpush.msra.mxu0 %v335
  %354 = vmatpush.msra.mxu0 %v334
  %355 = vmatpush.msra.mxu0 %v333
  %356 = vmatpush.msra.mxu0 %v332
  %357 = vmatmul.f32.gmra.mxu0 %v45
  %v358 = vpop.f32.mrf.mxu0
  %v359 = vadd.f32 %v339, %v358
  %360 = vmatmul.f32.gmra.mxu0 %v48
  %v361 = vpop.f32.mrf.mxu0
  %v362 = vadd.f32 %v339, %v361
  %363 = vdwg.mxu0
  %v365 = vsel %vm139, %v293, 0
  %v368 = vsel %vm139, %v326, 0
  %370 = vmatpush.xpose.msra.mxu0 0.0
  %371 = vmatpush.xpose.msra.mxu0 0.0
  %372 = vmatpush.xpose.msra.mxu0 0.0
  %373 = vmatpush.xpose.msra.mxu0 0.0
  %374 = vmatpush.xpose.msra.mxu0 0.0
  %375 = vmatpush.xpose.msra.mxu0 0.0
  %376 = vmatpush.xpose.msra.mxu0 0.0
  %377 = vmatpush.xpose.msra.mxu0 0.0
  %378 = vmatpush.xpose.msra.mxu0 0.0
  %379 = vmatpush.xpose.msra.mxu0 0.0
  %380 = vmatpush.xpose.msra.mxu0 0.0
  %381 = vmatpush.xpose.msra.mxu0 0.0
  %382 = vmatpush.xpose.msra.mxu0 0.0
  %383 = vmatpush.xpose.msra.mxu0 0.0
  %384 = vmatpush.xpose.msra.mxu0 0.0
  %385 = vmatpush.xpose.msra.mxu0 %v368
  %386 = vmatmul.f32.gmra.mxu0 %v365
  %v387 = vpop.f32.mrf.mxu0
  %v388 = vadd.f32 0.0, %v387
  %389 = vdwg.mxu0
  %v391 = vsel %vm139, %v296, 0
  %v394 = vsel %vm139, %v329, 0
  %396 = vmatpush.xpose.msra.mxu0 0.0
  %397 = vmatpush.xpose.msra.mxu0 0.0
  %398 = vmatpush.xpose.msra.mxu0 0.0
  %399 = vmatpush.xpose.msra.mxu0 0.0
  %400 = vmatpush.xpose.msra.mxu0 0.0
  %401 = vmatpush.xpose.msra.mxu0 0.0
  %402 = vmatpush.xpose.msra.mxu0 0.0
  %403 = vmatpush.xpose.msra.mxu0 0.0
  %404 = vmatpush.xpose.msra.mxu0 0.0
  %405 = vmatpush.xpose.msra.mxu0 0.0
  %406 = vmatpush.xpose.msra.mxu0 0.0
  %407 = vmatpush.xpose.msra.mxu0 0.0
  %408 = vmatpush.xpose.msra.mxu0 0.0
  %409 = vmatpush.xpose.msra.mxu0 0.0
  %410 = vmatpush.xpose.msra.mxu0 0.0
  %411 = vmatpush.xpose.msra.mxu0 %v394
  %412 = vmatmul.f32.gmra.mxu0 %v391
  %v413 = vpop.f32.mrf.mxu0
  %v414 = vadd.f32 0.0, %v413
  %415 = vdwg.mxu0
  %v416 = vsel %vm139, %v388, -inf
  %417 = vmax.xlane.f32.xlu0 %v416
  %v418 = vpop.xlane.xlu0 %417
  %v419 = vsel %vm139, %v414, -inf
  %420 = vmax.xlane.f32.xlu0 %v419
  %v421 = vpop.xlane.xlu0 %420
  %v422 = vsub.f32 %v388, %v418
  %v423 = vsub.f32 %v414, %v421
  %v424 = vmul.f32 %v422, 1.442695
  %v425 = vpow.pop %v424
  %v426 = vmul.f32 %v423, 1.442695
  %v427 = vpow.pop %v426
  %v428 = vsel %vm139, %v425, 0.0
  %429 = vadd.xlane.f32.xlu0 %v428
  %v430 = vpop.xlane.xlu0 %429
  %v431 = vsel %vm139, %v427, 0.0
  %432 = vadd.xlane.f32.xlu0 %v431
  %v433 = vpop.xlane.xlu0 %432
  %v434 = vrcp.pop %v430
  %v435 = vrcp.pop %v433
  %v436 = vmul.f32 %v425, %v434
  %v437 = vmul.f32 %v427, %v435
  %v439 = vsel %vm139, %v436, 0
  %441 = vmatpush.msra.mxu0 0.0
  %442 = vmatpush.msra.mxu0 0.0
  %443 = vmatpush.msra.mxu0 0.0
  %444 = vmatpush.msra.mxu0 0.0
  %445 = vmatpush.msra.mxu0 0.0
  %446 = vmatpush.msra.mxu0 0.0
  %447 = vmatpush.msra.mxu0 0.0
  %448 = vmatpush.msra.mxu0 0.0
  %449 = vmatpush.msra.mxu0 0.0
  %450 = vmatpush.msra.mxu0 0.0
  %451 = vmatpush.msra.mxu0 0.0
  %452 = vmatpush.msra.mxu0 0.0
  %453 = vmatpush.msra.mxu0 0.0
  %454 = vmatpush.msra.mxu0 0.0
  %455 = vmatpush.msra.mxu0 0.0
  %456 = vmatpush.msra.mxu0 %v359
  %457 = vmatmul.f32.gmra.mxu0 %v439
  %v458 = vpop.f32.mrf.mxu0
  %v459 = vadd.f32 0.0, %v458
  %460 = vdwg.mxu0
  %v462 = vsel %vm139, %v437, 0
  %464 = vmatpush.msra.mxu0 0.0
  %465 = vmatpush.msra.mxu0 0.0
  %466 = vmatpush.msra.mxu0 0.0
  %467 = vmatpush.msra.mxu0 0.0
  %468 = vmatpush.msra.mxu0 0.0
  %469 = vmatpush.msra.mxu0 0.0
  %470 = vmatpush.msra.mxu0 0.0
  %471 = vmatpush.msra.mxu0 0.0
  %472 = vmatpush.msra.mxu0 0.0
  %473 = vmatpush.msra.mxu0 0.0
  %474 = vmatpush.msra.mxu0 0.0
  %475 = vmatpush.msra.mxu0 0.0
  %476 = vmatpush.msra.mxu0 0.0
  %477 = vmatpush.msra.mxu0 0.0
  %478 = vmatpush.msra.mxu0 0.0
  %479 = vmatpush.msra.mxu0 %v362
  %480 = vmatmul.f32.gmra.mxu0 %v462
  %v481 = vpop.f32.mrf.mxu0
  %v482 = vadd.f32 0.0, %v481
  %483 = vdwg.mxu0
  %s484 = scalar_lea.vmem %s3, 224
  %v485 = vld [vmem:[%s484] sm:$0xff]
  %v486 = vld [vmem:[%s484 + $0x8] sm:$0xff]
  %v487 = vld [vmem:[%s484 + $0x10] sm:$0xff]
  %v488 = vld [vmem:[%s484 + $0x18] sm:$0xff]
  %v490 = vsel %vm139, %v459, 0
  %v493 = vsel %vm139, %v482, 0
  %v496 = vsel %vm139, %v485, 0
  %v499 = vsel %vm139, %v486, 0
  %v502 = vsel %vm139, %v487, 0
  %v505 = vsel %vm139, %v488, 0
  %507 = vmatpush.xpose.msra.mxu0 0.0
  %508 = vmatpush.xpose.msra.mxu0 0.0
  %509 = vmatpush.xpose.msra.mxu0 0.0
  %510 = vmatpush.xpose.msra.mxu0 0.0
  %511 = vmatpush.xpose.msra.mxu0 0.0
  %512 = vmatpush.xpose.msra.mxu0 0.0
  %513 = vmatpush.xpose.msra.mxu0 0.0
  %514 = vmatpush.xpose.msra.mxu0 0.0
  %515 = vmatpush.xpose.msra.mxu0 0.0
  %516 = vmatpush.xpose.msra.mxu0 0.0
  %517 = vmatpush.xpose.msra.mxu0 0.0
  %518 = vmatpush.xpose.msra.mxu0 0.0
  %519 = vmatpush.xpose.msra.mxu0 %v505
  %520 = vmatpush.xpose.msra.mxu0 %v502
  %521 = vmatpush.xpose.msra.mxu0 %v499
  %522 = vmatpush.xpose.msra.mxu0 %v496
  %523 = vmatmul.f32.gmra.mxu0 %v490
  %v524 = vpop.f32.mrf.mxu0
  %v525 = vadd.f32 0.0, %v524
  %526 = vmatmul.f32.gmra.mxu0 %v493
  %v527 = vpop.f32.mrf.mxu0
  %v528 = vadd.f32 0.0, %v527
  %529 = vdwg.mxu0
  %v531 = vsel %vm139, %v235, 0
  %v534 = vsel %vm139, %v258, 0
  %v537 = vsel %vm139, %v261, 0
  %v540 = vsel %vm139, %v262, 0
  %v543 = vsel %vm139, %v263, 0
  %v546 = vsel %vm139, %v264, 0
  %548 = vmatpush.xpose.msra.mxu0 0.0
  %549 = vmatpush.xpose.msra.mxu0 0.0
  %550 = vmatpush.xpose.msra.mxu0 0.0
  %551 = vmatpush.xpose.msra.mxu0 0.0
  %552 = vmatpush.xpose.msra.mxu0 0.0
  %553 = vmatpush.xpose.msra.mxu0 0.0
  %554 = vmatpush.xpose.msra.mxu0 0.0
  %555 = vmatpush.xpose.msra.mxu0 0.0
  %556 = vmatpush.xpose.msra.mxu0 0.0
  %557 = vmatpush.xpose.msra.mxu0 0.0
  %558 = vmatpush.xpose.msra.mxu0 0.0
  %559 = vmatpush.xpose.msra.mxu0 0.0
  %560 = vmatpush.xpose.msra.mxu0 %v546
  %561 = vmatpush.xpose.msra.mxu0 %v543
  %562 = vmatpush.xpose.msra.mxu0 %v540
  %563 = vmatpush.xpose.msra.mxu0 %v537
  %564 = vmatmul.f32.gmra.mxu0 %v531
  %v565 = vpop.f32.mrf.mxu0
  %v566 = vadd.f32 %v525, %v565
  %567 = vmatmul.f32.gmra.mxu0 %v534
  %v568 = vpop.f32.mrf.mxu0
  %v569 = vadd.f32 %v528, %v568
  %570 = vdwg.mxu0
  %s571 = scalar_lea.vmem %s3, 256
  %v572 = vld [vmem:[%s571] sm:$0xff]
  %v573 = vld [vmem:[%s571 + $0x8] sm:$0xff]
  %v574 = vld [vmem:[%s571 + $0x10] sm:$0xff]
  %v575 = vld [vmem:[%s571 + $0x18] sm:$0xff]
  %s576 = scalar_lea.vmem %s4, 2
  %v577 = vld [vmem:[%s576] sm:$0x1]
  %v579 = vperm.slane %v577, 0
  %581 = vmatpush.msra.mxu0 0.0
  %582 = vmatpush.msra.mxu0 0.0
  %583 = vmatpush.msra.mxu0 0.0
  %584 = vmatpush.msra.mxu0 0.0
  %585 = vmatpush.msra.mxu0 0.0
  %586 = vmatpush.msra.mxu0 0.0
  %587 = vmatpush.msra.mxu0 0.0
  %588 = vmatpush.msra.mxu0 0.0
  %589 = vmatpush.msra.mxu0 0.0
  %590 = vmatpush.msra.mxu0 0.0
  %591 = vmatpush.msra.mxu0 0.0
  %592 = vmatpush.msra.mxu0 0.0
  %593 = vmatpush.msra.mxu0 %v575
  %594 = vmatpush.msra.mxu0 %v574
  %595 = vmatpush.msra.mxu0 %v573
  %596 = vmatpush.msra.mxu0 %v572
  %597 = vmatmul.f32.gmra.mxu0 %v45
  %v598 = vpop.f32.mrf.mxu0
  %v599 = vadd.f32 %v579, %v598
  %600 = vmatmul.f32.gmra.mxu0 %v48
  %v601 = vpop.f32.mrf.mxu0
  %v602 = vadd.f32 %v579, %v601
  %603 = vdwg.mxu0
  %s604 = scalar_lea.vmem %s3, 288
  %v605 = vld [vmem:[%s604] sm:$0xff]
  %v606 = vld [vmem:[%s604 + $0x8] sm:$0xff]
  %v607 = vld [vmem:[%s604 + $0x10] sm:$0xff]
  %v608 = vld [vmem:[%s604 + $0x18] sm:$0xff]
  %s609 = scalar_lea.vmem %s4, 6
  %v610 = vld [vmem:[%s609] sm:$0x1]
  %v612 = vperm.slane %v610, 0
  %614 = vmatpush.msra.mxu0 0.0
  %615 = vmatpush.msra.mxu0 0.0
  %616 = vmatpush.msra.mxu0 0.0
  %617 = vmatpush.msra.mxu0 0.0
  %618 = vmatpush.msra.mxu0 0.0
  %619 = vmatpush.msra.mxu0 0.0
  %620 = vmatpush.msra.mxu0 0.0
  %621 = vmatpush.msra.mxu0 0.0
  %622 = vmatpush.msra.mxu0 0.0
  %623 = vmatpush.msra.mxu0 0.0
  %624 = vmatpush.msra.mxu0 0.0
  %625 = vmatpush.msra.mxu0 0.0
  %626 = vmatpush.msra.mxu0 %v608
  %627 = vmatpush.msra.mxu0 %v607
  %628 = vmatpush.msra.mxu0 %v606
  %629 = vmatpush.msra.mxu0 %v605
  %630 = vmatmul.f32.gmra.mxu0 %v45
  %v631 = vpop.f32.mrf.mxu0
  %v632 = vadd.f32 %v612, %v631
  %633 = vmatmul.f32.gmra.mxu0 %v48
  %v634 = vpop.f32.mrf.mxu0
  %v635 = vadd.f32 %v612, %v634
  %636 = vdwg.mxu0
  %s637 = scalar_lea.vmem %s3, 320
  %v638 = vld [vmem:[%s637] sm:$0xff]
  %v639 = vld [vmem:[%s637 + $0x8] sm:$0xff]
  %v640 = vld [vmem:[%s637 + $0x10] sm:$0xff]
  %v641 = vld [vmem:[%s637 + $0x18] sm:$0xff]
  %s642 = scalar_lea.vmem %s4, 10
  %v643 = vld [vmem:[%s642] sm:$0x1]
  %v645 = vperm.slane %v643, 0
  %647 = vmatpush.msra.mxu0 0.0
  %648 = vmatpush.msra.mxu0 0.0
  %649 = vmatpush.msra.mxu0 0.0
  %650 = vmatpush.msra.mxu0 0.0
  %651 = vmatpush.msra.mxu0 0.0
  %652 = vmatpush.msra.mxu0 0.0
  %653 = vmatpush.msra.mxu0 0.0
  %654 = vmatpush.msra.mxu0 0.0
  %655 = vmatpush.msra.mxu0 0.0
  %656 = vmatpush.msra.mxu0 0.0
  %657 = vmatpush.msra.mxu0 0.0
  %658 = vmatpush.msra.mxu0 0.0
  %659 = vmatpush.msra.mxu0 %v641
  %660 = vmatpush.msra.mxu0 %v640
  %661 = vmatpush.msra.mxu0 %v639
  %662 = vmatpush.msra.mxu0 %v638
  %663 = vmatmul.f32.gmra.mxu0 %v45
  %v664 = vpop.f32.mrf.mxu0
  %v665 = vadd.f32 %v645, %v664
  %666 = vmatmul.f32.gmra.mxu0 %v48
  %v667 = vpop.f32.mrf.mxu0
  %v668 = vadd.f32 %v645, %v667
  %669 = vdwg.mxu0
  %v671 = vsel %vm139, %v599, 0
  %v674 = vsel %vm139, %v632, 0
  %676 = vmatpush.xpose.msra.mxu0 0.0
  %677 = vmatpush.xpose.msra.mxu0 0.0
  %678 = vmatpush.xpose.msra.mxu0 0.0
  %679 = vmatpush.xpose.msra.mxu0 0.0
  %680 = vmatpush.xpose.msra.mxu0 0.0
  %681 = vmatpush.xpose.msra.mxu0 0.0
  %682 = vmatpush.xpose.msra.mxu0 0.0
  %683 = vmatpush.xpose.msra.mxu0 0.0
  %684 = vmatpush.xpose.msra.mxu0 0.0
  %685 = vmatpush.xpose.msra.mxu0 0.0
  %686 = vmatpush.xpose.msra.mxu0 0.0
  %687 = vmatpush.xpose.msra.mxu0 0.0
  %688 = vmatpush.xpose.msra.mxu0 0.0
  %689 = vmatpush.xpose.msra.mxu0 0.0
  %690 = vmatpush.xpose.msra.mxu0 0.0
  %691 = vmatpush.xpose.msra.mxu0 %v674
  %692 = vmatmul.f32.gmra.mxu0 %v671
  %v693 = vpop.f32.mrf.mxu0
  %v694 = vadd.f32 0.0, %v693
  %695 = vdwg.mxu0
  %v697 = vsel %vm139, %v602, 0
  %v700 = vsel %vm139, %v635, 0
  %702 = vmatpush.xpose.msra.mxu0 0.0
  %703 = vmatpush.xpose.msra.mxu0 0.0
  %704 = vmatpush.xpose.msra.mxu0 0.0
  %705 = vmatpush.xpose.msra.mxu0 0.0
  %706 = vmatpush.xpose.msra.mxu0 0.0
  %707 = vmatpush.xpose.msra.mxu0 0.0
  %708 = vmatpush.xpose.msra.mxu0 0.0
  %709 = vmatpush.xpose.msra.mxu0 0.0
  %710 = vmatpush.xpose.msra.mxu0 0.0
  %711 = vmatpush.xpose.msra.mxu0 0.0
  %712 = vmatpush.xpose.msra.mxu0 0.0
  %713 = vmatpush.xpose.msra.mxu0 0.0
  %714 = vmatpush.xpose.msra.mxu0 0.0
  %715 = vmatpush.xpose.msra.mxu0 0.0
  %716 = vmatpush.xpose.msra.mxu0 0.0
  %717 = vmatpush.xpose.msra.mxu0 %v700
  %718 = vmatmul.f32.gmra.mxu0 %v697
  %v719 = vpop.f32.mrf.mxu0
  %v720 = vadd.f32 0.0, %v719
  %721 = vdwg.mxu0
  %v722 = vsel %vm139, %v694, -inf
  %723 = vmax.xlane.f32.xlu0 %v722
  %v724 = vpop.xlane.xlu0 %723
  %v725 = vsel %vm139, %v720, -inf
  %726 = vmax.xlane.f32.xlu0 %v725
  %v727 = vpop.xlane.xlu0 %726
  %v728 = vsub.f32 %v694, %v724
  %v729 = vsub.f32 %v720, %v727
  %v730 = vmul.f32 %v728, 1.442695
  %v731 = vpow.pop %v730
  %v732 = vmul.f32 %v729, 1.442695
  %v733 = vpow.pop %v732
  %v734 = vsel %vm139, %v731, 0.0
  %735 = vadd.xlane.f32.xlu0 %v734
  %v736 = vpop.xlane.xlu0 %735
  %v737 = vsel %vm139, %v733, 0.0
  %738 = vadd.xlane.f32.xlu0 %v737
  %v739 = vpop.xlane.xlu0 %738
  %v740 = vrcp.pop %v736
  %v741 = vrcp.pop %v739
  %v742 = vmul.f32 %v731, %v740
  %v743 = vmul.f32 %v733, %v741
  %v745 = vsel %vm139, %v742, 0
  %747 = vmatpush.msra.mxu0 0.0
  %748 = vmatpush.msra.mxu0 0.0
  %749 = vmatpush.msra.mxu0 0.0
  %750 = vmatpush.msra.mxu0 0.0
  %751 = vmatpush.msra.mxu0 0.0
  %752 = vmatpush.msra.mxu0 0.0
  %753 = vmatpush.msra.mxu0 0.0
  %754 = vmatpush.msra.mxu0 0.0
  %755 = vmatpush.msra.mxu0 0.0
  %756 = vmatpush.msra.mxu0 0.0
  %757 = vmatpush.msra.mxu0 0.0
  %758 = vmatpush.msra.mxu0 0.0
  %759 = vmatpush.msra.mxu0 0.0
  %760 = vmatpush.msra.mxu0 0.0
  %761 = vmatpush.msra.mxu0 0.0
  %762 = vmatpush.msra.mxu0 %v665
  %763 = vmatmul.f32.gmra.mxu0 %v745
  %v764 = vpop.f32.mrf.mxu0
  %v765 = vadd.f32 0.0, %v764
  %766 = vdwg.mxu0
  %v768 = vsel %vm139, %v743, 0
  %770 = vmatpush.msra.mxu0 0.0
  %771 = vmatpush.msra.mxu0 0.0
  %772 = vmatpush.msra.mxu0 0.0
  %773 = vmatpush.msra.mxu0 0.0
  %774 = vmatpush.msra.mxu0 0.0
  %775 = vmatpush.msra.mxu0 0.0
  %776 = vmatpush.msra.mxu0 0.0
  %777 = vmatpush.msra.mxu0 0.0
  %778 = vmatpush.msra.mxu0 0.0
  %779 = vmatpush.msra.mxu0 0.0
  %780 = vmatpush.msra.mxu0 0.0
  %781 = vmatpush.msra.mxu0 0.0
  %782 = vmatpush.msra.mxu0 0.0
  %783 = vmatpush.msra.mxu0 0.0
  %784 = vmatpush.msra.mxu0 0.0
  %785 = vmatpush.msra.mxu0 %v668
  %786 = vmatmul.f32.gmra.mxu0 %v768
  %v787 = vpop.f32.mrf.mxu0
  %v788 = vadd.f32 0.0, %v787
  %789 = vdwg.mxu0
  %s790 = scalar_lea.vmem %s3, 352
  %v791 = vld [vmem:[%s790] sm:$0xff]
  %v792 = vld [vmem:[%s790 + $0x8] sm:$0xff]
  %v793 = vld [vmem:[%s790 + $0x10] sm:$0xff]
  %v794 = vld [vmem:[%s790 + $0x18] sm:$0xff]
  %v796 = vsel %vm139, %v765, 0
  %v799 = vsel %vm139, %v788, 0
  %v802 = vsel %vm139, %v791, 0
  %v805 = vsel %vm139, %v792, 0
  %v808 = vsel %vm139, %v793, 0
  %v811 = vsel %vm139, %v794, 0
  %813 = vmatpush.xpose.msra.mxu0 0.0
  %814 = vmatpush.xpose.msra.mxu0 0.0
  %815 = vmatpush.xpose.msra.mxu0 0.0
  %816 = vmatpush.xpose.msra.mxu0 0.0
  %817 = vmatpush.xpose.msra.mxu0 0.0
  %818 = vmatpush.xpose.msra.mxu0 0.0
  %819 = vmatpush.xpose.msra.mxu0 0.0
  %820 = vmatpush.xpose.msra.mxu0 0.0
  %821 = vmatpush.xpose.msra.mxu0 0.0
  %822 = vmatpush.xpose.msra.mxu0 0.0
  %823 = vmatpush.xpose.msra.mxu0 0.0
  %824 = vmatpush.xpose.msra.mxu0 0.0
  %825 = vmatpush.xpose.msra.mxu0 %v811
  %826 = vmatpush.xpose.msra.mxu0 %v808
  %827 = vmatpush.xpose.msra.mxu0 %v805
  %828 = vmatpush.xpose.msra.mxu0 %v802
  %829 = vmatmul.f32.gmra.mxu0 %v796
  %v830 = vpop.f32.mrf.mxu0
  %v831 = vadd.f32 0.0, %v830
  %832 = vmatmul.f32.gmra.mxu0 %v799
  %v833 = vpop.f32.mrf.mxu0
  %v834 = vadd.f32 0.0, %v833
  %835 = vdwg.mxu0
  %v836 = vadd.f32 %v566, %v831
  %v837 = vadd.f32 %v569, %v834
  %s838 = scalar_lea.vmem %s3, 384
  %v839 = vld [vmem:[%s838] sm:$0xff]
  %v840 = vld [vmem:[%s838 + $0x8] sm:$0xff]
  %v841 = vld [vmem:[%s838 + $0x10] sm:$0xff]
  %v842 = vld [vmem:[%s838 + $0x18] sm:$0xff]
  %s843 = scalar_lea.vmem %s4, 3
  %v844 = vld [vmem:[%s843] sm:$0x1]
  %v846 = vperm.slane %v844, 0
  %848 = vmatpush.msra.mxu0 0.0
  %849 = vmatpush.msra.mxu0 0.0
  %850 = vmatpush.msra.mxu0 0.0
  %851 = vmatpush.msra.mxu0 0.0
  %852 = vmatpush.msra.mxu0 0.0
  %853 = vmatpush.msra.mxu0 0.0
  %854 = vmatpush.msra.mxu0 0.0
  %855 = vmatpush.msra.mxu0 0.0
  %856 = vmatpush.msra.mxu0 0.0
  %857 = vmatpush.msra.mxu0 0.0
  %858 = vmatpush.msra.mxu0 0.0
  %859 = vmatpush.msra.mxu0 0.0
  %860 = vmatpush.msra.mxu0 %v842
  %861 = vmatpush.msra.mxu0 %v841
  %862 = vmatpush.msra.mxu0 %v840
  %863 = vmatpush.msra.mxu0 %v839
  %864 = vmatmul.f32.gmra.mxu0 %v45
  %v865 = vpop.f32.mrf.mxu0
  %v866 = vadd.f32 %v846, %v865
  %867 = vmatmul.f32.gmra.mxu0 %v48
  %v868 = vpop.f32.mrf.mxu0
  %v869 = vadd.f32 %v846, %v868
  %870 = vdwg.mxu0
  %s871 = scalar_lea.vmem %s3, 416
  %v872 = vld [vmem:[%s871] sm:$0xff]
  %v873 = vld [vmem:[%s871 + $0x8] sm:$0xff]
  %v874 = vld [vmem:[%s871 + $0x10] sm:$0xff]
  %v875 = vld [vmem:[%s871 + $0x18] sm:$0xff]
  %s876 = scalar_lea.vmem %s4, 7
  %v877 = vld [vmem:[%s876] sm:$0x1]
  %v879 = vperm.slane %v877, 0
  %881 = vmatpush.msra.mxu0 0.0
  %882 = vmatpush.msra.mxu0 0.0
  %883 = vmatpush.msra.mxu0 0.0
  %884 = vmatpush.msra.mxu0 0.0
  %885 = vmatpush.msra.mxu0 0.0
  %886 = vmatpush.msra.mxu0 0.0
  %887 = vmatpush.msra.mxu0 0.0
  %888 = vmatpush.msra.mxu0 0.0
  %889 = vmatpush.msra.mxu0 0.0
  %890 = vmatpush.msra.mxu0 0.0
  %891 = vmatpush.msra.mxu0 0.0
  %892 = vmatpush.msra.mxu0 0.0
  %893 = vmatpush.msra.mxu0 %v875
  %894 = vmatpush.msra.mxu0 %v874
  %895 = vmatpush.msra.mxu0 %v873
  %896 = vmatpush.msra.mxu0 %v872
  %897 = vmatmul.f32.gmra.mxu0 %v45
  %v898 = vpop.f32.mrf.mxu0
  %v899 = vadd.f32 %v879, %v898
  %900 = vmatmul.f32.gmra.mxu0 %v48
  %v901 = vpop.f32.mrf.mxu0
  %v902 = vadd.f32 %v879, %v901
  %903 = vdwg.mxu0
  %s904 = scalar_lea.vmem %s3, 448
  %v905 = vld [vmem:[%s904] sm:$0xff]
  %v906 = vld [vmem:[%s904 + $0x8] sm:$0xff]
  %v907 = vld [vmem:[%s904 + $0x10] sm:$0xff]
  %v908 = vld [vmem:[%s904 + $0x18] sm:$0xff]
  %s909 = scalar_lea.vmem %s4, 11
  %v910 = vld [vmem:[%s909] sm:$0x1]
  %v912 = vperm.slane %v910, 0
  %914 = vmatpush.msra.mxu0 0.0
  %915 = vmatpush.msra.mxu0 0.0
  %916 = vmatpush.msra.mxu0 0.0
  %917 = vmatpush.msra.mxu0 0.0
  %918 = vmatpush.msra.mxu0 0.0
  %919 = vmatpush.msra.mxu0 0.0
  %920 = vmatpush.msra.mxu0 0.0
  %921 = vmatpush.msra.mxu0 0.0
  %922 = vmatpush.msra.mxu0 0.0
  %923 = vmatpush.msra.mxu0 0.0
  %924 = vmatpush.msra.mxu0 0.0
  %925 = vmatpush.msra.mxu0 0.0
  %926 = vmatpush.msra.mxu0 %v908
  %927 = vmatpush.msra.mxu0 %v907
  %928 = vmatpush.msra.mxu0 %v906
  %929 = vmatpush.msra.mxu0 %v905
  %930 = vmatmul.f32.gmra.mxu0 %v45
  %v931 = vpop.f32.mrf.mxu0
  %v932 = vadd.f32 %v912, %v931
  %933 = vmatmul.f32.gmra.mxu0 %v48
  %v934 = vpop.f32.mrf.mxu0
  %v935 = vadd.f32 %v912, %v934
  %936 = vdwg.mxu0
  %v938 = vsel %vm139, %v866, 0
  %v941 = vsel %vm139, %v899, 0
  %943 = vmatpush.xpose.msra.mxu0 0.0
  %944 = vmatpush.xpose.msra.mxu0 0.0
  %945 = vmatpush.xpose.msra.mxu0 0.0
  %946 = vmatpush.xpose.msra.mxu0 0.0
  %947 = vmatpush.xpose.msra.mxu0 0.0
  %948 = vmatpush.xpose.msra.mxu0 0.0
  %949 = vmatpush.xpose.msra.mxu0 0.0
  %950 = vmatpush.xpose.msra.mxu0 0.0
  %951 = vmatpush.xpose.msra.mxu0 0.0
  %952 = vmatpush.xpose.msra.mxu0 0.0
  %953 = vmatpush.xpose.msra.mxu0 0.0
  %954 = vmatpush.xpose.msra.mxu0 0.0
  %955 = vmatpush.xpose.msra.mxu0 0.0
  %956 = vmatpush.xpose.msra.mxu0 0.0
  %957 = vmatpush.xpose.msra.mxu0 0.0
  %958 = vmatpush.xpose.msra.mxu0 %v941
  %959 = vmatmul.f32.gmra.mxu0 %v938
  %v960 = vpop.f32.mrf.mxu0
  %v961 = vadd.f32 0.0, %v960
  %962 = vdwg.mxu0
  %v964 = vsel %vm139, %v869, 0
  %v967 = vsel %vm139, %v902, 0
  %969 = vmatpush.xpose.msra.mxu0 0.0
  %970 = vmatpush.xpose.msra.mxu0 0.0
  %971 = vmatpush.xpose.msra.mxu0 0.0
  %972 = vmatpush.xpose.msra.mxu0 0.0
  %973 = vmatpush.xpose.msra.mxu0 0.0
  %974 = vmatpush.xpose.msra.mxu0 0.0
  %975 = vmatpush.xpose.msra.mxu0 0.0
  %976 = vmatpush.xpose.msra.mxu0 0.0
  %977 = vmatpush.xpose.msra.mxu0 0.0
  %978 = vmatpush.xpose.msra.mxu0 0.0
  %979 = vmatpush.xpose.msra.mxu0 0.0
  %980 = vmatpush.xpose.msra.mxu0 0.0
  %981 = vmatpush.xpose.msra.mxu0 0.0
  %982 = vmatpush.xpose.msra.mxu0 0.0
  %983 = vmatpush.xpose.msra.mxu0 0.0
  %984 = vmatpush.xpose.msra.mxu0 %v967
  %985 = vmatmul.f32.gmra.mxu0 %v964
  %v986 = vpop.f32.mrf.mxu0
  %v987 = vadd.f32 0.0, %v986
  %988 = vdwg.mxu0
  %v989 = vsel %vm139, %v961, -inf
  %990 = vmax.xlane.f32.xlu0 %v989
  %v991 = vpop.xlane.xlu0 %990
  %v992 = vsel %vm139, %v987, -inf
  %993 = vmax.xlane.f32.xlu0 %v992
  %v994 = vpop.xlane.xlu0 %993
  %v995 = vsub.f32 %v961, %v991
  %v996 = vsub.f32 %v987, %v994
  %v997 = vmul.f32 %v995, 1.442695
  %v998 = vpow.pop %v997
  %v999 = vmul.f32 %v996, 1.442695
  %v1000 = vpow.pop %v999
  %v1001 = vsel %vm139, %v998, 0.0
  %1002 = vadd.xlane.f32.xlu0 %v1001
  %v1003 = vpop.xlane.xlu0 %1002
  %v1004 = vsel %vm139, %v1000, 0.0
  %1005 = vadd.xlane.f32.xlu0 %v1004
  %v1006 = vpop.xlane.xlu0 %1005
  %v1007 = vrcp.pop %v1003
  %v1008 = vrcp.pop %v1006
  %v1009 = vmul.f32 %v998, %v1007
  %v1010 = vmul.f32 %v1000, %v1008
  %v1012 = vsel %vm139, %v1009, 0
  %1014 = vmatpush.msra.mxu0 0.0
  %1015 = vmatpush.msra.mxu0 0.0
  %1016 = vmatpush.msra.mxu0 0.0
  %1017 = vmatpush.msra.mxu0 0.0
  %1018 = vmatpush.msra.mxu0 0.0
  %1019 = vmatpush.msra.mxu0 0.0
  %1020 = vmatpush.msra.mxu0 0.0
  %1021 = vmatpush.msra.mxu0 0.0
  %1022 = vmatpush.msra.mxu0 0.0
  %1023 = vmatpush.msra.mxu0 0.0
  %1024 = vmatpush.msra.mxu0 0.0
  %1025 = vmatpush.msra.mxu0 0.0
  %1026 = vmatpush.msra.mxu0 0.0
  %1027 = vmatpush.msra.mxu0 0.0
  %1028 = vmatpush.msra.mxu0 0.0
  %1029 = vmatpush.msra.mxu0 %v932
  %1030 = vmatmul.f32.gmra.mxu0 %v1012
  %v1031 = vpop.f32.mrf.mxu0
  %v1032 = vadd.f32 0.0, %v1031
  %1033 = vdwg.mxu0
  %v1035 = vsel %vm139, %v1010, 0
  %1037 = vmatpush.msra.mxu0 0.0
  %1038 = vmatpush.msra.mxu0 0.0
  %1039 = vmatpush.msra.mxu0 0.0
  %1040 = vmatpush.msra.mxu0 0.0
  %1041 = vmatpush.msra.mxu0 0.0
  %1042 = vmatpush.msra.mxu0 0.0
  %1043 = vmatpush.msra.mxu0 0.0
  %1044 = vmatpush.msra.mxu0 0.0
  %1045 = vmatpush.msra.mxu0 0.0
  %1046 = vmatpush.msra.mxu0 0.0
  %1047 = vmatpush.msra.mxu0 0.0
  %1048 = vmatpush.msra.mxu0 0.0
  %1049 = vmatpush.msra.mxu0 0.0
  %1050 = vmatpush.msra.mxu0 0.0
  %1051 = vmatpush.msra.mxu0 0.0
  %1052 = vmatpush.msra.mxu0 %v935
  %1053 = vmatmul.f32.gmra.mxu0 %v1035
  %v1054 = vpop.f32.mrf.mxu0
  %v1055 = vadd.f32 0.0, %v1054
  %1056 = vdwg.mxu0
  %s1057 = scalar_lea.vmem %s3, 480
  %v1058 = vld [vmem:[%s1057] sm:$0xff]
  %v1059 = vld [vmem:[%s1057 + $0x8] sm:$0xff]
  %v1060 = vld [vmem:[%s1057 + $0x10] sm:$0xff]
  %v1061 = vld [vmem:[%s1057 + $0x18] sm:$0xff]
  %v1063 = vsel %vm139, %v1032, 0
  %v1066 = vsel %vm139, %v1055, 0
  %v1069 = vsel %vm139, %v1058, 0
  %v1072 = vsel %vm139, %v1059, 0
  %v1075 = vsel %vm139, %v1060, 0
  %v1078 = vsel %vm139, %v1061, 0
  %1080 = vmatpush.xpose.msra.mxu0 0.0
  %1081 = vmatpush.xpose.msra.mxu0 0.0
  %1082 = vmatpush.xpose.msra.mxu0 0.0
  %1083 = vmatpush.xpose.msra.mxu0 0.0
  %1084 = vmatpush.xpose.msra.mxu0 0.0
  %1085 = vmatpush.xpose.msra.mxu0 0.0
  %1086 = vmatpush.xpose.msra.mxu0 0.0
  %1087 = vmatpush.xpose.msra.mxu0 0.0
  %1088 = vmatpush.xpose.msra.mxu0 0.0
  %1089 = vmatpush.xpose.msra.mxu0 0.0
  %1090 = vmatpush.xpose.msra.mxu0 0.0
  %1091 = vmatpush.xpose.msra.mxu0 0.0
  %1092 = vmatpush.xpose.msra.mxu0 %v1078
  %1093 = vmatpush.xpose.msra.mxu0 %v1075
  %1094 = vmatpush.xpose.msra.mxu0 %v1072
  %1095 = vmatpush.xpose.msra.mxu0 %v1069
  %1096 = vmatmul.f32.gmra.mxu0 %v1063
  %v1097 = vpop.f32.mrf.mxu0
  %v1098 = vadd.f32 0.0, %v1097
  %1099 = vmatmul.f32.gmra.mxu0 %v1066
  %v1100 = vpop.f32.mrf.mxu0
  %v1101 = vadd.f32 0.0, %v1100
  %1102 = vdwg.mxu0
  %v1103 = vadd.f32 %v836, %v1098
  %v1104 = vadd.f32 %v837, %v1101
  %v1105 = vperm.slane %v34, 1
  %v1106 = vadd.f32 %v1103, %v1105
  %v1107 = vadd.f32 %v1104, %v1105
  %v1108 = vadd.f32 %v32, %v1106
  %v1109 = vadd.f32 %v33, %v1107
  %v1110 = vsel %vm43, %v1108, 0.0
  %1111 = vadd.xlane.f32.xlu0 %v1110
  %v1112 = vpop.xlane.xlu0 %1111
  %v1113 = vsel %vm43, %v1109, 0.0
  %1114 = vadd.xlane.f32.xlu0 %v1113
  %v1115 = vpop.xlane.xlu0 %1114
  %v1116 = vrcp.pop 32.0
  %v1117 = vmul.f32 32.0, %v1116
  %v1118 = vsub.f32 1.0, %v1117
  %v1119 = vmul.f32 %v1116, %v1118
  %v1120 = vadd.f32 %v1116, %v1119
  %vm1121 = vweird.f32 %v1116
  %v1122 = vsel %vm1121, %v1116, %v1120
  %v1123 = vmul.f32 %v1112, %v1122
  %v1124 = vmul.f32 %v1115, %v1122
  %v1125 = vsub.f32 %v1108, %v1123
  %v1126 = vsub.f32 %v1109, %v1124
  %v1127 = vmul.f32 %v1125, %v1125
  %v1128 = vmul.f32 %v1126, %v1126
  %v1129 = vsel %vm43, %v1127, 0.0
  %1130 = vadd.xlane.f32.xlu0 %v1129
  %v1131 = vpop.xlane.xlu0 %1130
  %v1132 = vsel %vm43, %v1128, 0.0
  %1133 = vadd.xlane.f32.xlu0 %v1132
  %v1134 = vpop.xlane.xlu0 %1133
  %v1135 = vmul.f32 %v1131, %v1122
  %v1136 = vmul.f32 %v1134, %v1122
  %v1137 = vadd.f32 %v1135, 1e-05
  %v1138 = vadd.f32 %v1136, 1e-05
  %v1139 = vrsqrt.pop %v1137
  %v1140 = vmul.f32 %v1139, %v1137
  %v1141 = vmul.f32 %v1140, %v1139
  %v1142 = vmul.f32 0.5, %v1141
  %v1143 = vsub.f32 1.5, %v1142
  %v1144 = vmul.f32 %v1139, %v1143
  %vm1145 = vweird.f32 %v1137
  %vm1146 = vweird.f32 %v1139
  %vm1147 = vmor %vm1145, %vm1146
  %v1148 = vsel %vm1147, %v1139, %v1144
  %v1149 = vrsqrt.pop %v1138
  %v1150 = vmul.f32 %v1149, %v1138
  %v1151 = vmul.f32 %v1150, %v1149
  %v1152 = vmul.f32 0.5, %v1151
  %v1153 = vsub.f32 1.5, %v1152
  %v1154 = vmul.f32 %v1149, %v1153
  %vm1155 = vweird.f32 %v1138
  %vm1156 = vweird.f32 %v1149
  %vm1157 = vmor %vm1155, %vm1156
  %v1158 = vsel %vm1157, %v1149, %v1154
  %v1159 = vmul.f32 %v1125, %v1148
  %v1160 = vmul.f32 %v1126, %v1158
  %v1161 = vperm.slane %v34, 3
  %v1162 = vmul.f32 %v1159, %v1161
  %v1163 = vmul.f32 %v1160, %v1161
  %v1164 = vperm.slane %v34, 4
  %v1165 = vadd.f32 %v1162, %v1164
  %v1166 = vadd.f32 %v1163, %v1164
  %v1167 = vld [vmem:[%s5] sm:$0xff]
  %v1168 = vld [vmem:[%s5 + $0x8] sm:$0xff]
  %v1169 = vld [vmem:[%s5 + $0x10] sm:$0xff]
  %v1170 = vld [vmem:[%s5 + $0x18] sm:$0xff]
  %v1171 = vld [vmem:[%s5 + $0x20] sm:$0xff]
  %v1172 = vld [vmem:[%s5 + $0x28] sm:$0xff]
  %v1173 = vld [vmem:[%s5 + $0x30] sm:$0xff]
  %v1174 = vld [vmem:[%s5 + $0x38] sm:$0xff]
  %v1175 = vperm.slane %v34, 0
  %v1177 = vsel %vm43, %v1165, 0
  %v1180 = vsel %vm43, %v1166, 0
  %v1183 = vsel %vm43, %v1167, 0
  %v1186 = vsel %vm43, %v1168, 0
  %v1189 = vsel %vm43, %v1169, 0
  %v1192 = vsel %vm43, %v1170, 0
  %v1195 = vsel %vm43, %v1171, 0
  %v1198 = vsel %vm43, %v1172, 0
  %v1201 = vsel %vm43, %v1173, 0
  %v1204 = vsel %vm43, %v1174, 0
  %1206 = vmatpush.xpose.msra.mxu0 0.0
  %1207 = vmatpush.xpose.msra.mxu0 0.0
  %1208 = vmatpush.xpose.msra.mxu0 0.0
  %1209 = vmatpush.xpose.msra.mxu0 0.0
  %1210 = vmatpush.xpose.msra.mxu0 0.0
  %1211 = vmatpush.xpose.msra.mxu0 0.0
  %1212 = vmatpush.xpose.msra.mxu0 0.0
  %1213 = vmatpush.xpose.msra.mxu0 0.0
  %1214 = vmatpush.xpose.msra.mxu0 %v1204
  %1215 = vmatpush.xpose.msra.mxu0 %v1201
  %1216 = vmatpush.xpose.msra.mxu0 %v1198
  %1217 = vmatpush.xpose.msra.mxu0 %v1195
  %1218 = vmatpush.xpose.msra.mxu0 %v1192
  %1219 = vmatpush.xpose.msra.mxu0 %v1189
  %1220 = vmatpush.xpose.msra.mxu0 %v1186
  %1221 = vmatpush.xpose.msra.mxu0 %v1183
  %1222 = vmatmul.f32.gmra.mxu0 %v1177
  %v1223 = vpop.f32.mrf.mxu0
  %v1224 = vadd.f32 %v1175, %v1223
  %1225 = vmatmul.f32.gmra.mxu0 %v1180
  %v1226 = vpop.f32.mrf.mxu0
  %v1227 = vadd.f32 %v1175, %v1226
  %1228 = vdwg.mxu0
  %v1229 = vmax.f32 %v1224, 0.0
  %v1230 = vmax.f32 %v1227, 0.0
  %s1231 = scalar_lea.vmem %s5, 64
  %v1232 = vld [vmem:[%s1231] sm:$0xff]
  %v1233 = vld [vmem:[%s1231 + $0x8] sm:$0xff]
  %v1234 = vld [vmem:[%s1231 + $0x10] sm:$0xff]
  %v1235 = vld [vmem:[%s1231 + $0x18] sm:$0xff]
  %v1236 = vld [vmem:[%s1231 + $0x20] sm:$0xff]
  %v1237 = vld [vmem:[%s1231 + $0x28] sm:$0xff]
  %v1238 = vld [vmem:[%s1231 + $0x30] sm:$0xff]
  %v1239 = vld [vmem:[%s1231 + $0x38] sm:$0xff]
  %v1240 = vperm.slane %v34, 2
  %vm1241 = vcmask 523264
  %v1243 = vsel %vm1241, %v1229, 0
  %v1246 = vsel %vm1241, %v1230, 0
  %1248 = vmatpush.msra.mxu0 0.0
  %1249 = vmatpush.msra.mxu0 0.0
  %1250 = vmatpush.msra.mxu0 0.0
  %1251 = vmatpush.msra.mxu0 0.0
  %1252 = vmatpush.msra.mxu0 0.0
  %1253 = vmatpush.msra.mxu0 0.0
  %1254 = vmatpush.msra.mxu0 0.0
  %1255 = vmatpush.msra.mxu0 0.0
  %1256 = vmatpush.msra.mxu0 %v1239
  %1257 = vmatpush.msra.mxu0 %v1238
  %1258 = vmatpush.msra.mxu0 %v1237
  %1259 = vmatpush.msra.mxu0 %v1236
  %1260 = vmatpush.msra.mxu0 %v1235
  %1261 = vmatpush.msra.mxu0 %v1234
  %1262 = vmatpush.msra.mxu0 %v1233
  %1263 = vmatpush.msra.mxu0 %v1232
  %1264 = vmatmul.f32.gmra.mxu0 %v1243
  %v1265 = vpop.f32.mrf.mxu0
  %v1266 = vadd.f32 %v1240, %v1265
  %1267 = vmatmul.f32.gmra.mxu0 %v1246
  %v1268 = vpop.f32.mrf.mxu0
  %v1269 = vadd.f32 %v1240, %v1268
  %1270 = vdwg.mxu0
  %v1271 = vadd.f32 %v1165, %v1266
  %v1272 = vadd.f32 %v1166, %v1269
  %v1273 = vsel %vm43, %v1271, 0.0
  %1274 = vadd.xlane.f32.xlu0 %v1273
  %v1275 = vpop.xlane.xlu0 %1274
  %v1276 = vsel %vm43, %v1272, 0.0
  %1277 = vadd.xlane.f32.xlu0 %v1276
  %v1278 = vpop.xlane.xlu0 %1277
  %v1279 = vmul.f32 %v1275, %v1122
  %v1280 = vmul.f32 %v1278, %v1122
  %v1281 = vsub.f32 %v1271, %v1279
  %v1282 = vsub.f32 %v1272, %v1280
  %v1283 = vmul.f32 %v1281, %v1281
  %v1284 = vmul.f32 %v1282, %v1282
  %v1285 = vsel %vm43, %v1283, 0.0
  %1286 = vadd.xlane.f32.xlu0 %v1285
  %v1287 = vpop.xlane.xlu0 %1286
  %v1288 = vsel %vm43, %v1284, 0.0
  %1289 = vadd.xlane.f32.xlu0 %v1288
  %v1290 = vpop.xlane.xlu0 %1289
  %v1291 = vmul.f32 %v1287, %v1122
  %v1292 = vmul.f32 %v1290, %v1122
  %v1293 = vadd.f32 %v1291, 1e-05
  %v1294 = vadd.f32 %v1292, 1e-05
  %v1295 = vrsqrt.pop %v1293
  %v1296 = vmul.f32 %v1295, %v1293
  %v1297 = vmul.f32 %v1296, %v1295
  %v1298 = vmul.f32 0.5, %v1297
  %v1299 = vsub.f32 1.5, %v1298
  %v1300 = vmul.f32 %v1295, %v1299
  %vm1301 = vweird.f32 %v1293
  %vm1302 = vweird.f32 %v1295
  %vm1303 = vmor %vm1301, %vm1302
  %v1304 = vsel %vm1303, %v1295, %v1300
  %v1305 = vrsqrt.pop %v1294
  %v1306 = vmul.f32 %v1305, %v1294
  %v1307 = vmul.f32 %v1306, %v1305
  %v1308 = vmul.f32 0.5, %v1307
  %v1309 = vsub.f32 1.5, %v1308
  %v1310 = vmul.f32 %v1305, %v1309
  %vm1311 = vweird.f32 %v1294
  %vm1312 = vweird.f32 %v1305
  %vm1313 = vmor %vm1311, %vm1312
  %v1314 = vsel %vm1313, %v1305, %v1310
  %v1315 = vmul.f32 %v1281, %v1304
  %v1316 = vmul.f32 %v1282, %v1314
  %v1317 = vperm.slane %v34, 5
  %v1318 = vmul.f32 %v1315, %v1317
  %v1319 = vmul.f32 %v1316, %v1317
  %v1320 = vperm.slane %v34, 6
  %v1321 = vadd.f32 %v1318, %v1320
  %v1322 = vadd.f32 %v1319, %v1320
  %s1323 = scalar_lea.vmem %s6, 8
  %v1324 = vld [vmem:[%s1323] sm:$0x7f]
  %s1325 = scalar_lea.vmem %s3, 512
  %v1326 = vld [vmem:[%s1325] sm:$0xff]
  %v1327 = vld [vmem:[%s1325 + $0x8] sm:$0xff]
  %v1328 = vld [vmem:[%s1325 + $0x10] sm:$0xff]
  %v1329 = vld [vmem:[%s1325 + $0x18] sm:$0xff]
  %s1330 = scalar_lea.vmem %s4, 12
  %v1331 = vld [vmem:[%s1330] sm:$0x1]
  %v1333 = vperm.slane %v1331, 0
  %v1336 = vsel %vm43, %v1321, 0
  %v1339 = vsel %vm43, %v1322, 0
  %1341 = vmatpush.msra.mxu0 0.0
  %1342 = vmatpush.msra.mxu0 0.0
  %1343 = vmatpush.msra.mxu0 0.0
  %1344 = vmatpush.msra.mxu0 0.0
  %1345 = vmatpush.msra.mxu0 0.0
  %1346 = vmatpush.msra.mxu0 0.0
  %1347 = vmatpush.msra.mxu0 0.0
  %1348 = vmatpush.msra.mxu0 0.0
  %1349 = vmatpush.msra.mxu0 0.0
  %1350 = vmatpush.msra.mxu0 0.0
  %1351 = vmatpush.msra.mxu0 0.0
  %1352 = vmatpush.msra.mxu0 0.0
  %1353 = vmatpush.msra.mxu0 %v1329
  %1354 = vmatpush.msra.mxu0 %v1328
  %1355 = vmatpush.msra.mxu0 %v1327
  %1356 = vmatpush.msra.mxu0 %v1326
  %1357 = vmatmul.f32.gmra.mxu0 %v1336
  %v1358 = vpop.f32.mrf.mxu0
  %v1359 = vadd.f32 %v1333, %v1358
  %1360 = vmatmul.f32.gmra.mxu0 %v1339
  %v1361 = vpop.f32.mrf.mxu0
  %v1362 = vadd.f32 %v1333, %v1361
  %1363 = vdwg.mxu0
  %s1364 = scalar_lea.vmem %s3, 544
  %v1365 = vld [vmem:[%s1364] sm:$0xff]
  %v1366 = vld [vmem:[%s1364 + $0x8] sm:$0xff]
  %v1367 = vld [vmem:[%s1364 + $0x10] sm:$0xff]
  %v1368 = vld [vmem:[%s1364 + $0x18] sm:$0xff]
  %s1369 = scalar_lea.vmem %s4, 16
  %v1370 = vld [vmem:[%s1369] sm:$0x1]
  %v1372 = vperm.slane %v1370, 0
  %1374 = vmatpush.msra.mxu0 0.0
  %1375 = vmatpush.msra.mxu0 0.0
  %1376 = vmatpush.msra.mxu0 0.0
  %1377 = vmatpush.msra.mxu0 0.0
  %1378 = vmatpush.msra.mxu0 0.0
  %1379 = vmatpush.msra.mxu0 0.0
  %1380 = vmatpush.msra.mxu0 0.0
  %1381 = vmatpush.msra.mxu0 0.0
  %1382 = vmatpush.msra.mxu0 0.0
  %1383 = vmatpush.msra.mxu0 0.0
  %1384 = vmatpush.msra.mxu0 0.0
  %1385 = vmatpush.msra.mxu0 0.0
  %1386 = vmatpush.msra.mxu0 %v1368
  %1387 = vmatpush.msra.mxu0 %v1367
  %1388 = vmatpush.msra.mxu0 %v1366
  %1389 = vmatpush.msra.mxu0 %v1365
  %1390 = vmatmul.f32.gmra.mxu0 %v1336
  %v1391 = vpop.f32.mrf.mxu0
  %v1392 = vadd.f32 %v1372, %v1391
  %1393 = vmatmul.f32.gmra.mxu0 %v1339
  %v1394 = vpop.f32.mrf.mxu0
  %v1395 = vadd.f32 %v1372, %v1394
  %1396 = vdwg.mxu0
  %s1397 = scalar_lea.vmem %s3, 576
  %v1398 = vld [vmem:[%s1397] sm:$0xff]
  %v1399 = vld [vmem:[%s1397 + $0x8] sm:$0xff]
  %v1400 = vld [vmem:[%s1397 + $0x10] sm:$0xff]
  %v1401 = vld [vmem:[%s1397 + $0x18] sm:$0xff]
  %s1402 = scalar_lea.vmem %s4, 20
  %v1403 = vld [vmem:[%s1402] sm:$0x1]
  %v1405 = vperm.slane %v1403, 0
  %1407 = vmatpush.msra.mxu0 0.0
  %1408 = vmatpush.msra.mxu0 0.0
  %1409 = vmatpush.msra.mxu0 0.0
  %1410 = vmatpush.msra.mxu0 0.0
  %1411 = vmatpush.msra.mxu0 0.0
  %1412 = vmatpush.msra.mxu0 0.0
  %1413 = vmatpush.msra.mxu0 0.0
  %1414 = vmatpush.msra.mxu0 0.0
  %1415 = vmatpush.msra.mxu0 0.0
  %1416 = vmatpush.msra.mxu0 0.0
  %1417 = vmatpush.msra.mxu0 0.0
  %1418 = vmatpush.msra.mxu0 0.0
  %1419 = vmatpush.msra.mxu0 %v1401
  %1420 = vmatpush.msra.mxu0 %v1400
  %1421 = vmatpush.msra.mxu0 %v1399
  %1422 = vmatpush.msra.mxu0 %v1398
  %1423 = vmatmul.f32.gmra.mxu0 %v1336
  %v1424 = vpop.f32.mrf.mxu0
  %v1425 = vadd.f32 %v1405, %v1424
  %1426 = vmatmul.f32.gmra.mxu0 %v1339
  %v1427 = vpop.f32.mrf.mxu0
  %v1428 = vadd.f32 %v1405, %v1427
  %1429 = vdwg.mxu0
  %v1431 = vsel %vm139, %v1359, 0
  %v1434 = vsel %vm139, %v1392, 0
  %1436 = vmatpush.xpose.msra.mxu0 0.0
  %1437 = vmatpush.xpose.msra.mxu0 0.0
  %1438 = vmatpush.xpose.msra.mxu0 0.0
  %1439 = vmatpush.xpose.msra.mxu0 0.0
  %1440 = vmatpush.xpose.msra.mxu0 0.0
  %1441 = vmatpush.xpose.msra.mxu0 0.0
  %1442 = vmatpush.xpose.msra.mxu0 0.0
  %1443 = vmatpush.xpose.msra.mxu0 0.0
  %1444 = vmatpush.xpose.msra.mxu0 0.0
  %1445 = vmatpush.xpose.msra.mxu0 0.0
  %1446 = vmatpush.xpose.msra.mxu0 0.0
  %1447 = vmatpush.xpose.msra.mxu0 0.0
  %1448 = vmatpush.xpose.msra.mxu0 0.0
  %1449 = vmatpush.xpose.msra.mxu0 0.0
  %1450 = vmatpush.xpose.msra.mxu0 0.0
  %1451 = vmatpush.xpose.msra.mxu0 %v1434
  %1452 = vmatmul.f32.gmra.mxu0 %v1431
  %v1453 = vpop.f32.mrf.mxu0
  %v1454 = vadd.f32 0.0, %v1453
  %1455 = vdwg.mxu0
  %v1457 = vsel %vm139, %v1362, 0
  %v1460 = vsel %vm139, %v1395, 0
  %1462 = vmatpush.xpose.msra.mxu0 0.0
  %1463 = vmatpush.xpose.msra.mxu0 0.0
  %1464 = vmatpush.xpose.msra.mxu0 0.0
  %1465 = vmatpush.xpose.msra.mxu0 0.0
  %1466 = vmatpush.xpose.msra.mxu0 0.0
  %1467 = vmatpush.xpose.msra.mxu0 0.0
  %1468 = vmatpush.xpose.msra.mxu0 0.0
  %1469 = vmatpush.xpose.msra.mxu0 0.0
  %1470 = vmatpush.xpose.msra.mxu0 0.0
  %1471 = vmatpush.xpose.msra.mxu0 0.0
  %1472 = vmatpush.xpose.msra.mxu0 0.0
  %1473 = vmatpush.xpose.msra.mxu0 0.0
  %1474 = vmatpush.xpose.msra.mxu0 0.0
  %1475 = vmatpush.xpose.msra.mxu0 0.0
  %1476 = vmatpush.xpose.msra.mxu0 0.0
  %1477 = vmatpush.xpose.msra.mxu0 %v1460
  %1478 = vmatmul.f32.gmra.mxu0 %v1457
  %v1479 = vpop.f32.mrf.mxu0
  %v1480 = vadd.f32 0.0, %v1479
  %1481 = vdwg.mxu0
  %v1482 = vsel %vm139, %v1454, -inf
  %1483 = vmax.xlane.f32.xlu0 %v1482
  %v1484 = vpop.xlane.xlu0 %1483
  %v1485 = vsel %vm139, %v1480, -inf
  %1486 = vmax.xlane.f32.xlu0 %v1485
  %v1487 = vpop.xlane.xlu0 %1486
  %v1488 = vsub.f32 %v1454, %v1484
  %v1489 = vsub.f32 %v1480, %v1487
  %v1490 = vmul.f32 %v1488, 1.442695
  %v1491 = vpow.pop %v1490
  %v1492 = vmul.f32 %v1489, 1.442695
  %v1493 = vpow.pop %v1492
  %v1494 = vsel %vm139, %v1491, 0.0
  %1495 = vadd.xlane.f32.xlu0 %v1494
  %v1496 = vpop.xlane.xlu0 %1495
  %v1497 = vsel %vm139, %v1493, 0.0
  %1498 = vadd.xlane.f32.xlu0 %v1497
  %v1499 = vpop.xlane.xlu0 %1498
  %v1500 = vrcp.pop %v1496
  %v1501 = vrcp.pop %v1499
  %v1502 = vmul.f32 %v1491, %v1500
  %v1503 = vmul.f32 %v1493, %v1501
  %v1505 = vsel %vm139, %v1502, 0
  %1507 = vmatpush.msra.mxu0 0.0
  %1508 = vmatpush.msra.mxu0 0.0
  %1509 = vmatpush.msra.mxu0 0.0
  %1510 = vmatpush.msra.mxu0 0.0
  %1511 = vmatpush.msra.mxu0 0.0
  %1512 = vmatpush.msra.mxu0 0.0
  %1513 = vmatpush.msra.mxu0 0.0
  %1514 = vmatpush.msra.mxu0 0.0
  %1515 = vmatpush.msra.mxu0 0.0
  %1516 = vmatpush.msra.mxu0 0.0
  %1517 = vmatpush.msra.mxu0 0.0
  %1518 = vmatpush.msra.mxu0 0.0
  %1519 = vmatpush.msra.mxu0 0.0
  %1520 = vmatpush.msra.mxu0 0.0
  %1521 = vmatpush.msra.mxu0 0.0
  %1522 = vmatpush.msra.mxu0 %v1425
  %1523 = vmatmul.f32.gmra.mxu0 %v1505
  %v1524 = vpop.f32.mrf.mxu0
  %v1525 = vadd.f32 0.0, %v1524
  %1526 = vdwg.mxu0
  %v1528 = vsel %vm139, %v1503, 0
  %1530 = vmatpush.msra.mxu0 0.0
  %1531 = vmatpush.msra.mxu0 0.0
  %1532 = vmatpush.msra.mxu0 0.0
  %1533 = vmatpush.msra.mxu0 0.0
  %1534 = vmatpush.msra.mxu0 0.0
  %1535 = vmatpush.msra.mxu0 0.0
  %1536 = vmatpush.msra.mxu0 0.0
  %1537 = vmatpush.msra.mxu0 0.0
  %1538 = vmatpush.msra.mxu0 0.0
  %1539 = vmatpush.msra.mxu0 0.0
  %1540 = vmatpush.msra.mxu0 0.0
  %1541 = vmatpush.msra.mxu0 0.0
  %1542 = vmatpush.msra.mxu0 0.0
  %1543 = vmatpush.msra.mxu0 0.0
  %1544 = vmatpush.msra.mxu0 0.0
  %1545 = vmatpush.msra.mxu0 %v1428
  %1546 = vmatmul.f32.gmra.mxu0 %v1528
  %v1547 = vpop.f32.mrf.mxu0
  %v1548 = vadd.f32 0.0, %v1547
  %1549 = vdwg.mxu0
  %s1550 = scalar_lea.vmem %s3, 608
  %v1551 = vld [vmem:[%s1550] sm:$0xff]
  %v1552 = vld [vmem:[%s1550 + $0x8] sm:$0xff]
  %v1553 = vld [vmem:[%s1550 + $0x10] sm:$0xff]
  %v1554 = vld [vmem:[%s1550 + $0x18] sm:$0xff]
  %s1555 = scalar_lea.vmem %s3, 640
  %v1556 = vld [vmem:[%s1555] sm:$0xff]
  %v1557 = vld [vmem:[%s1555 + $0x8] sm:$0xff]
  %v1558 = vld [vmem:[%s1555 + $0x10] sm:$0xff]
  %v1559 = vld [vmem:[%s1555 + $0x18] sm:$0xff]
  %s1560 = scalar_lea.vmem %s4, 13
  %v1561 = vld [vmem:[%s1560] sm:$0x1]
  %v1563 = vperm.slane %v1561, 0
  %1565 = vmatpush.msra.mxu0 0.0
  %1566 = vmatpush.msra.mxu0 0.0
  %1567 = vmatpush.msra.mxu0 0.0
  %1568 = vmatpush.msra.mxu0 0.0
  %1569 = vmatpush.msra.mxu0 0.0
  %1570 = vmatpush.msra.mxu0 0.0
  %1571 = vmatpush.msra.mxu0 0.0
  %1572 = vmatpush.msra.mxu0 0.0
  %1573 = vmatpush.msra.mxu0 0.0
  %1574 = vmatpush.msra.mxu0 0.0
  %1575 = vmatpush.msra.mxu0 0.0
  %1576 = vmatpush.msra.mxu0 0.0
  %1577 = vmatpush.msra.mxu0 %v1559
  %1578 = vmatpush.msra.mxu0 %v1558
  %1579 = vmatpush.msra.mxu0 %v1557
  %1580 = vmatpush.msra.mxu0 %v1556
  %1581 = vmatmul.f32.gmra.mxu0 %v1336
  %v1582 = vpop.f32.mrf.mxu0
  %v1583 = vadd.f32 %v1563, %v1582
  %1584 = vmatmul.f32.gmra.mxu0 %v1339
  %v1585 = vpop.f32.mrf.mxu0
  %v1586 = vadd.f32 %v1563, %v1585
  %1587 = vdwg.mxu0
  %s1588 = scalar_lea.vmem %s3, 672
  %v1589 = vld [vmem:[%s1588] sm:$0xff]
  %v1590 = vld [vmem:[%s1588 + $0x8] sm:$0xff]
  %v1591 = vld [vmem:[%s1588 + $0x10] sm:$0xff]
  %v1592 = vld [vmem:[%s1588 + $0x18] sm:$0xff]
  %s1593 = scalar_lea.vmem %s4, 17
  %v1594 = vld [vmem:[%s1593] sm:$0x1]
  %v1596 = vperm.slane %v1594, 0
  %1598 = vmatpush.msra.mxu0 0.0
  %1599 = vmatpush.msra.mxu0 0.0
  %1600 = vmatpush.msra.mxu0 0.0
  %1601 = vmatpush.msra.mxu0 0.0
  %1602 = vmatpush.msra.mxu0 0.0
  %1603 = vmatpush.msra.mxu0 0.0
  %1604 = vmatpush.msra.mxu0 0.0
  %1605 = vmatpush.msra.mxu0 0.0
  %1606 = vmatpush.msra.mxu0 0.0
  %1607 = vmatpush.msra.mxu0 0.0
  %1608 = vmatpush.msra.mxu0 0.0
  %1609 = vmatpush.msra.mxu0 0.0
  %1610 = vmatpush.msra.mxu0 %v1592
  %1611 = vmatpush.msra.mxu0 %v1591
  %1612 = vmatpush.msra.mxu0 %v1590
  %1613 = vmatpush.msra.mxu0 %v1589
  %1614 = vmatmul.f32.gmra.mxu0 %v1336
  %v1615 = vpop.f32.mrf.mxu0
  %v1616 = vadd.f32 %v1596, %v1615
  %1617 = vmatmul.f32.gmra.mxu0 %v1339
  %v1618 = vpop.f32.mrf.mxu0
  %v1619 = vadd.f32 %v1596, %v1618
  %1620 = vdwg.mxu0
  %s1621 = scalar_lea.vmem %s3, 704
  %v1622 = vld [vmem:[%s1621] sm:$0xff]
  %v1623 = vld [vmem:[%s1621 + $0x8] sm:$0xff]
  %v1624 = vld [vmem:[%s1621 + $0x10] sm:$0xff]
  %v1625 = vld [vmem:[%s1621 + $0x18] sm:$0xff]
  %s1626 = scalar_lea.vmem %s4, 21
  %v1627 = vld [vmem:[%s1626] sm:$0x1]
  %v1629 = vperm.slane %v1627, 0
  %1631 = vmatpush.msra.mxu0 0.0
  %1632 = vmatpush.msra.mxu0 0.0
  %1633 = vmatpush.msra.mxu0 0.0
  %1634 = vmatpush.msra.mxu0 0.0
  %1635 = vmatpush.msra.mxu0 0.0
  %1636 = vmatpush.msra.mxu0 0.0
  %1637 = vmatpush.msra.mxu0 0.0
  %1638 = vmatpush.msra.mxu0 0.0
  %1639 = vmatpush.msra.mxu0 0.0
  %1640 = vmatpush.msra.mxu0 0.0
  %1641 = vmatpush.msra.mxu0 0.0
  %1642 = vmatpush.msra.mxu0 0.0
  %1643 = vmatpush.msra.mxu0 %v1625
  %1644 = vmatpush.msra.mxu0 %v1624
  %1645 = vmatpush.msra.mxu0 %v1623
  %1646 = vmatpush.msra.mxu0 %v1622
  %1647 = vmatmul.f32.gmra.mxu0 %v1336
  %v1648 = vpop.f32.mrf.mxu0
  %v1649 = vadd.f32 %v1629, %v1648
  %1650 = vmatmul.f32.gmra.mxu0 %v1339
  %v1651 = vpop.f32.mrf.mxu0
  %v1652 = vadd.f32 %v1629, %v1651
  %1653 = vdwg.mxu0
  %v1655 = vsel %vm139, %v1583, 0
  %v1658 = vsel %vm139, %v1616, 0
  %1660 = vmatpush.xpose.msra.mxu0 0.0
  %1661 = vmatpush.xpose.msra.mxu0 0.0
  %1662 = vmatpush.xpose.msra.mxu0 0.0
  %1663 = vmatpush.xpose.msra.mxu0 0.0
  %1664 = vmatpush.xpose.msra.mxu0 0.0
  %1665 = vmatpush.xpose.msra.mxu0 0.0
  %1666 = vmatpush.xpose.msra.mxu0 0.0
  %1667 = vmatpush.xpose.msra.mxu0 0.0
  %1668 = vmatpush.xpose.msra.mxu0 0.0
  %1669 = vmatpush.xpose.msra.mxu0 0.0
  %1670 = vmatpush.xpose.msra.mxu0 0.0
  %1671 = vmatpush.xpose.msra.mxu0 0.0
  %1672 = vmatpush.xpose.msra.mxu0 0.0
  %1673 = vmatpush.xpose.msra.mxu0 0.0
  %1674 = vmatpush.xpose.msra.mxu0 0.0
  %1675 = vmatpush.xpose.msra.mxu0 %v1658
  %1676 = vmatmul.f32.gmra.mxu0 %v1655
  %v1677 = vpop.f32.mrf.mxu0
  %v1678 = vadd.f32 0.0, %v1677
  %1679 = vdwg.mxu0
  %v1681 = vsel %vm139, %v1586, 0
  %v1684 = vsel %vm139, %v1619, 0
  %1686 = vmatpush.xpose.msra.mxu0 0.0
  %1687 = vmatpush.xpose.msra.mxu0 0.0
  %1688 = vmatpush.xpose.msra.mxu0 0.0
  %1689 = vmatpush.xpose.msra.mxu0 0.0
  %1690 = vmatpush.xpose.msra.mxu0 0.0
  %1691 = vmatpush.xpose.msra.mxu0 0.0
  %1692 = vmatpush.xpose.msra.mxu0 0.0
  %1693 = vmatpush.xpose.msra.mxu0 0.0
  %1694 = vmatpush.xpose.msra.mxu0 0.0
  %1695 = vmatpush.xpose.msra.mxu0 0.0
  %1696 = vmatpush.xpose.msra.mxu0 0.0
  %1697 = vmatpush.xpose.msra.mxu0 0.0
  %1698 = vmatpush.xpose.msra.mxu0 0.0
  %1699 = vmatpush.xpose.msra.mxu0 0.0
  %1700 = vmatpush.xpose.msra.mxu0 0.0
  %1701 = vmatpush.xpose.msra.mxu0 %v1684
  %1702 = vmatmul.f32.gmra.mxu0 %v1681
  %v1703 = vpop.f32.mrf.mxu0
  %v1704 = vadd.f32 0.0, %v1703
  %1705 = vdwg.mxu0
  %v1706 = vsel %vm139, %v1678, -inf
  %1707 = vmax.xlane.f32.xlu0 %v1706
  %v1708 = vpop.xlane.xlu0 %1707
  %v1709 = vsel %vm139, %v1704, -inf
  %1710 = vmax.xlane.f32.xlu0 %v1709
  %v1711 = vpop.xlane.xlu0 %1710
  %v1712 = vsub.f32 %v1678, %v1708
  %v1713 = vsub.f32 %v1704, %v1711
  %v1714 = vmul.f32 %v1712, 1.442695
  %v1715 = vpow.pop %v1714
  %v1716 = vmul.f32 %v1713, 1.442695
  %v1717 = vpow.pop %v1716
  %v1718 = vsel %vm139, %v1715, 0.0
  %1719 = vadd.xlane.f32.xlu0 %v1718
  %v1720 = vpop.xlane.xlu0 %1719
  %v1721 = vsel %vm139, %v1717, 0.0
  %1722 = vadd.xlane.f32.xlu0 %v1721
  %v1723 = vpop.xlane.xlu0 %1722
  %v1724 = vrcp.pop %v1720
  %v1725 = vrcp.pop %v1723
  %v1726 = vmul.f32 %v1715, %v1724
  %v1727 = vmul.f32 %v1717, %v1725
  %v1729 = vsel %vm139, %v1726, 0
  %1731 = vmatpush.msra.mxu0 0.0
  %1732 = vmatpush.msra.mxu0 0.0
  %1733 = vmatpush.msra.mxu0 0.0
  %1734 = vmatpush.msra.mxu0 0.0
  %1735 = vmatpush.msra.mxu0 0.0
  %1736 = vmatpush.msra.mxu0 0.0
  %1737 = vmatpush.msra.mxu0 0.0
  %1738 = vmatpush.msra.mxu0 0.0
  %1739 = vmatpush.msra.mxu0 0.0
  %1740 = vmatpush.msra.mxu0 0.0
  %1741 = vmatpush.msra.mxu0 0.0
  %1742 = vmatpush.msra.mxu0 0.0
  %1743 = vmatpush.msra.mxu0 0.0
  %1744 = vmatpush.msra.mxu0 0.0
  %1745 = vmatpush.msra.mxu0 0.0
  %1746 = vmatpush.msra.mxu0 %v1649
  %1747 = vmatmul.f32.gmra.mxu0 %v1729
  %v1748 = vpop.f32.mrf.mxu0
  %v1749 = vadd.f32 0.0, %v1748
  %1750 = vdwg.mxu0
  %v1752 = vsel %vm139, %v1727, 0
  %1754 = vmatpush.msra.mxu0 0.0
  %1755 = vmatpush.msra.mxu0 0.0
  %1756 = vmatpush.msra.mxu0 0.0
  %1757 = vmatpush.msra.mxu0 0.0
  %1758 = vmatpush.msra.mxu0 0.0
  %1759 = vmatpush.msra.mxu0 0.0
  %1760 = vmatpush.msra.mxu0 0.0
  %1761 = vmatpush.msra.mxu0 0.0
  %1762 = vmatpush.msra.mxu0 0.0
  %1763 = vmatpush.msra.mxu0 0.0
  %1764 = vmatpush.msra.mxu0 0.0
  %1765 = vmatpush.msra.mxu0 0.0
  %1766 = vmatpush.msra.mxu0 0.0
  %1767 = vmatpush.msra.mxu0 0.0
  %1768 = vmatpush.msra.mxu0 0.0
  %1769 = vmatpush.msra.mxu0 %v1652
  %1770 = vmatmul.f32.gmra.mxu0 %v1752
  %v1771 = vpop.f32.mrf.mxu0
  %v1772 = vadd.f32 0.0, %v1771
  %1773 = vdwg.mxu0
  %s1774 = scalar_lea.vmem %s3, 736
  %v1775 = vld [vmem:[%s1774] sm:$0xff]
  %v1776 = vld [vmem:[%s1774 + $0x8] sm:$0xff]
  %v1777 = vld [vmem:[%s1774 + $0x10] sm:$0xff]
  %v1778 = vld [vmem:[%s1774 + $0x18] sm:$0xff]
  %v1780 = vsel %vm139, %v1749, 0
  %v1783 = vsel %vm139, %v1772, 0
  %v1786 = vsel %vm139, %v1775, 0
  %v1789 = vsel %vm139, %v1776, 0
  %v1792 = vsel %vm139, %v1777, 0
  %v1795 = vsel %vm139, %v1778, 0
  %1797 = vmatpush.xpose.msra.mxu0 0.0
  %1798 = vmatpush.xpose.msra.mxu0 0.0
  %1799 = vmatpush.xpose.msra.mxu0 0.0
  %1800 = vmatpush.xpose.msra.mxu0 0.0
  %1801 = vmatpush.xpose.msra.mxu0 0.0
  %1802 = vmatpush.xpose.msra.mxu0 0.0
  %1803 = vmatpush.xpose.msra.mxu0 0.0
  %1804 = vmatpush.xpose.msra.mxu0 0.0
  %1805 = vmatpush.xpose.msra.mxu0 0.0
  %1806 = vmatpush.xpose.msra.mxu0 0.0
  %1807 = vmatpush.xpose.msra.mxu0 0.0
  %1808 = vmatpush.xpose.msra.mxu0 0.0
  %1809 = vmatpush.xpose.msra.mxu0 %v1795
  %1810 = vmatpush.xpose.msra.mxu0 %v1792
  %1811 = vmatpush.xpose.msra.mxu0 %v1789
  %1812 = vmatpush.xpose.msra.mxu0 %v1786
  %1813 = vmatmul.f32.gmra.mxu0 %v1780
  %v1814 = vpop.f32.mrf.mxu0
  %v1815 = vadd.f32 0.0, %v1814
  %1816 = vmatmul.f32.gmra.mxu0 %v1783
  %v1817 = vpop.f32.mrf.mxu0
  %v1818 = vadd.f32 0.0, %v1817
  %1819 = vdwg.mxu0
  %v1821 = vsel %vm139, %v1525, 0
  %v1824 = vsel %vm139, %v1548, 0
  %v1827 = vsel %vm139, %v1551, 0
  %v1830 = vsel %vm139, %v1552, 0
  %v1833 = vsel %vm139, %v1553, 0
  %v1836 = vsel %vm139, %v1554, 0
  %1838 = vmatpush.xpose.msra.mxu0 0.0
  %1839 = vmatpush.xpose.msra.mxu0 0.0
  %1840 = vmatpush.xpose.msra.mxu0 0.0
  %1841 = vmatpush.xpose.msra.mxu0 0.0
  %1842 = vmatpush.xpose.msra.mxu0 0.0
  %1843 = vmatpush.xpose.msra.mxu0 0.0
  %1844 = vmatpush.xpose.msra.mxu0 0.0
  %1845 = vmatpush.xpose.msra.mxu0 0.0
  %1846 = vmatpush.xpose.msra.mxu0 0.0
  %1847 = vmatpush.xpose.msra.mxu0 0.0
  %1848 = vmatpush.xpose.msra.mxu0 0.0
  %1849 = vmatpush.xpose.msra.mxu0 0.0
  %1850 = vmatpush.xpose.msra.mxu0 %v1836
  %1851 = vmatpush.xpose.msra.mxu0 %v1833
  %1852 = vmatpush.xpose.msra.mxu0 %v1830
  %1853 = vmatpush.xpose.msra.mxu0 %v1827
  %1854 = vmatmul.f32.gmra.mxu0 %v1821
  %v1855 = vpop.f32.mrf.mxu0
  %v1856 = vadd.f32 %v1815, %v1855
  %1857 = vmatmul.f32.gmra.mxu0 %v1824
  %v1858 = vpop.f32.mrf.mxu0
  %v1859 = vadd.f32 %v1818, %v1858
  %1860 = vdwg.mxu0
  %s1861 = scalar_lea.vmem %s3, 768
  %v1862 = vld [vmem:[%s1861] sm:$0xff]
  %v1863 = vld [vmem:[%s1861 + $0x8] sm:$0xff]
  %v1864 = vld [vmem:[%s1861 + $0x10] sm:$0xff]
  %v1865 = vld [vmem:[%s1861 + $0x18] sm:$0xff]
  %s1866 = scalar_lea.vmem %s4, 14
  %v1867 = vld [vmem:[%s1866] sm:$0x1]
  %v1869 = vperm.slane %v1867, 0
  %1871 = vmatpush.msra.mxu0 0.0
  %1872 = vmatpush.msra.mxu0 0.0
  %1873 = vmatpush.msra.mxu0 0.0
  %1874 = vmatpush.msra.mxu0 0.0
  %1875 = vmatpush.msra.mxu0 0.0
  %1876 = vmatpush.msra.mxu0 0.0
  %1877 = vmatpush.msra.mxu0 0.0
  %1878 = vmatpush.msra.mxu0 0.0
  %1879 = vmatpush.msra.mxu0 0.0
  %1880 = vmatpush.msra.mxu0 0.0
  %1881 = vmatpush.msra.mxu0 0.0
  %1882 = vmatpush.msra.mxu0 0.0
  %1883 = vmatpush.msra.mxu0 %v1865
  %1884 = vmatpush.msra.mxu0 %v1864
  %1885 = vmatpush.msra.mxu0 %v1863
  %1886 = vmatpush.msra.mxu0 %v1862
  %1887 = vmatmul.f32.gmra.mxu0 %v1336
  %v1888 = vpop.f32.mrf.mxu0
  %v1889 = vadd.f32 %v1869, %v1888
  %1890 = vmatmul.f32.gmra.mxu0 %v1339
  %v1891 = vpop.f32.mrf.mxu0
  %v1892 = vadd.f32 %v1869, %v1891
  %1893 = vdwg.mxu0
  %s1894 = scalar_lea.vmem %s3, 800
  %v1895 = vld [vmem:[%s1894] sm:$0xff]
  %v1896 = vld [vmem:[%s1894 + $0x8] sm:$0xff]
  %v1897 = vld [vmem:[%s1894 + $0x10] sm:$0xff]
  %v1898 = vld [vmem:[%s1894 + $0x18] sm:$0xff]
  %s1899 = scalar_lea.vmem %s4, 18
  %v1900 = vld [vmem:[%s1899] sm:$0x1]
  %v1902 = vperm.slane %v1900, 0
  %1904 = vmatpush.msra.mxu0 0.0
  %1905 = vmatpush.msra.mxu0 0.0
  %1906 = vmatpush.msra.mxu0 0.0
  %1907 = vmatpush.msra.mxu0 0.0
  %1908 = vmatpush.msra.mxu0 0.0
  %1909 = vmatpush.msra.mxu0 0.0
  %1910 = vmatpush.msra.mxu0 0.0
  %1911 = vmatpush.msra.mxu0 0.0
  %1912 = vmatpush.msra.mxu0 0.0
  %1913 = vmatpush.msra.mxu0 0.0
  %1914 = vmatpush.msra.mxu0 0.0
  %1915 = vmatpush.msra.mxu0 0.0
  %1916 = vmatpush.msra.mxu0 %v1898
  %1917 = vmatpush.msra.mxu0 %v1897
  %1918 = vmatpush.msra.mxu0 %v1896
  %1919 = vmatpush.msra.mxu0 %v1895
  %1920 = vmatmul.f32.gmra.mxu0 %v1336
  %v1921 = vpop.f32.mrf.mxu0
  %v1922 = vadd.f32 %v1902, %v1921
  %1923 = vmatmul.f32.gmra.mxu0 %v1339
  %v1924 = vpop.f32.mrf.mxu0
  %v1925 = vadd.f32 %v1902, %v1924
  %1926 = vdwg.mxu0
  %s1927 = scalar_lea.vmem %s3, 832
  %v1928 = vld [vmem:[%s1927] sm:$0xff]
  %v1929 = vld [vmem:[%s1927 + $0x8] sm:$0xff]
  %v1930 = vld [vmem:[%s1927 + $0x10] sm:$0xff]
  %v1931 = vld [vmem:[%s1927 + $0x18] sm:$0xff]
  %s1932 = scalar_lea.vmem %s4, 22
  %v1933 = vld [vmem:[%s1932] sm:$0x1]
  %v1935 = vperm.slane %v1933, 0
  %1937 = vmatpush.msra.mxu0 0.0
  %1938 = vmatpush.msra.mxu0 0.0
  %1939 = vmatpush.msra.mxu0 0.0
  %1940 = vmatpush.msra.mxu0 0.0
  %1941 = vmatpush.msra.mxu0 0.0
  %1942 = vmatpush.msra.mxu0 0.0
  %1943 = vmatpush.msra.mxu0 0.0
  %1944 = vmatpush.msra.mxu0 0.0
  %1945 = vmatpush.msra.mxu0 0.0
  %1946 = vmatpush.msra.mxu0 0.0
  %1947 = vmatpush.msra.mxu0 0.0
  %1948 = vmatpush.msra.mxu0 0.0
  %1949 = vmatpush.msra.mxu0 %v1931
  %1950 = vmatpush.msra.mxu0 %v1930
  %1951 = vmatpush.msra.mxu0 %v1929
  %1952 = vmatpush.msra.mxu0 %v1928
  %1953 = vmatmul.f32.gmra.mxu0 %v1336
  %v1954 = vpop.f32.mrf.mxu0
  %v1955 = vadd.f32 %v1935, %v1954
  %1956 = vmatmul.f32.gmra.mxu0 %v1339
  %v1957 = vpop.f32.mrf.mxu0
  %v1958 = vadd.f32 %v1935, %v1957
  %1959 = vdwg.mxu0
  %v1961 = vsel %vm139, %v1889, 0
  %v1964 = vsel %vm139, %v1922, 0
  %1966 = vmatpush.xpose.msra.mxu0 0.0
  %1967 = vmatpush.xpose.msra.mxu0 0.0
  %1968 = vmatpush.xpose.msra.mxu0 0.0
  %1969 = vmatpush.xpose.msra.mxu0 0.0
  %1970 = vmatpush.xpose.msra.mxu0 0.0
  %1971 = vmatpush.xpose.msra.mxu0 0.0
  %1972 = vmatpush.xpose.msra.mxu0 0.0
  %1973 = vmatpush.xpose.msra.mxu0 0.0
  %1974 = vmatpush.xpose.msra.mxu0 0.0
  %1975 = vmatpush.xpose.msra.mxu0 0.0
  %1976 = vmatpush.xpose.msra.mxu0 0.0
  %1977 = vmatpush.xpose.msra.mxu0 0.0
  %1978 = vmatpush.xpose.msra.mxu0 0.0
  %1979 = vmatpush.xpose.msra.mxu0 0.0
  %1980 = vmatpush.xpose.msra.mxu0 0.0
  %1981 = vmatpush.xpose.msra.mxu0 %v1964
  %1982 = vmatmul.f32.gmra.mxu0 %v1961
  %v1983 = vpop.f32.mrf.mxu0
  %v1984 = vadd.f32 0.0, %v1983
  %1985 = vdwg.mxu0
  %v1987 = vsel %vm139, %v1892, 0
  %v1990 = vsel %vm139, %v1925, 0
  %1992 = vmatpush.xpose.msra.mxu0 0.0
  %1993 = vmatpush.xpose.msra.mxu0 0.0
  %1994 = vmatpush.xpose.msra.mxu0 0.0
  %1995 = vmatpush.xpose.msra.mxu0 0.0
  %1996 = vmatpush.xpose.msra.mxu0 0.0
  %1997 = vmatpush.xpose.msra.mxu0 0.0
  %1998 = vmatpush.xpose.msra.mxu0 0.0
  %1999 = vmatpush.xpose.msra.mxu0 0.0
  %2000 = vmatpush.xpose.msra.mxu0 0.0
  %2001 = vmatpush.xpose.msra.mxu0 0.0
  %2002 = vmatpush.xpose.msra.mxu0 0.0
  %2003 = vmatpush.xpose.msra.mxu0 0.0
  %2004 = vmatpush.xpose.msra.mxu0 0.0
  %2005 = vmatpush.xpose.msra.mxu0 0.0
  %2006 = vmatpush.xpose.msra.mxu0 0.0
  %2007 = vmatpush.xpose.msra.mxu0 %v1990
  %2008 = vmatmul.f32.gmra.mxu0 %v1987
  %v2009 = vpop.f32.mrf.mxu0
  %v2010 = vadd.f32 0.0, %v2009
  %2011 = vdwg.mxu0
  %v2012 = vsel %vm139, %v1984, -inf
  %2013 = vmax.xlane.f32.xlu0 %v2012
  %v2014 = vpop.xlane.xlu0 %2013
  %v2015 = vsel %vm139, %v2010, -inf
  %2016 = vmax.xlane.f32.xlu0 %v2015
  %v2017 = vpop.xlane.xlu0 %2016
  %v2018 = vsub.f32 %v1984, %v2014
  %v2019 = vsub.f32 %v2010, %v2017
  %v2020 = vmul.f32 %v2018, 1.442695
  %v2021 = vpow.pop %v2020
  %v2022 = vmul.f32 %v2019, 1.442695
  %v2023 = vpow.pop %v2022
  %v2024 = vsel %vm139, %v2021, 0.0
  %2025 = vadd.xlane.f32.xlu0 %v2024
  %v2026 = vpop.xlane.xlu0 %2025
  %v2027 = vsel %vm139, %v2023, 0.0
  %2028 = vadd.xlane.f32.xlu0 %v2027
  %v2029 = vpop.xlane.xlu0 %2028
  %v2030 = vrcp.pop %v2026
  %v2031 = vrcp.pop %v2029
  %v2032 = vmul.f32 %v2021, %v2030
  %v2033 = vmul.f32 %v2023, %v2031
  %v2035 = vsel %vm139, %v2032, 0
  %2037 = vmatpush.msra.mxu0 0.0
  %2038 = vmatpush.msra.mxu0 0.0
  %2039 = vmatpush.msra.mxu0 0.0
  %2040 = vmatpush.msra.mxu0 0.0
  %2041 = vmatpush.msra.mxu0 0.0
  %2042 = vmatpush.msra.mxu0 0.0
  %2043 = vmatpush.msra.mxu0 0.0
  %2044 = vmatpush.msra.mxu0 0.0
  %2045 = vmatpush.msra.mxu0 0.0
  %2046 = vmatpush.msra.mxu0 0.0
  %2047 = vmatpush.msra.mxu0 0.0
  %2048 = vmatpush.msra.mxu0 0.0
  %2049 = vmatpush.msra.mxu0 0.0
  %2050 = vmatpush.msra.mxu0 0.0
  %2051 = vmatpush.msra.mxu0 0.0
  %2052 = vmatpush.msra.mxu0 %v1955
  %2053 = vmatmul.f32.gmra.mxu0 %v2035
  %v2054 = vpop.f32.mrf.mxu0
  %v2055 = vadd.f32 0.0, %v2054
  %2056 = vdwg.mxu0
  %v2058 = vsel %vm139, %v2033, 0
  %2060 = vmatpush.msra.mxu0 0.0
  %2061 = vmatpush.msra.mxu0 0.0
  %2062 = vmatpush.msra.mxu0 0.0
  %2063 = vmatpush.msra.mxu0 0.0
  %2064 = vmatpush.msra.mxu0 0.0
  %2065 = vmatpush.msra.mxu0 0.0
  %2066 = vmatpush.msra.mxu0 0.0
  %2067 = vmatpush.msra.mxu0 0.0
  %2068 = vmatpush.msra.mxu0 0.0
  %2069 = vmatpush.msra.mxu0 0.0
  %2070 = vmatpush.msra.mxu0 0.0
  %2071 = vmatpush.msra.mxu0 0.0
  %2072 = vmatpush.msra.mxu0 0.0
  %2073 = vmatpush.msra.mxu0 0.0
  %2074 = vmatpush.msra.mxu0 0.0
  %2075 = vmatpush.msra.mxu0 %v1958
  %2076 = vmatmul.f32.gmra.mxu0 %v2058
  %v2077 = vpop.f32.mrf.mxu0
  %v2078 = vadd.f32 0.0, %v2077
  %2079 = vdwg.mxu0
  %s2080 = scalar_lea.vmem %s3, 864
  %v2081 = vld [vmem:[%s2080] sm:$0xff]
  %v2082 = vld [vmem:[%s2080 + $0x8] sm:$0xff]
  %v2083 = vld [vmem:[%s2080 + $0x10] sm:$0xff]
  %v2084 = vld [vmem:[%s2080 + $0x18] sm:$0xff]
  %v2086 = vsel %vm139, %v2055, 0
  %v2089 = vsel %vm139, %v2078, 0
  %v2092 = vsel %vm139, %v2081, 0
  %v2095 = vsel %vm139, %v2082, 0
  %v2098 = vsel %vm139, %v2083, 0
  %v2101 = vsel %vm139, %v2084, 0
  %2103 = vmatpush.xpose.msra.mxu0 0.0
  %2104 = vmatpush.xpose.msra.mxu0 0.0
  %2105 = vmatpush.xpose.msra.mxu0 0.0
  %2106 = vmatpush.xpose.msra.mxu0 0.0
  %2107 = vmatpush.xpose.msra.mxu0 0.0
  %2108 = vmatpush.xpose.msra.mxu0 0.0
  %2109 = vmatpush.xpose.msra.mxu0 0.0
  %2110 = vmatpush.xpose.msra.mxu0 0.0
  %2111 = vmatpush.xpose.msra.mxu0 0.0
  %2112 = vmatpush.xpose.msra.mxu0 0.0
  %2113 = vmatpush.xpose.msra.mxu0 0.0
  %2114 = vmatpush.xpose.msra.mxu0 0.0
  %2115 = vmatpush.xpose.msra.mxu0 %v2101
  %2116 = vmatpush.xpose.msra.mxu0 %v2098
  %2117 = vmatpush.xpose.msra.mxu0 %v2095
  %2118 = vmatpush.xpose.msra.mxu0 %v2092
  %2119 = vmatmul.f32.gmra.mxu0 %v2086
  %v2120 = vpop.f32.mrf.mxu0
  %v2121 = vadd.f32 0.0, %v2120
  %2122 = vmatmul.f32.gmra.mxu0 %v2089
  %v2123 = vpop.f32.mrf.mxu0
  %v2124 = vadd.f32 0.0, %v2123
  %2125 = vdwg.mxu0
  %v2126 = vadd.f32 %v1856, %v2121
  %v2127 = vadd.f32 %v1859, %v2124
  %s2128 = scalar_lea.vmem %s3, 896
  %v2129 = vld [vmem:[%s2128] sm:$0xff]
  %v2130 = vld [vmem:[%s2128 + $0x8] sm:$0xff]
  %v2131 = vld [vmem:[%s2128 + $0x10] sm:$0xff]
  %v2132 = vld [vmem:[%s2128 + $0x18] sm:$0xff]
  %s2133 = scalar_lea.vmem %s4, 15
  %v2134 = vld [vmem:[%s2133] sm:$0x1]
  %v2136 = vperm.slane %v2134, 0
  %2138 = vmatpush.msra.mxu0 0.0
  %2139 = vmatpush.msra.mxu0 0.0
  %2140 = vmatpush.msra.mxu0 0.0
  %2141 = vmatpush.msra.mxu0 0.0
  %2142 = vmatpush.msra.mxu0 0.0
  %2143 = vmatpush.msra.mxu0 0.0
  %2144 = vmatpush.msra.mxu0 0.0
  %2145 = vmatpush.msra.mxu0 0.0
  %2146 = vmatpush.msra.mxu0 0.0
  %2147 = vmatpush.msra.mxu0 0.0
  %2148 = vmatpush.msra.mxu0 0.0
  %2149 = vmatpush.msra.mxu0 0.0
  %2150 = vmatpush.msra.mxu0 %v2132
  %2151 = vmatpush.msra.mxu0 %v2131
  %2152 = vmatpush.msra.mxu0 %v2130
  %2153 = vmatpush.msra.mxu0 %v2129
  %2154 = vmatmul.f32.gmra.mxu0 %v1336
  %v2155 = vpop.f32.mrf.mxu0
  %v2156 = vadd.f32 %v2136, %v2155
  %2157 = vmatmul.f32.gmra.mxu0 %v1339
  %v2158 = vpop.f32.mrf.mxu0
  %v2159 = vadd.f32 %v2136, %v2158
  %2160 = vdwg.mxu0
  %s2161 = scalar_lea.vmem %s3, 928
  %v2162 = vld [vmem:[%s2161] sm:$0xff]
  %v2163 = vld [vmem:[%s2161 + $0x8] sm:$0xff]
  %v2164 = vld [vmem:[%s2161 + $0x10] sm:$0xff]
  %v2165 = vld [vmem:[%s2161 + $0x18] sm:$0xff]
  %s2166 = scalar_lea.vmem %s4, 19
  %v2167 = vld [vmem:[%s2166] sm:$0x1]
  %v2169 = vperm.slane %v2167, 0
  %2171 = vmatpush.msra.mxu0 0.0
  %2172 = vmatpush.msra.mxu0 0.0
  %2173 = vmatpush.msra.mxu0 0.0
  %2174 = vmatpush.msra.mxu0 0.0
  %2175 = vmatpush.msra.mxu0 0.0
  %2176 = vmatpush.msra.mxu0 0.0
  %2177 = vmatpush.msra.mxu0 0.0
  %2178 = vmatpush.msra.mxu0 0.0
  %2179 = vmatpush.msra.mxu0 0.0
  %2180 = vmatpush.msra.mxu0 0.0
  %2181 = vmatpush.msra.mxu0 0.0
  %2182 = vmatpush.msra.mxu0 0.0
  %2183 = vmatpush.msra.mxu0 %v2165
  %2184 = vmatpush.msra.mxu0 %v2164
  %2185 = vmatpush.msra.mxu0 %v2163
  %2186 = vmatpush.msra.mxu0 %v2162
  %2187 = vmatmul.f32.gmra.mxu0 %v1336
  %v2188 = vpop.f32.mrf.mxu0
  %v2189 = vadd.f32 %v2169, %v2188
  %2190 = vmatmul.f32.gmra.mxu0 %v1339
  %v2191 = vpop.f32.mrf.mxu0
  %v2192 = vadd.f32 %v2169, %v2191
  %2193 = vdwg.mxu0
  %s2194 = scalar_lea.vmem %s3, 960
  %v2195 = vld [vmem:[%s2194] sm:$0xff]
  %v2196 = vld [vmem:[%s2194 + $0x8] sm:$0xff]
  %v2197 = vld [vmem:[%s2194 + $0x10] sm:$0xff]
  %v2198 = vld [vmem:[%s2194 + $0x18] sm:$0xff]
  %s2199 = scalar_lea.vmem %s4, 23
  %v2200 = vld [vmem:[%s2199] sm:$0x1]
  %v2202 = vperm.slane %v2200, 0
  %2204 = vmatpush.msra.mxu0 0.0
  %2205 = vmatpush.msra.mxu0 0.0
  %2206 = vmatpush.msra.mxu0 0.0
  %2207 = vmatpush.msra.mxu0 0.0
  %2208 = vmatpush.msra.mxu0 0.0
  %2209 = vmatpush.msra.mxu0 0.0
  %2210 = vmatpush.msra.mxu0 0.0
  %2211 = vmatpush.msra.mxu0 0.0
  %2212 = vmatpush.msra.mxu0 0.0
  %2213 = vmatpush.msra.mxu0 0.0
  %2214 = vmatpush.msra.mxu0 0.0
  %2215 = vmatpush.msra.mxu0 0.0
  %2216 = vmatpush.msra.mxu0 %v2198
  %2217 = vmatpush.msra.mxu0 %v2197
  %2218 = vmatpush.msra.mxu0 %v2196
  %2219 = vmatpush.msra.mxu0 %v2195
  %2220 = vmatmul.f32.gmra.mxu0 %v1336
  %v2221 = vpop.f32.mrf.mxu0
  %v2222 = vadd.f32 %v2202, %v2221
  %2223 = vmatmul.f32.gmra.mxu0 %v1339
  %v2224 = vpop.f32.mrf.mxu0
  %v2225 = vadd.f32 %v2202, %v2224
  %2226 = vdwg.mxu0
  %v2228 = vsel %vm139, %v2156, 0
  %v2231 = vsel %vm139, %v2189, 0
  %2233 = vmatpush.xpose.msra.mxu0 0.0
  %2234 = vmatpush.xpose.msra.mxu0 0.0
  %2235 = vmatpush.xpose.msra.mxu0 0.0
  %2236 = vmatpush.xpose.msra.mxu0 0.0
  %2237 = vmatpush.xpose.msra.mxu0 0.0
  %2238 = vmatpush.xpose.msra.mxu0 0.0
  %2239 = vmatpush.xpose.msra.mxu0 0.0
  %2240 = vmatpush.xpose.msra.mxu0 0.0
  %2241 = vmatpush.xpose.msra.mxu0 0.0
  %2242 = vmatpush.xpose.msra.mxu0 0.0
  %2243 = vmatpush.xpose.msra.mxu0 0.0
  %2244 = vmatpush.xpose.msra.mxu0 0.0
  %2245 = vmatpush.xpose.msra.mxu0 0.0
  %2246 = vmatpush.xpose.msra.mxu0 0.0
  %2247 = vmatpush.xpose.msra.mxu0 0.0
  %2248 = vmatpush.xpose.msra.mxu0 %v2231
  %2249 = vmatmul.f32.gmra.mxu0 %v2228
  %v2250 = vpop.f32.mrf.mxu0
  %v2251 = vadd.f32 0.0, %v2250
  %2252 = vdwg.mxu0
  %v2254 = vsel %vm139, %v2159, 0
  %v2257 = vsel %vm139, %v2192, 0
  %2259 = vmatpush.xpose.msra.mxu0 0.0
  %2260 = vmatpush.xpose.msra.mxu0 0.0
  %2261 = vmatpush.xpose.msra.mxu0 0.0
  %2262 = vmatpush.xpose.msra.mxu0 0.0
  %2263 = vmatpush.xpose.msra.mxu0 0.0
  %2264 = vmatpush.xpose.msra.mxu0 0.0
  %2265 = vmatpush.xpose.msra.mxu0 0.0
  %2266 = vmatpush.xpose.msra.mxu0 0.0
  %2267 = vmatpush.xpose.msra.mxu0 0.0
  %2268 = vmatpush.xpose.msra.mxu0 0.0
  %2269 = vmatpush.xpose.msra.mxu0 0.0
  %2270 = vmatpush.xpose.msra.mxu0 0.0
  %2271 = vmatpush.xpose.msra.mxu0 0.0
  %2272 = vmatpush.xpose.msra.mxu0 0.0
  %2273 = vmatpush.xpose.msra.mxu0 0.0
  %2274 = vmatpush.xpose.msra.mxu0 %v2257
  %2275 = vmatmul.f32.gmra.mxu0 %v2254
  %v2276 = vpop.f32.mrf.mxu0
  %v2277 = vadd.f32 0.0, %v2276
  %2278 = vdwg.mxu0
  %v2279 = vsel %vm139, %v2251, -inf
  %2280 = vmax.xlane.f32.xlu0 %v2279
  %v2281 = vpop.xlane.xlu0 %2280
  %v2282 = vsel %vm139, %v2277, -inf
  %2283 = vmax.xlane.f32.xlu0 %v2282
  %v2284 = vpop.xlane.xlu0 %2283
  %v2285 = vsub.f32 %v2251, %v2281
  %v2286 = vsub.f32 %v2277, %v2284
  %v2287 = vmul.f32 %v2285, 1.442695
  %v2288 = vpow.pop %v2287
  %v2289 = vmul.f32 %v2286, 1.442695
  %v2290 = vpow.pop %v2289
  %v2291 = vsel %vm139, %v2288, 0.0
  %2292 = vadd.xlane.f32.xlu0 %v2291
  %v2293 = vpop.xlane.xlu0 %2292
  %v2294 = vsel %vm139, %v2290, 0.0
  %2295 = vadd.xlane.f32.xlu0 %v2294
  %v2296 = vpop.xlane.xlu0 %2295
  %v2297 = vrcp.pop %v2293
  %v2298 = vrcp.pop %v2296
  %v2299 = vmul.f32 %v2288, %v2297
  %v2300 = vmul.f32 %v2290, %v2298
  %v2302 = vsel %vm139, %v2299, 0
  %2304 = vmatpush.msra.mxu0 0.0
  %2305 = vmatpush.msra.mxu0 0.0
  %2306 = vmatpush.msra.mxu0 0.0
  %2307 = vmatpush.msra.mxu0 0.0
  %2308 = vmatpush.msra.mxu0 0.0
  %2309 = vmatpush.msra.mxu0 0.0
  %2310 = vmatpush.msra.mxu0 0.0
  %2311 = vmatpush.msra.mxu0 0.0
  %2312 = vmatpush.msra.mxu0 0.0
  %2313 = vmatpush.msra.mxu0 0.0
  %2314 = vmatpush.msra.mxu0 0.0
  %2315 = vmatpush.msra.mxu0 0.0
  %2316 = vmatpush.msra.mxu0 0.0
  %2317 = vmatpush.msra.mxu0 0.0
  %2318 = vmatpush.msra.mxu0 0.0
  %2319 = vmatpush.msra.mxu0 %v2222
  %2320 = vmatmul.f32.gmra.mxu0 %v2302
  %v2321 = vpop.f32.mrf.mxu0
  %v2322 = vadd.f32 0.0, %v2321
  %2323 = vdwg.mxu0
  %v2325 = vsel %vm139, %v2300, 0
  %2327 = vmatpush.msra.mxu0 0.0
  %2328 = vmatpush.msra.mxu0 0.0
  %2329 = vmatpush.msra.mxu0 0.0
  %2330 = vmatpush.msra.mxu0 0.0
  %2331 = vmatpush.msra.mxu0 0.0
  %2332 = vmatpush.msra.mxu0 0.0
  %2333 = vmatpush.msra.mxu0 0.0
  %2334 = vmatpush.msra.mxu0 0.0
  %2335 = vmatpush.msra.mxu0 0.0
  %2336 = vmatpush.msra.mxu0 0.0
  %2337 = vmatpush.msra.mxu0 0.0
  %2338 = vmatpush.msra.mxu0 0.0
  %2339 = vmatpush.msra.mxu0 0.0
  %2340 = vmatpush.msra.mxu0 0.0
  %2341 = vmatpush.msra.mxu0 0.0
  %2342 = vmatpush.msra.mxu0 %v2225
  %2343 = vmatmul.f32.gmra.mxu0 %v2325
  %v2344 = vpop.f32.mrf.mxu0
  %v2345 = vadd.f32 0.0, %v2344
  %2346 = vdwg.mxu0
  %s2347 = scalar_lea.vmem %s3, 992
  %v2348 = vld [vmem:[%s2347] sm:$0xff]
  %v2349 = vld [vmem:[%s2347 + $0x8] sm:$0xff]
  %v2350 = vld [vmem:[%s2347 + $0x10] sm:$0xff]
  %v2351 = vld [vmem:[%s2347 + $0x18] sm:$0xff]
  %v2353 = vsel %vm139, %v2322, 0
  %v2356 = vsel %vm139, %v2345, 0
  %v2359 = vsel %vm139, %v2348, 0
  %v2362 = vsel %vm139, %v2349, 0
  %v2365 = vsel %vm139, %v2350, 0
  %v2368 = vsel %vm139, %v2351, 0
  %2370 = vmatpush.xpose.msra.mxu0 0.0
  %2371 = vmatpush.xpose.msra.mxu0 0.0
  %2372 = vmatpush.xpose.msra.mxu0 0.0
  %2373 = vmatpush.xpose.msra.mxu0 0.0
  %2374 = vmatpush.xpose.msra.mxu0 0.0
  %2375 = vmatpush.xpose.msra.mxu0 0.0
  %2376 = vmatpush.xpose.msra.mxu0 0.0
  %2377 = vmatpush.xpose.msra.mxu0 0.0
  %2378 = vmatpush.xpose.msra.mxu0 0.0
  %2379 = vmatpush.xpose.msra.mxu0 0.0
  %2380 = vmatpush.xpose.msra.mxu0 0.0
  %2381 = vmatpush.xpose.msra.mxu0 0.0
  %2382 = vmatpush.xpose.msra.mxu0 %v2368
  %2383 = vmatpush.xpose.msra.mxu0 %v2365
  %2384 = vmatpush.xpose.msra.mxu0 %v2362
  %2385 = vmatpush.xpose.msra.mxu0 %v2359
  %2386 = vmatmul.f32.gmra.mxu0 %v2353
  %v2387 = vpop.f32.mrf.mxu0
  %v2388 = vadd.f32 0.0, %v2387
  %2389 = vmatmul.f32.gmra.mxu0 %v2356
  %v2390 = vpop.f32.mrf.mxu0
  %v2391 = vadd.f32 0.0, %v2390
  %2392 = vdwg.mxu0
  %v2393 = vadd.f32 %v2126, %v2388
  %v2394 = vadd.f32 %v2127, %v2391
  %v2395 = vperm.slane %v1324, 1
  %v2396 = vadd.f32 %v2393, %v2395
  %v2397 = vadd.f32 %v2394, %v2395
  %v2398 = vadd.f32 %v1321, %v2396
  %v2399 = vadd.f32 %v1322, %v2397
  %v2400 = vsel %vm43, %v2398, 0.0
  %2401 = vadd.xlane.f32.xlu0 %v2400
  %v2402 = vpop.xlane.xlu0 %2401
  %v2403 = vsel %vm43, %v2399, 0.0
  %2404 = vadd.xlane.f32.xlu0 %v2403
  %v2405 = vpop.xlane.xlu0 %2404
  %v2406 = vmul.f32 %v2402, %v1122
  %v2407 = vmul.f32 %v2405, %v1122
  %v2408 = vsub.f32 %v2398, %v2406
  %v2409 = vsub.f32 %v2399, %v2407
  %v2410 = vmul.f32 %v2408, %v2408
  %v2411 = vmul.f32 %v2409, %v2409
  %v2412 = vsel %vm43, %v2410, 0.0
  %2413 = vadd.xlane.f32.xlu0 %v2412
  %v2414 = vpop.xlane.xlu0 %2413
  %v2415 = vsel %vm43, %v2411, 0.0
  %2416 = vadd.xlane.f32.xlu0 %v2415
  %v2417 = vpop.xlane.xlu0 %2416
  %v2418 = vmul.f32 %v2414, %v1122
  %v2419 = vmul.f32 %v2417, %v1122
  %v2420 = vadd.f32 %v2418, 1e-05
  %v2421 = vadd.f32 %v2419, 1e-05
  %v2422 = vrsqrt.pop %v2420
  %v2423 = vmul.f32 %v2422, %v2420
  %v2424 = vmul.f32 %v2423, %v2422
  %v2425 = vmul.f32 0.5, %v2424
  %v2426 = vsub.f32 1.5, %v2425
  %v2427 = vmul.f32 %v2422, %v2426
  %vm2428 = vweird.f32 %v2420
  %vm2429 = vweird.f32 %v2422
  %vm2430 = vmor %vm2428, %vm2429
  %v2431 = vsel %vm2430, %v2422, %v2427
  %v2432 = vrsqrt.pop %v2421
  %v2433 = vmul.f32 %v2432, %v2421
  %v2434 = vmul.f32 %v2433, %v2432
  %v2435 = vmul.f32 0.5, %v2434
  %v2436 = vsub.f32 1.5, %v2435
  %v2437 = vmul.f32 %v2432, %v2436
  %vm2438 = vweird.f32 %v2421
  %vm2439 = vweird.f32 %v2432
  %vm2440 = vmor %vm2438, %vm2439
  %v2441 = vsel %vm2440, %v2432, %v2437
  %v2442 = vmul.f32 %v2408, %v2431
  %v2443 = vmul.f32 %v2409, %v2441
  %v2444 = vperm.slane %v1324, 3
  %v2445 = vmul.f32 %v2442, %v2444
  %v2446 = vmul.f32 %v2443, %v2444
  %v2447 = vperm.slane %v1324, 4
  %v2448 = vadd.f32 %v2445, %v2447
  %v2449 = vadd.f32 %v2446, %v2447
  %s2450 = scalar_lea.vmem %s5, 128
  %v2451 = vld [vmem:[%s2450] sm:$0xff]
  %v2452 = vld [vmem:[%s2450 + $0x8] sm:$0xff]
  %v2453 = vld [vmem:[%s2450 + $0x10] sm:$0xff]
  %v2454 = vld [vmem:[%s2450 + $0x18] sm:$0xff]
  %v2455 = vld [vmem:[%s2450 + $0x20] sm:$0xff]
  %v2456 = vld [vmem:[%s2450 + $0x28] sm:$0xff]
  %v2457 = vld [vmem:[%s2450 + $0x30] sm:$0xff]
  %v2458 = vld [vmem:[%s2450 + $0x38] sm:$0xff]
  %v2459 = vperm.slane %v1324, 0
  %v2461 = vsel %vm43, %v2448, 0
  %v2464 = vsel %vm43, %v2449, 0
  %v2467 = vsel %vm43, %v2451, 0
  %v2470 = vsel %vm43, %v2452, 0
  %v2473 = vsel %vm43, %v2453, 0
  %v2476 = vsel %vm43, %v2454, 0
  %v2479 = vsel %vm43, %v2455, 0
  %v2482 = vsel %vm43, %v2456, 0
  %v2485 = vsel %vm43, %v2457, 0
  %v2488 = vsel %vm43, %v2458, 0
  %2490 = vmatpush.xpose.msra.mxu0 0.0
  %2491 = vmatpush.xpose.msra.mxu0 0.0
  %2492 = vmatpush.xpose.msra.mxu0 0.0
  %2493 = vmatpush.xpose.msra.mxu0 0.0
  %2494 = vmatpush.xpose.msra.mxu0 0.0
  %2495 = vmatpush.xpose.msra.mxu0 0.0
  %2496 = vmatpush.xpose.msra.mxu0 0.0
  %2497 = vmatpush.xpose.msra.mxu0 0.0
  %2498 = vmatpush.xpose.msra.mxu0 %v2488
  %2499 = vmatpush.xpose.msra.mxu0 %v2485
  %2500 = vmatpush.xpose.msra.mxu0 %v2482
  %2501 = vmatpush.xpose.msra.mxu0 %v2479
  %2502 = vmatpush.xpose.msra.mxu0 %v2476
  %2503 = vmatpush.xpose.msra.mxu0 %v2473
  %2504 = vmatpush.xpose.msra.mxu0 %v2470
  %2505 = vmatpush.xpose.msra.mxu0 %v2467
  %2506 = vmatmul.f32.gmra.mxu0 %v2461
  %v2507 = vpop.f32.mrf.mxu0
  %v2508 = vadd.f32 %v2459, %v2507
  %2509 = vmatmul.f32.gmra.mxu0 %v2464
  %v2510 = vpop.f32.mrf.mxu0
  %v2511 = vadd.f32 %v2459, %v2510
  %2512 = vdwg.mxu0
  %v2513 = vmax.f32 %v2508, 0.0
  %v2514 = vmax.f32 %v2511, 0.0
  %s2515 = scalar_lea.vmem %s5, 192
  %v2516 = vld [vmem:[%s2515] sm:$0xff]
  %v2517 = vld [vmem:[%s2515 + $0x8] sm:$0xff]
  %v2518 = vld [vmem:[%s2515 + $0x10] sm:$0xff]
  %v2519 = vld [vmem:[%s2515 + $0x18] sm:$0xff]
  %v2520 = vld [vmem:[%s2515 + $0x20] sm:$0xff]
  %v2521 = vld [vmem:[%s2515 + $0x28] sm:$0xff]
  %v2522 = vld [vmem:[%s2515 + $0x30] sm:$0xff]
  %v2523 = vld [vmem:[%s2515 + $0x38] sm:$0xff]
  %v2524 = vperm.slane %v1324, 2
  %v2526 = vsel %vm1241, %v2513, 0
  %v2529 = vsel %vm1241, %v2514, 0
  %2531 = vmatpush.msra.mxu0 0.0
  %2532 = vmatpush.msra.mxu0 0.0
  %2533 = vmatpush.msra.mxu0 0.0
  %2534 = vmatpush.msra.mxu0 0.0
  %2535 = vmatpush.msra.mxu0 0.0
  %2536 = vmatpush.msra.mxu0 0.0
  %2537 = vmatpush.msra.mxu0 0.0
  %2538 = vmatpush.msra.mxu0 0.0
  %2539 = vmatpush.msra.mxu0 %v2523
  %2540 = vmatpush.msra.mxu0 %v2522
  %2541 = vmatpush.msra.mxu0 %v2521
  %2542 = vmatpush.msra.mxu0 %v2520
  %2543 = vmatpush.msra.mxu0 %v2519
  %2544 = vmatpush.msra.mxu0 %v2518
  %2545 = vmatpush.msra.mxu0 %v2517
  %2546 = vmatpush.msra.mxu0 %v2516
  %2547 = vmatmul.f32.gmra.mxu0 %v2526
  %v2548 = vpop.f32.mrf.mxu0
  %v2549 = vadd.f32 %v2524, %v2548
  %2550 = vmatmul.f32.gmra.mxu0 %v2529
  %v2551 = vpop.f32.mrf.mxu0
  %v2552 = vadd.f32 %v2524, %v2551
  %2553 = vdwg.mxu0
  %v2554 = vadd.f32 %v2448, %v2549
  %v2555 = vadd.f32 %v2449, %v2552
  %v2556 = vsel %vm43, %v2554, 0.0
  %2557 = vadd.xlane.f32.xlu0 %v2556
  %v2558 = vpop.xlane.xlu0 %2557
  %v2559 = vsel %vm43, %v2555, 0.0
  %2560 = vadd.xlane.f32.xlu0 %v2559
  %v2561 = vpop.xlane.xlu0 %2560
  %v2562 = vmul.f32 %v2558, %v1122
  %v2563 = vmul.f32 %v2561, %v1122
  %v2564 = vsub.f32 %v2554, %v2562
  %v2565 = vsub.f32 %v2555, %v2563
  %v2566 = vmul.f32 %v2564, %v2564
  %v2567 = vmul.f32 %v2565, %v2565
  %v2568 = vsel %vm43, %v2566, 0.0
  %2569 = vadd.xlane.f32.xlu0 %v2568
  %v2570 = vpop.xlane.xlu0 %2569
  %v2571 = vsel %vm43, %v2567, 0.0
  %2572 = vadd.xlane.f32.xlu0 %v2571
  %v2573 = vpop.xlane.xlu0 %2572
  %v2574 = vmul.f32 %v2570, %v1122
  %v2575 = vmul.f32 %v2573, %v1122
  %v2576 = vadd.f32 %v2574, 1e-05
  %v2577 = vadd.f32 %v2575, 1e-05
  %v2578 = vrsqrt.pop %v2576
  %v2579 = vmul.f32 %v2578, %v2576
  %v2580 = vmul.f32 %v2579, %v2578
  %v2581 = vmul.f32 0.5, %v2580
  %v2582 = vsub.f32 1.5, %v2581
  %v2583 = vmul.f32 %v2578, %v2582
  %vm2584 = vweird.f32 %v2576
  %vm2585 = vweird.f32 %v2578
  %vm2586 = vmor %vm2584, %vm2585
  %v2587 = vsel %vm2586, %v2578, %v2583
  %v2588 = vrsqrt.pop %v2577
  %v2589 = vmul.f32 %v2588, %v2577
  %v2590 = vmul.f32 %v2589, %v2588
  %v2591 = vmul.f32 0.5, %v2590
  %v2592 = vsub.f32 1.5, %v2591
  %v2593 = vmul.f32 %v2588, %v2592
  %vm2594 = vweird.f32 %v2577
  %vm2595 = vweird.f32 %v2588
  %vm2596 = vmor %vm2594, %vm2595
  %v2597 = vsel %vm2596, %v2588, %v2593
  %v2598 = vmul.f32 %v2564, %v2587
  %v2599 = vmul.f32 %v2565, %v2597
  %v2600 = vperm.slane %v1324, 5
  %v2601 = vmul.f32 %v2598, %v2600
  %v2602 = vmul.f32 %v2599, %v2600
  %v2603 = vperm.slane %v1324, 6
  %v2604 = vadd.f32 %v2601, %v2603
  %v2605 = vadd.f32 %v2602, %v2603
  %v2606 = vld [vmem:[%s7] sm:$0x3]
  %v2607 = vperm.slane %v2606, 0
  %v2608 = vmul.f32 %v2604, %v2607
  %v2609 = vmul.f32 %v2605, %v2607
  %v2610 = vsel %vm43, %v2608, 0.0
  %2611 = vadd.xlane.f32.xlu0 %v2610
  %v2612 = vpop.xlane.xlu0 %2611
  %v2613 = vsel %vm43, %v2609, 0.0
  %2614 = vadd.xlane.f32.xlu0 %v2613
  %v2615 = vpop.xlane.xlu0 %2614
  %v2616 = vperm.slane %v2606, 1
  %v2617 = vadd.f32 %v2612, %v2616
  %v2618 = vadd.f32 %v2615, %v2616
  %v2619 = vld [vmem:[%s2] sm:$0xff]
  %v2620 = vld [vmem:[%s2 + $0x8] sm:$0xff]
  %vm2621 = vcmp.ne.f32.partialorder %v2619, 0.0
  %vm2622 = vcmp.ne.f32.partialorder %v2620, 0.0
  %v2623 = vsel %vm2621, -1.0, %v2617
  %v2624 = vsel %vm2622, -1.0, %v2618
  %2627 = vrot.lane.b32.xlu0 %v2619, 127
  %v2628 = vpop.permute.xlu0 %2627
  %2629 = vrot.lane.b32.xlu0 %v2620, 127
  %v2630 = vpop.permute.xlu0 %2629
  %v2633 = vadd.f32 %v2623, %v2628
  %v2634 = vadd.f32 %v2624, %v2630
  %vm2635 = vcmask 7168
  %2636 = vst.msk [vmem:[%s8] sm:$0xff] %vm2635, %v2633
  %2637 = vst.msk [vmem:[%s8 + $0x8] sm:$0xff] %vm2635, %v2634
  // Predicated region
  $region34: #{transformer_model_forward.1} parent=0 // pred_check
    _
  $region35: #{transformer_model_forward.1} parent=0 // pred_check_branch
    %2639 = sbr.rel (0) target = $region37
  $region36: #{transformer_model_forward.1} parent=0 // pred_region
    _
  $region37: #{transformer_model_forward.1} parent=0 // pred_fallthru
    _
  // Predicated region
  $region38: #{transformer_model_forward.1} parent=0 // pred_check
    _
  $region39: #{transformer_model_forward.1} parent=0 // pred_check_branch
    %2641 = sbr.rel (0) target = $region41
  $region40: #{transformer_model_forward.1} parent=0 // pred_region
    _
  $region41: #{transformer_model_forward.1} parent=0 // pred_fallthru
    _

</llo_original>
